<compile_context>
chip_gen: v7x
topology: tpu7x:2x2x1
jax: 0.10.0
libtpu: 0.0.40
codegen_flags: <defaults>
</compile_context>

<pallas_src>
import numpy as np
import jax
import jax.numpy as jnp
from jax import lax
from jax.experimental import pallas as pl
from jax.experimental.pallas import tpu as pltpu

# ---------------- model hyper-parameters (small, deterministic) ----------------
B = 32             # total batch
TB = 16            # batch tile per grid step (TBS = 256 rows -> full MXU height)
NT = B // TB       # grid size (multiple of 2 -> both v7x TensorCores get work)
N_ATOMS = 8        # compound graph nodes
SEQ = 16           # protein sequence length
DIM = 32           # embedding dim
LAYER_GNN = 2
LAYER_CNN = 2
WINDOW = 1         # conv kernel = 2*WINDOW + 1 = 3
LAYER_OUT = 2
N_FINGERPRINT = 50
N_WORD = 60
K = 2 * WINDOW + 1
OUT_LANES = 128    # lane-dense output row width

TBN = TB * N_ATOMS   # 128 rows for GNN matmuls
TBS = TB * SEQ       # 256 rows for CNN / attention matmuls

assert B % TB == 0


# ------------------------------- kernel body -----------------------------------
def kcat_kernel(fp_ref, adj_ref, word_ref,               # per-batch-tile activations
                sel_aT_ref, sel_s_ref, sel_sT_ref,       # host-built selectors (bf16)
                conv_m_ref, conv_b_ref,                   # packed 3-tap conv matmuls
                gnn_w_ref, gnn_b_ref,
                att_w_ref, att_b_ref,
                out_w_ref, out_b_ref,
                int_w_ref, int_b_ref,
                o_ref):                                   # (TB, 128) lane-dense output
    f32 = jnp.float32
    bf16 = jnp.bfloat16

    # ---------------- GNN: block-diag adjacency -> one MXU dot per layer ------
    xs = fp_ref[...]                          # (TBN, D) f32
    A = adj_ref[...]                          # (TBN, TBN) bf16, block-diag per tile
    for l in range(LAYER_GNN):
        hs = jnp.maximum(
            jnp.dot(xs.astype(bf16), gnn_w_ref[l], preferred_element_type=f32)
            + gnn_b_ref[l], 0.0)
        xs = xs + jnp.dot(A, hs.astype(bf16), preferred_element_type=f32)
    # mean over atoms per sample as a selector matmul (MXU)
    compound = jnp.dot(sel_aT_ref[...], xs.astype(bf16),
                       preferred_element_type=f32) * (1.0 / N_ATOMS)   # (TB, D)

    # ---------------- CNN stack: 3x3 conv == roll/mask + ONE dot per layer ----
    x = word_ref[...]                         # (TBS, D) f32
    # per-row position inside each sample; masks hoisted out of the layer loop
    seq_pos = lax.broadcasted_iota(jnp.int32, (TBS, DIM), 0) % SEQ
    not_first = seq_pos != 0                  # rows where x[s-1] exists in-sample
    not_last = seq_pos != (SEQ - 1)           # rows where x[s+1] exists in-sample
    for l in range(LAYER_CNN):
        # x_m1[s] = x[s-1], x_p1[s] = x[s+1]; sample/edge padding via the masks.
        x_m1 = jnp.where(not_first, pltpu.roll(x, shift=1, axis=0), 0.0)
        x_p1 = jnp.where(not_last, pltpu.roll(x, shift=TBS - 1, axis=0), 0.0)
        xcat = jnp.concatenate([x_m1, x, x_p1], axis=1).astype(bf16)  # (TBS, 3D)
        y = jnp.dot(xcat, conv_m_ref[l], preferred_element_type=f32)  # (TBS, D)
        x = jnp.maximum(y + conv_b_ref[l], 0.0)

    # ---------------- attention pooling (single fused projection) --------------
    stacked = jnp.concatenate([x, compound], axis=0).astype(bf16)     # (TBS+TB, D)
    proj = jnp.maximum(
        jnp.dot(stacked, att_w_ref[...], preferred_element_type=f32)
        + att_b_ref[...], 0.0)                                        # (TBS+TB, D)
    hs_p = proj[:TBS]                         # (TBS, D) protein-stream projection
    h = proj[TBS:]                            # (TB, D)  compound-stream projection
    h_rep = jnp.dot(sel_s_ref[...], h.astype(bf16),
                    preferred_element_type=f32)                       # (TBS, D)
    weights = jnp.tanh(jnp.sum(h_rep * hs_p, axis=1, keepdims=True))  # (TBS, 1)
    protein = jnp.dot(sel_sT_ref[...], (weights * hs_p).astype(bf16),
                      preferred_element_type=f32)                     # (TB, D)

    # ---------------- output MLP (concat fused into a single first-layer dot) --
    cat = jnp.concatenate([compound, protein], axis=1)                # (TB, 2D)
    for l in range(LAYER_OUT):
        cat = jnp.maximum(
            jnp.dot(cat.astype(bf16), out_w_ref[l], preferred_element_type=f32)
            + out_b_ref[l], 0.0)
    # interaction layer against the 128-lane broadcast weight -> lane-dense store
    y_row = jnp.dot(cat.astype(bf16), int_w_ref[...],
                    preferred_element_type=f32) + int_b_ref[...]      # (TB, 128)
    o_ref[...] = y_row


# ------------------------------- pallas wrapper ---------------------------------
def _const_spec(shape):
    """Full-array block with a constant index_map -> stays VMEM resident."""
    nd = len(shape)
    return pl.BlockSpec(shape, lambda t, _nd=nd: (0,) * _nd)


def _kcat_pallas(fp_flat, adj_bd, word_flat, sel_aT, sel_s, sel_sT,
                 conv_m, conv_b, gnn_w, gnn_b, att_w, att_b,
                 out_w, out_b, int_w, int_b):
    in_specs = [
        pl.BlockSpec((TBN, DIM), lambda t: (t, 0)),     # fingerprints (batch-tiled)
        pl.BlockSpec((TBN, TBN), lambda t: (t, 0)),     # block-diag adjacency
        pl.BlockSpec((TBS, DIM), lambda t: (t, 0)),     # word vectors (batch-tiled)
        _const_spec(sel_aT.shape),
        _const_spec(sel_s.shape),
        _const_spec(sel_sT.shape),
        _const_spec(conv_m.shape),
        _const_spec(conv_b.shape),
        _const_spec(gnn_w.shape),
        _const_spec(gnn_b.shape),
        _const_spec(att_w.shape),
        _const_spec(att_b.shape),
        _const_spec(out_w.shape),
        _const_spec(out_b.shape),
        _const_spec(int_w.shape),
        _const_spec(int_b.shape),
    ]
    return pl.pallas_call(
        kcat_kernel,
        grid=(NT,),
        in_specs=in_specs,
        out_specs=pl.BlockSpec((TB, OUT_LANES), lambda t: (t, 0)),
        out_shape=jax.ShapeDtypeStruct((B, OUT_LANES), jnp.float32),
        compiler_params=pltpu.CompilerParams(
            dimension_semantics=("parallel",)),          # megacore split on v7x
    )(fp_flat, adj_bd, word_flat, sel_aT, sel_s, sel_sT,
      conv_m, conv_b, gnn_w, gnn_b, att_w, att_b, out_w, out_b, int_w, int_b)


# --------------------------- host-side preparation (once) ------------------------
def _pack_conv_matrices(conv_w_np):
    """Fold each (K,K) conv filter into a single (K*DIM, DIM) matmul weight.
    Rows [di*DIM : (di+1)*DIM] hold the banded DIM-direction matrix of tap di:
    M[di][d_in, d_out] = w[di, d_in - d_out + WINDOW] (zero outside the band),
    matching the lane-concat operand order [x_shift-1, x, x_shift+1]."""
    d_in = np.arange(DIM)[:, None]
    d_out = np.arange(DIM)[None, :]
    delta = d_in - d_out
    packed = np.zeros((LAYER_CNN, K * DIM, DIM), np.float32)
    for l in range(LAYER_CNN):
        for di in range(K):
            m = np.zeros((DIM, DIM), np.float32)
            for dj in range(K):
                m[delta == (dj - WINDOW)] = conv_w_np[l, di, dj]
            packed[l, di * DIM:(di + 1) * DIM, :] = m
    return packed


def _build_selectors():
    """0/1 selector matrices so per-sample pooling / broadcast run on the MXU."""
    sel_aT = (np.arange(TBN)[None, :] // N_ATOMS
              == np.arange(TB)[:, None]).astype(np.float32)    # (TB, TBN)
    sel_s = (np.arange(TBS)[:, None] // SEQ
             == np.arange(TB)[None, :]).astype(np.float32)     # (TBS, TB)
    return sel_aT, sel_s, sel_s.T


def prepare_params(params):
    """One-time conversion of PyTorch-convention params into kernel constants."""
    bf16 = jnp.bfloat16
    sel_aT, sel_s, sel_sT = _build_selectors()
    prep = {
        'embed_fp': params['embed_fp'],
        'embed_word': params['embed_word'],
        'sel_aT': jnp.asarray(sel_aT, bf16),
        'sel_s': jnp.asarray(sel_s, bf16),
        'sel_sT': jnp.asarray(sel_sT, bf16),
        # nn.Linear weights -> (in, out) and bf16 so the kernel does x @ W + b
        'gnn_w': jnp.transpose(params['gnn_w'], (0, 2, 1)).astype(bf16),
        'gnn_b': params['gnn_b'][:, None, :].astype(jnp.float32),
        'conv_m': jnp.asarray(_pack_conv_matrices(np.asarray(params['conv_w'])),
                              bf16),
        'conv_b': jnp.asarray(
            np.broadcast_to(np.asarray(params['conv_b'])[:, None, None],
                            (LAYER_CNN, 1, DIM)).copy(), jnp.float32),
        'att_w': params['att_w'].T.astype(bf16),
        'att_b': params['att_b'][None, :].astype(jnp.float32),
        'out_w': jnp.transpose(params['out_w'], (0, 2, 1)).astype(bf16),
        'out_b': params['out_b'][:, None, :].astype(jnp.float32),
        # interaction weight broadcast to 128 lanes -> lane-dense output store
        'int_w': jnp.broadcast_to(params['int_w'].T,
                                  (2 * DIM, OUT_LANES)).astype(bf16),
        'int_b': params['int_b'].reshape(1, 1).astype(jnp.float32),
    }
    return prep


@jax.jit
def forward(prep, compounds, adjacencies, proteins):
    # embedding lookups are glue (plain JAX gathers); they fuse with the call.
    fp_flat = prep['embed_fp'][compounds].reshape(B * N_ATOMS, DIM)
    word_flat = prep['embed_word'][proteins].reshape(B * SEQ, DIM)

    # block-diagonal adjacency per batch tile -> single dot per GNN layer
    a4 = adjacencies.astype(jnp.float32).reshape(NT, TB, N_ATOMS, N_ATOMS)
    eye = jnp.eye(TB, dtype=jnp.float32)
    adj_bd = jnp.einsum('tbij,bc->tbicj', a4, eye).reshape(
        B * N_ATOMS, TBN).astype(jnp.bfloat16)

    out = _kcat_pallas(fp_flat, adj_bd, word_flat,
                       prep['sel_aT'], prep['sel_s'], prep['sel_sT'],
                       prep['conv_m'], prep['conv_b'],
                       prep['gnn_w'], prep['gnn_b'],
                       prep['att_w'], prep['att_b'],
                       prep['out_w'], prep['out_b'],
                       prep['int_w'], prep['int_b'])
    return out[:, :1]                                   # all 128 lanes identical


# ---------------- deterministic parameter initialization ------------------------
def init_params(key):
    ks = jax.random.split(key, 12)
    s = 0.1
    p = {}
    p['embed_fp'] = s * jax.random.normal(ks[0], (N_FINGERPRINT, DIM), jnp.float32)
    p['embed_word'] = s * jax.random.normal(ks[1], (N_WORD, DIM), jnp.float32)
    # PyTorch nn.Linear convention: weight is (out_features, in_features)
    p['gnn_w'] = s * jax.random.normal(ks[2], (LAYER_GNN, DIM, DIM), jnp.float32)
    p['gnn_b'] = s * jax.random.normal(ks[3], (LAYER_GNN, DIM), jnp.float32)
    p['conv_w'] = s * jax.random.normal(ks[4], (LAYER_CNN, K, K), jnp.float32)
    p['conv_b'] = s * jax.random.normal(ks[5], (LAYER_CNN,), jnp.float32)
    p['att_w'] = s * jax.random.normal(ks[6], (DIM, DIM), jnp.float32)
    p['att_b'] = s * jax.random.normal(ks[7], (DIM,), jnp.float32)
    p['out_w'] = s * jax.random.normal(ks[8], (LAYER_OUT, 2 * DIM, 2 * DIM), jnp.float32)
    p['out_b'] = s * jax.random.normal(ks[9], (LAYER_OUT, 2 * DIM), jnp.float32)
    p['int_w'] = s * jax.random.normal(ks[10], (1, 2 * DIM), jnp.float32)
    p['int_b'] = s * jax.random.normal(ks[11], (1,), jnp.float32)
    return p


# ---------------- pure-JAX reference (mirrors the PyTorch forward) ---------------
def reference_forward(p, compounds, adjacencies, proteins):
    fp = p['embed_fp'][compounds]
    word = p['embed_word'][proteins]
    xs = fp
    for l in range(LAYER_GNN):
        hs = jax.nn.relu(xs @ p['gnn_w'][l].T + p['gnn_b'][l])
        xs = xs + jnp.einsum('bij,bjd->bid', adjacencies, hs)
    compound = jnp.mean(xs, axis=1)
    x4 = word[:, None, :, :]                        # NCHW, C = 1
    for l in range(LAYER_CNN):
        x4 = jax.nn.relu(
            lax.conv_general_dilated(
                x4, p['conv_w'][l][None, None, :, :], (1, 1),
                [(WINDOW, WINDOW), (WINDOW, WINDOW)],
                dimension_numbers=('NCHW', 'OIHW', 'NCHW')) + p['conv_b'][l])
    xs_c = x4[:, 0]
    h = jax.nn.relu(compound @ p['att_w'].T + p['att_b'])
    hs = jax.nn.relu(xs_c @ p['att_w'].T + p['att_b'])
    weights = jnp.tanh(jnp.sum(h[:, None, :] * hs, axis=2))
    protein = jnp.sum(weights[:, :, None] * hs, axis=1)
    cat = jnp.concatenate([compound, protein], axis=1)
    for l in range(LAYER_OUT):
        cat = jax.nn.relu(cat @ p['out_w'][l].T + p['out_b'][l])
    return cat @ p['int_w'].T + p['int_b']


if __name__ == "__main__":
    key = jax.random.PRNGKey(0)
    kp, kc, ka, kpr = jax.random.split(key, 4)
    params = init_params(kp)
    prep = prepare_params(params)          # host-built constants, cached once

    compounds = jax.random.randint(kc, (B, N_ATOMS), 0, N_FINGERPRINT)
    proteins = jax.random.randint(kpr, (B, SEQ), 0, N_WORD)
    adj = (jax.random.uniform(ka, (B, N_ATOMS, N_ATOMS)) > 0.5).astype(jnp.float32)
    adjacencies = jnp.maximum(adj, jnp.transpose(adj, (0, 2, 1)))  # symmetric 0/1

    out = forward(prep, compounds, adjacencies, proteins)
    out = jax.block_until_ready(out)

    ref = reference_forward(params, compounds, adjacencies.astype(jnp.float32),
                            proteins)
    assert out.shape == (B, 1)
    # tolerance covers bf16 MXU operands vs the f32 reference
    assert jnp.allclose(out, ref, rtol=1e-1, atol=2e-2), (out, ref)

    print("KERNEL_OK")
</pallas_src>

<mosaic_0001>
module attributes {stable_mosaic.version = 11 : i64} {
  func.func @kcat_kernel(%arg0: i32, %arg1: memref<128x32xf32, #tpu.memory_space<vmem>>, %arg2: memref<128x128xbf16, #tpu.memory_space<vmem>>, %arg3: memref<256x32xf32, #tpu.memory_space<vmem>>, %arg4: memref<16x128xbf16, #tpu.memory_space<vmem>>, %arg5: memref<256x16xbf16, #tpu.memory_space<vmem>>, %arg6: memref<16x256xbf16, #tpu.memory_space<vmem>>, %arg7: memref<2x96x32xbf16, #tpu.memory_space<vmem>>, %arg8: memref<2x1x32xf32, #tpu.memory_space<vmem>>, %arg9: memref<2x32x32xbf16, #tpu.memory_space<vmem>>, %arg10: memref<2x1x32xf32, #tpu.memory_space<vmem>>, %arg11: memref<32x32xbf16, #tpu.memory_space<vmem>>, %arg12: memref<1x32xf32, #tpu.memory_space<vmem>>, %arg13: memref<2x64x64xbf16, #tpu.memory_space<vmem>>, %arg14: memref<2x1x64xf32, #tpu.memory_space<vmem>>, %arg15: memref<64x128xbf16, #tpu.memory_space<vmem>>, %arg16: memref<1x1xf32, #tpu.memory_space<vmem>>, %arg17: memref<16x128xf32, #tpu.memory_space<vmem>>) attributes {dimension_semantics = [#tpu.dimension_semantics<parallel>], iteration_bounds = array<i64: 2>, scalar_prefetch = 0 : i64, scratch_operands = 0 : i64, tpu.core_type = #tpu.core_type<tc>, window_params = [{transform_indices = @transform_0, window_bounds = array<i64: 128, 32>}, {transform_indices = @transform_1, window_bounds = array<i64: 128, 128>}, {transform_indices = @transform_2, window_bounds = array<i64: 256, 32>}, {pipeline_mode = #tpu.pipeline_mode<synchronous>, transform_indices = @transform_3, window_bounds = array<i64: 16, 128>}, {pipeline_mode = #tpu.pipeline_mode<synchronous>, transform_indices = @transform_4, window_bounds = array<i64: 256, 16>}, {pipeline_mode = #tpu.pipeline_mode<synchronous>, transform_indices = @transform_5, window_bounds = array<i64: 16, 256>}, {pipeline_mode = #tpu.pipeline_mode<synchronous>, transform_indices = @transform_6, window_bounds = array<i64: 2, 96, 32>}, {pipeline_mode = #tpu.pipeline_mode<synchronous>, transform_indices = @transform_7, window_bounds = array<i64: 2, 1, 32>}, {pipeline_mode = #tpu.pipeline_mode<synchronous>, transform_indices = @transform_8, window_bounds = array<i64: 2, 32, 32>}, {pipeline_mode = #tpu.pipeline_mode<synchronous>, transform_indices = @transform_9, window_bounds = array<i64: 2, 1, 32>}, {pipeline_mode = #tpu.pipeline_mode<synchronous>, transform_indices = @transform_10, window_bounds = array<i64: 32, 32>}, {pipeline_mode = #tpu.pipeline_mode<synchronous>, transform_indices = @transform_11, window_bounds = array<i64: 1, 32>}, {pipeline_mode = #tpu.pipeline_mode<synchronous>, transform_indices = @transform_12, window_bounds = array<i64: 2, 64, 64>}, {pipeline_mode = #tpu.pipeline_mode<synchronous>, transform_indices = @transform_13, window_bounds = array<i64: 2, 1, 64>}, {pipeline_mode = #tpu.pipeline_mode<synchronous>, transform_indices = @transform_14, window_bounds = array<i64: 64, 128>}, {pipeline_mode = #tpu.pipeline_mode<synchronous>, transform_indices = @transform_15, window_bounds = array<i64: 1, 1>}, {transform_indices = @transform_16, window_bounds = array<i64: 16, 128>}]} {
    %c0 = arith.constant 0 : index
    %c0_0 = arith.constant 0 : index
    %0 = vector.load %arg1[%c0, %c0_0] : memref<128x32xf32, #tpu.memory_space<vmem>>, vector<128x32xf32>
    %c0_1 = arith.constant 0 : index
    %c0_2 = arith.constant 0 : index
    %1 = vector.load %arg2[%c0_1, %c0_2] : memref<128x128xbf16, #tpu.memory_space<vmem>>, vector<128x128xbf16>
    %2 = arith.truncf %0 : vector<128x32xf32> to vector<128x32xbf16>
    %c0_3 = arith.constant 0 : index
    %c0_4 = arith.constant 0 : index
    %c0_5 = arith.constant 0 : index
    %3 = vector.load %arg9[%c0_3, %c0_4, %c0_5] : memref<2x32x32xbf16, #tpu.memory_space<vmem>>, vector<1x32x32xbf16>
    %4 = vector.shape_cast %3 : vector<1x32x32xbf16> to vector<32x32xbf16>
    %cst = arith.constant dense<0.000000e+00> : vector<128x32xf32>
    %5 = tpu.matmul %2, %4, %cst {dimension_numbers = #tpu.dot_dimension_numbers<[1], [0], [0], [1], [0, 0, 1, 1], [], []>} : vector<128x32xbf16>, vector<32x32xbf16>, vector<128x32xf32> -> vector<128x32xf32>
    %c0_6 = arith.constant 0 : index
    %c0_7 = arith.constant 0 : index
    %c0_8 = arith.constant 0 : index
    %6 = vector.load %arg10[%c0_6, %c0_7, %c0_8] : memref<2x1x32xf32, #tpu.memory_space<vmem>>, vector<1x1x32xf32>
    %7 = vector.shape_cast %6 : vector<1x1x32xf32> to vector<1x32xf32>
    %8 = vector.broadcast %7 : vector<1x32xf32> to vector<128x32xf32>
    %9 = arith.addf %5, %8 : vector<128x32xf32>
    %cst_9 = arith.constant 0.000000e+00 : f32
    %10 = vector.broadcast %cst_9 : f32 to vector<128x32xf32>
    %11 = arith.maximumf %9, %10 : vector<128x32xf32>
    %12 = arith.truncf %11 : vector<128x32xf32> to vector<128x32xbf16>
    %cst_10 = arith.constant dense<0.000000e+00> : vector<128x32xf32>
    %13 = tpu.matmul %1, %12, %cst_10 {dimension_numbers = #tpu.dot_dimension_numbers<[1], [0], [0], [1], [0, 0, 1, 1], [], []>} : vector<128x128xbf16>, vector<128x32xbf16>, vector<128x32xf32> -> vector<128x32xf32>
    %14 = arith.addf %0, %13 : vector<128x32xf32>
    %15 = arith.truncf %14 : vector<128x32xf32> to vector<128x32xbf16>
    %c1 = arith.constant 1 : index
    %c0_11 = arith.constant 0 : index
    %c0_12 = arith.constant 0 : index
    %16 = vector.load %arg9[%c1, %c0_11, %c0_12] : memref<2x32x32xbf16, #tpu.memory_space<vmem>>, vector<1x32x32xbf16>
    %17 = vector.shape_cast %16 : vector<1x32x32xbf16> to vector<32x32xbf16>
    %cst_13 = arith.constant dense<0.000000e+00> : vector<128x32xf32>
    %18 = tpu.matmul %15, %17, %cst_13 {dimension_numbers = #tpu.dot_dimension_numbers<[1], [0], [0], [1], [0, 0, 1, 1], [], []>} : vector<128x32xbf16>, vector<32x32xbf16>, vector<128x32xf32> -> vector<128x32xf32>
    %c1_14 = arith.constant 1 : index
    %c0_15 = arith.constant 0 : index
    %c0_16 = arith.constant 0 : index
    %19 = vector.load %arg10[%c1_14, %c0_15, %c0_16] : memref<2x1x32xf32, #tpu.memory_space<vmem>>, vector<1x1x32xf32>
    %20 = vector.shape_cast %19 : vector<1x1x32xf32> to vector<1x32xf32>
    %21 = vector.broadcast %20 : vector<1x32xf32> to vector<128x32xf32>
    %22 = arith.addf %18, %21 : vector<128x32xf32>
    %cst_17 = arith.constant 0.000000e+00 : f32
    %23 = vector.broadcast %cst_17 : f32 to vector<128x32xf32>
    %24 = arith.maximumf %22, %23 : vector<128x32xf32>
    %25 = arith.truncf %24 : vector<128x32xf32> to vector<128x32xbf16>
    %cst_18 = arith.constant dense<0.000000e+00> : vector<128x32xf32>
    %26 = tpu.matmul %1, %25, %cst_18 {dimension_numbers = #tpu.dot_dimension_numbers<[1], [0], [0], [1], [0, 0, 1, 1], [], []>} : vector<128x128xbf16>, vector<128x32xbf16>, vector<128x32xf32> -> vector<128x32xf32>
    %27 = arith.addf %14, %26 : vector<128x32xf32>
    %c0_19 = arith.constant 0 : index
    %c0_20 = arith.constant 0 : index
    %28 = vector.load %arg4[%c0_19, %c0_20] : memref<16x128xbf16, #tpu.memory_space<vmem>>, vector<16x128xbf16>
    %29 = arith.truncf %27 : vector<128x32xf32> to vector<128x32xbf16>
    %cst_21 = arith.constant dense<0.000000e+00> : vector<16x32xf32>
    %30 = tpu.matmul %28, %29, %cst_21 {dimension_numbers = #tpu.dot_dimension_numbers<[1], [0], [0], [1], [0, 0, 1, 1], [], []>} : vector<16x128xbf16>, vector<128x32xbf16>, vector<16x32xf32> -> vector<16x32xf32>
    %cst_22 = arith.constant 1.250000e-01 : f32
    %31 = vector.broadcast %cst_22 : f32 to vector<16x32xf32>
    %32 = arith.mulf %30, %31 : vector<16x32xf32>
    %c0_23 = arith.constant 0 : index
    %c0_24 = arith.constant 0 : index
    %33 = vector.load %arg3[%c0_23, %c0_24] : memref<256x32xf32, #tpu.memory_space<vmem>>, vector<256x32xf32>
    %34 = tpu.iota {dimensions = array<i32: 0>} : vector<256x32xi32>
    %c16_i32 = arith.constant 16 : i32
    %c0_i32 = arith.constant 0 : i32
    %35 = arith.cmpi eq, %c16_i32, %c0_i32 : i32
    %c1_i32 = arith.constant 1 : i32
    %36 = arith.select %35, %c1_i32, %c16_i32 : i32
    %37 = vector.broadcast %36 : i32 to vector<256x32xi32>
    %38 = arith.remsi %34, %37 : vector<256x32xi32>
    %c0_i32_25 = arith.constant 0 : i32
    %39 = vector.broadcast %c0_i32_25 : i32 to vector<256x32xi32>
    %40 = arith.cmpi ne, %38, %39 : vector<256x32xi32>
    %c0_i32_26 = arith.constant 0 : i32
    %41 = vector.broadcast %c0_i32_26 : i32 to vector<256x32xi32>
    %42 = arith.cmpi slt, %38, %41 : vector<256x32xi32>
    %c0_i32_27 = arith.constant 0 : i32
    %43 = arith.cmpi slt, %36, %c0_i32_27 : i32
    %44 = vector.broadcast %43 : i1 to vector<256x32xi1>
    %45 = vector.broadcast %44 : vector<256x32xi1> to vector<256x32xi1>
    %46 = arith.xori %42, %45 : vector<256x32xi1>
    %47 = arith.andi %46, %40 : vector<256x32xi1>
    %48 = vector.broadcast %36 : i32 to vector<256x32xi32>
    %49 = arith.addi %38, %48 : vector<256x32xi32>
    %50 = arith.select %47, %49, %38 : vector<256x32xi1>, vector<256x32xi32>
    %c0_i32_28 = arith.constant 0 : i32
    %51 = vector.broadcast %c0_i32_28 : i32 to vector<256x32xi32>
    %52 = arith.cmpi ne, %50, %51 : vector<256x32xi32>
    %c15_i32 = arith.constant 15 : i32
    %53 = vector.broadcast %c15_i32 : i32 to vector<256x32xi32>
    %54 = arith.cmpi ne, %50, %53 : vector<256x32xi32>
    %c1_i32_29 = arith.constant 1 : i32
    %55 = tpu.dynamic_rotate %33 by %c1_i32_29 dim 0 : vector<256x32xf32>, i32 -> vector<256x32xf32>
    %cst_30 = arith.constant 0.000000e+00 : f32
    %56 = vector.broadcast %cst_30 : f32 to vector<256x32xf32>
    %57 = arith.select %52, %55, %56 : vector<256x32xi1>, vector<256x32xf32>
    %c255_i32 = arith.constant 255 : i32
    %58 = tpu.dynamic_rotate %33 by %c255_i32 dim 0 : vector<256x32xf32>, i32 -> vector<256x32xf32>
    %cst_31 = arith.constant 0.000000e+00 : f32
    %59 = vector.broadcast %cst_31 : f32 to vector<256x32xf32>
    %60 = arith.select %54, %58, %59 : vector<256x32xi1>, vector<256x32xf32>
    %61 = tpu.concatenate %57, %33, %60 in 1 : vector<256x32xf32>, vector<256x32xf32>, vector<256x32xf32> -> vector<256x96xf32>
    %62 = arith.truncf %61 : vector<256x96xf32> to vector<256x96xbf16>
    %c0_32 = arith.constant 0 : index
    %c0_33 = arith.constant 0 : index
    %c0_34 = arith.constant 0 : index
    %63 = vector.load %arg7[%c0_32, %c0_33, %c0_34] : memref<2x96x32xbf16, #tpu.memory_space<vmem>>, vector<1x96x32xbf16>
    %64 = vector.shape_cast %63 : vector<1x96x32xbf16> to vector<96x32xbf16>
    %cst_35 = arith.constant dense<0.000000e+00> : vector<256x32xf32>
    %65 = tpu.matmul %62, %64, %cst_35 {dimension_numbers = #tpu.dot_dimension_numbers<[1], [0], [0], [1], [0, 0, 1, 1], [], []>} : vector<256x96xbf16>, vector<96x32xbf16>, vector<256x32xf32> -> vector<256x32xf32>
    %c0_36 = arith.constant 0 : index
    %c0_37 = arith.constant 0 : index
    %c0_38 = arith.constant 0 : index
    %66 = vector.load %arg8[%c0_36, %c0_37, %c0_38] : memref<2x1x32xf32, #tpu.memory_space<vmem>>, vector<1x1x32xf32>
    %67 = vector.shape_cast %66 : vector<1x1x32xf32> to vector<1x32xf32>
    %68 = vector.broadcast %67 : vector<1x32xf32> to vector<256x32xf32>
    %69 = arith.addf %65, %68 : vector<256x32xf32>
    %cst_39 = arith.constant 0.000000e+00 : f32
    %70 = vector.broadcast %cst_39 : f32 to vector<256x32xf32>
    %71 = arith.maximumf %69, %70 : vector<256x32xf32>
    %c1_i32_40 = arith.constant 1 : i32
    %72 = tpu.dynamic_rotate %71 by %c1_i32_40 dim 0 : vector<256x32xf32>, i32 -> vector<256x32xf32>
    %cst_41 = arith.constant 0.000000e+00 : f32
    %73 = vector.broadcast %cst_41 : f32 to vector<256x32xf32>
    %74 = arith.select %52, %72, %73 : vector<256x32xi1>, vector<256x32xf32>
    %c255_i32_42 = arith.constant 255 : i32
    %75 = tpu.dynamic_rotate %71 by %c255_i32_42 dim 0 : vector<256x32xf32>, i32 -> vector<256x32xf32>
    %cst_43 = arith.constant 0.000000e+00 : f32
    %76 = vector.broadcast %cst_43 : f32 to vector<256x32xf32>
    %77 = arith.select %54, %75, %76 : vector<256x32xi1>, vector<256x32xf32>
    %78 = tpu.concatenate %74, %71, %77 in 1 : vector<256x32xf32>, vector<256x32xf32>, vector<256x32xf32> -> vector<256x96xf32>
    %79 = arith.truncf %78 : vector<256x96xf32> to vector<256x96xbf16>
    %c1_44 = arith.constant 1 : index
    %c0_45 = arith.constant 0 : index
    %c0_46 = arith.constant 0 : index
    %80 = vector.load %arg7[%c1_44, %c0_45, %c0_46] : memref<2x96x32xbf16, #tpu.memory_space<vmem>>, vector<1x96x32xbf16>
    %81 = vector.shape_cast %80 : vector<1x96x32xbf16> to vector<96x32xbf16>
    %cst_47 = arith.constant dense<0.000000e+00> : vector<256x32xf32>
    %82 = tpu.matmul %79, %81, %cst_47 {dimension_numbers = #tpu.dot_dimension_numbers<[1], [0], [0], [1], [0, 0, 1, 1], [], []>} : vector<256x96xbf16>, vector<96x32xbf16>, vector<256x32xf32> -> vector<256x32xf32>
    %c1_48 = arith.constant 1 : index
    %c0_49 = arith.constant 0 : index
    %c0_50 = arith.constant 0 : index
    %83 = vector.load %arg8[%c1_48, %c0_49, %c0_50] : memref<2x1x32xf32, #tpu.memory_space<vmem>>, vector<1x1x32xf32>
    %84 = vector.shape_cast %83 : vector<1x1x32xf32> to vector<1x32xf32>
    %85 = vector.broadcast %84 : vector<1x32xf32> to vector<256x32xf32>
    %86 = arith.addf %82, %85 : vector<256x32xf32>
    %cst_51 = arith.constant 0.000000e+00 : f32
    %87 = vector.broadcast %cst_51 : f32 to vector<256x32xf32>
    %88 = arith.maximumf %86, %87 : vector<256x32xf32>
    %89 = tpu.concatenate %88, %32 in 0 : vector<256x32xf32>, vector<16x32xf32> -> vector<272x32xf32>
    %90 = arith.truncf %89 : vector<272x32xf32> to vector<272x32xbf16>
    %c0_52 = arith.constant 0 : index
    %c0_53 = arith.constant 0 : index
    %91 = vector.load %arg11[%c0_52, %c0_53] : memref<32x32xbf16, #tpu.memory_space<vmem>>, vector<32x32xbf16>
    %cst_54 = arith.constant dense<0.000000e+00> : vector<272x32xf32>
    %92 = tpu.matmul %90, %91, %cst_54 {dimension_numbers = #tpu.dot_dimension_numbers<[1], [0], [0], [1], [0, 0, 1, 1], [], []>} : vector<272x32xbf16>, vector<32x32xbf16>, vector<272x32xf32> -> vector<272x32xf32>
    %c0_55 = arith.constant 0 : index
    %c0_56 = arith.constant 0 : index
    %93 = vector.load %arg12[%c0_55, %c0_56] : memref<1x32xf32, #tpu.memory_space<vmem>>, vector<1x32xf32>
    %94 = vector.broadcast %93 : vector<1x32xf32> to vector<272x32xf32>
    %95 = arith.addf %92, %94 : vector<272x32xf32>
    %cst_57 = arith.constant 0.000000e+00 : f32
    %96 = vector.broadcast %cst_57 : f32 to vector<272x32xf32>
    %97 = arith.maximumf %95, %96 : vector<272x32xf32>
    %98 = vector.extract_strided_slice %97 {offsets = [0, 0], sizes = [256, 32], strides = [1, 1]} : vector<272x32xf32> to vector<256x32xf32>
    %99 = vector.extract_strided_slice %97 {offsets = [256, 0], sizes = [16, 32], strides = [1, 1]} : vector<272x32xf32> to vector<16x32xf32>
    %c0_58 = arith.constant 0 : index
    %c0_59 = arith.constant 0 : index
    %100 = vector.load %arg5[%c0_58, %c0_59] : memref<256x16xbf16, #tpu.memory_space<vmem>>, vector<256x16xbf16>
    %101 = arith.truncf %99 : vector<16x32xf32> to vector<16x32xbf16>
    %cst_60 = arith.constant dense<0.000000e+00> : vector<256x32xf32>
    %102 = tpu.matmul %100, %101, %cst_60 {dimension_numbers = #tpu.dot_dimension_numbers<[1], [0], [0], [1], [0, 0, 1, 1], [], []>} : vector<256x16xbf16>, vector<16x32xbf16>, vector<256x32xf32> -> vector<256x32xf32>
    %103 = arith.mulf %102, %98 : vector<256x32xf32>
    %cst_61 = arith.constant dense<0.000000e+00> : vector<256xf32>
    %104 = vector.multi_reduction <add>, %103, %cst_61 [1] : vector<256x32xf32> to vector<256xf32>
    %105 = vector.shape_cast %104 : vector<256xf32> to vector<256x1xf32>
    %106 = math.tanh %105 : vector<256x1xf32>
    %c0_62 = arith.constant 0 : index
    %c0_63 = arith.constant 0 : index
    %107 = vector.load %arg6[%c0_62, %c0_63] : memref<16x256xbf16, #tpu.memory_space<vmem>>, vector<16x256xbf16>
    %108 = vector.broadcast %106 : vector<256x1xf32> to vector<256x32xf32>
    %109 = arith.mulf %108, %98 : vector<256x32xf32>
    %110 = arith.truncf %109 : vector<256x32xf32> to vector<256x32xbf16>
    %cst_64 = arith.constant dense<0.000000e+00> : vector<16x32xf32>
    %111 = tpu.matmul %107, %110, %cst_64 {dimension_numbers = #tpu.dot_dimension_numbers<[1], [0], [0], [1], [0, 0, 1, 1], [], []>} : vector<16x256xbf16>, vector<256x32xbf16>, vector<16x32xf32> -> vector<16x32xf32>
    %112 = tpu.concatenate %32, %111 in 1 : vector<16x32xf32>, vector<16x32xf32> -> vector<16x64xf32>
    %113 = arith.truncf %112 : vector<16x64xf32> to vector<16x64xbf16>
    %c0_65 = arith.constant 0 : index
    %c0_66 = arith.constant 0 : index
    %c0_67 = arith.constant 0 : index
    %114 = vector.load %arg13[%c0_65, %c0_66, %c0_67] : memref<2x64x64xbf16, #tpu.memory_space<vmem>>, vector<1x64x64xbf16>
    %115 = vector.shape_cast %114 : vector<1x64x64xbf16> to vector<64x64xbf16>
    %cst_68 = arith.constant dense<0.000000e+00> : vector<16x64xf32>
    %116 = tpu.matmul %113, %115, %cst_68 {dimension_numbers = #tpu.dot_dimension_numbers<[1], [0], [0], [1], [0, 0, 1, 1], [], []>} : vector<16x64xbf16>, vector<64x64xbf16>, vector<16x64xf32> -> vector<16x64xf32>
    %c0_69 = arith.constant 0 : index
    %c0_70 = arith.constant 0 : index
    %c0_71 = arith.constant 0 : index
    %117 = vector.load %arg14[%c0_69, %c0_70, %c0_71] : memref<2x1x64xf32, #tpu.memory_space<vmem>>, vector<1x1x64xf32>
    %118 = vector.shape_cast %117 : vector<1x1x64xf32> to vector<1x64xf32>
    %119 = vector.broadcast %118 : vector<1x64xf32> to vector<16x64xf32>
    %120 = arith.addf %116, %119 : vector<16x64xf32>
    %cst_72 = arith.constant 0.000000e+00 : f32
    %121 = vector.broadcast %cst_72 : f32 to vector<16x64xf32>
    %122 = arith.maximumf %120, %121 : vector<16x64xf32>
    %123 = arith.truncf %122 : vector<16x64xf32> to vector<16x64xbf16>
    %c1_73 = arith.constant 1 : index
    %c0_74 = arith.constant 0 : index
    %c0_75 = arith.constant 0 : index
    %124 = vector.load %arg13[%c1_73, %c0_74, %c0_75] : memref<2x64x64xbf16, #tpu.memory_space<vmem>>, vector<1x64x64xbf16>
    %125 = vector.shape_cast %124 : vector<1x64x64xbf16> to vector<64x64xbf16>
    %cst_76 = arith.constant dense<0.000000e+00> : vector<16x64xf32>
    %126 = tpu.matmul %123, %125, %cst_76 {dimension_numbers = #tpu.dot_dimension_numbers<[1], [0], [0], [1], [0, 0, 1, 1], [], []>} : vector<16x64xbf16>, vector<64x64xbf16>, vector<16x64xf32> -> vector<16x64xf32>
    %c1_77 = arith.constant 1 : index
    %c0_78 = arith.constant 0 : index
    %c0_79 = arith.constant 0 : index
    %127 = vector.load %arg14[%c1_77, %c0_78, %c0_79] : memref<2x1x64xf32, #tpu.memory_space<vmem>>, vector<1x1x64xf32>
    %128 = vector.shape_cast %127 : vector<1x1x64xf32> to vector<1x64xf32>
    %129 = vector.broadcast %128 : vector<1x64xf32> to vector<16x64xf32>
    %130 = arith.addf %126, %129 : vector<16x64xf32>
    %cst_80 = arith.constant 0.000000e+00 : f32
    %131 = vector.broadcast %cst_80 : f32 to vector<16x64xf32>
    %132 = arith.maximumf %130, %131 : vector<16x64xf32>
    %133 = arith.truncf %132 : vector<16x64xf32> to vector<16x64xbf16>
    %c0_81 = arith.constant 0 : index
    %c0_82 = arith.constant 0 : index
    %134 = vector.load %arg15[%c0_81, %c0_82] : memref<64x128xbf16, #tpu.memory_space<vmem>>, vector<64x128xbf16>
    %cst_83 = arith.constant dense<0.000000e+00> : vector<16x128xf32>
    %135 = tpu.matmul %133, %134, %cst_83 {dimension_numbers = #tpu.dot_dimension_numbers<[1], [0], [0], [1], [0, 0, 1, 1], [], []>} : vector<16x64xbf16>, vector<64x128xbf16>, vector<16x128xf32> -> vector<16x128xf32>
    %c0_84 = arith.constant 0 : index
    %c0_85 = arith.constant 0 : index
    %136 = vector.load %arg16[%c0_84, %c0_85] : memref<1x1xf32, #tpu.memory_space<vmem>>, vector<1x1xf32>
    %137 = vector.broadcast %136 : vector<1x1xf32> to vector<16x128xf32>
    %138 = arith.addf %135, %137 : vector<16x128xf32>
    %c0_86 = arith.constant 0 : index
    %c0_87 = arith.constant 0 : index
    %139 = vector.load %arg17[%c0_86, %c0_87] : memref<16x128xf32, #tpu.memory_space<vmem>>, vector<16x128xf32>
    tpu.vector_store %arg17[%c0_86, %c0_87], %138 {strides = array<i32>} : memref<16x128xf32, #tpu.memory_space<vmem>>, vector<16x128xf32>,
    return
  }
  func.func @transform_0(%arg0: i32) -> (i32, i32) {
    %c0_i32 = arith.constant 0 : i32
    %c0_i32_0 = arith.constant 0 : i32
    return %arg0, %c0_i32 : i32, i32
  }
  func.func @transform_1(%arg0: i32) -> (i32, i32) {
    %c0_i32 = arith.constant 0 : i32
    %c0_i32_0 = arith.constant 0 : i32
    return %arg0, %c0_i32 : i32, i32
  }
  func.func @transform_2(%arg0: i32) -> (i32, i32) {
    %c0_i32 = arith.constant 0 : i32
    %c0_i32_0 = arith.constant 0 : i32
    return %arg0, %c0_i32 : i32, i32
  }
  func.func @transform_3(%arg0: i32) -> (i32, i32) {
    %c0_i32 = arith.constant 0 : i32
    %c0_i32_0 = arith.constant 0 : i32
    %c0_i32_1 = arith.constant 0 : i32
    return %c0_i32, %c0_i32_0 : i32, i32
  }
  func.func @transform_4(%arg0: i32) -> (i32, i32) {
    %c0_i32 = arith.constant 0 : i32
    %c0_i32_0 = arith.constant 0 : i32
    %c0_i32_1 = arith.constant 0 : i32
    return %c0_i32, %c0_i32_0 : i32, i32
  }
  func.func @transform_5(%arg0: i32) -> (i32, i32) {
    %c0_i32 = arith.constant 0 : i32
    %c0_i32_0 = arith.constant 0 : i32
    %c0_i32_1 = arith.constant 0 : i32
    return %c0_i32, %c0_i32_0 : i32, i32
  }
  func.func @transform_6(%arg0: i32) -> (i32, i32, i32) {
    %c0_i32 = arith.constant 0 : i32
    %c0_i32_0 = arith.constant 0 : i32
    %c0_i32_1 = arith.constant 0 : i32
    %c0_i32_2 = arith.constant 0 : i32
    return %c0_i32, %c0_i32_0, %c0_i32_1 : i32, i32, i32
  }
  func.func @transform_7(%arg0: i32) -> (i32, i32, i32) {
    %c0_i32 = arith.constant 0 : i32
    %c0_i32_0 = arith.constant 0 : i32
    %c0_i32_1 = arith.constant 0 : i32
    %c0_i32_2 = arith.constant 0 : i32
    return %c0_i32, %c0_i32_0, %c0_i32_1 : i32, i32, i32
  }
  func.func @transform_8(%arg0: i32) -> (i32, i32, i32) {
    %c0_i32 = arith.constant 0 : i32
    %c0_i32_0 = arith.constant 0 : i32
    %c0_i32_1 = arith.constant 0 : i32
    %c0_i32_2 = arith.constant 0 : i32
    return %c0_i32, %c0_i32_0, %c0_i32_1 : i32, i32, i32
  }
  func.func @transform_9(%arg0: i32) -> (i32, i32, i32) {
    %c0_i32 = arith.constant 0 : i32
    %c0_i32_0 = arith.constant 0 : i32
    %c0_i32_1 = arith.constant 0 : i32
    %c0_i32_2 = arith.constant 0 : i32
    return %c0_i32, %c0_i32_0, %c0_i32_1 : i32, i32, i32
  }
  func.func @transform_10(%arg0: i32) -> (i32, i32) {
    %c0_i32 = arith.constant 0 : i32
    %c0_i32_0 = arith.constant 0 : i32
    %c0_i32_1 = arith.constant 0 : i32
    return %c0_i32, %c0_i32_0 : i32, i32
  }
  func.func @transform_11(%arg0: i32) -> (i32, i32) {
    %c0_i32 = arith.constant 0 : i32
    %c0_i32_0 = arith.constant 0 : i32
    %c0_i32_1 = arith.constant 0 : i32
    return %c0_i32, %c0_i32_0 : i32, i32
  }
  func.func @transform_12(%arg0: i32) -> (i32, i32, i32) {
    %c0_i32 = arith.constant 0 : i32
    %c0_i32_0 = arith.constant 0 : i32
    %c0_i32_1 = arith.constant 0 : i32
    %c0_i32_2 = arith.constant 0 : i32
    return %c0_i32, %c0_i32_0, %c0_i32_1 : i32, i32, i32
  }
  func.func @transform_13(%arg0: i32) -> (i32, i32, i32) {
    %c0_i32 = arith.constant 0 : i32
    %c0_i32_0 = arith.constant 0 : i32
    %c0_i32_1 = arith.constant 0 : i32
    %c0_i32_2 = arith.constant 0 : i32
    return %c0_i32, %c0_i32_0, %c0_i32_1 : i32, i32, i32
  }
  func.func @transform_14(%arg0: i32) -> (i32, i32) {
    %c0_i32 = arith.constant 0 : i32
    %c0_i32_0 = arith.constant 0 : i32
    %c0_i32_1 = arith.constant 0 : i32
    return %c0_i32, %c0_i32_0 : i32, i32
  }
  func.func @transform_15(%arg0: i32) -> (i32, i32) {
    %c0_i32 = arith.constant 0 : i32
    %c0_i32_0 = arith.constant 0 : i32
    %c0_i32_1 = arith.constant 0 : i32
    return %c0_i32, %c0_i32_0 : i32, i32
  }
  func.func @transform_16(%arg0: i32) -> (i32, i32) {
    %c0_i32 = arith.constant 0 : i32
    %c0_i32_0 = arith.constant 0 : i32
    return %arg0, %c0_i32 : i32, i32
  }
}

</mosaic_0001>

<llo_original>
// kernel: forward.1
$region0: #{forward.1}
  #allocation0 [shape = 'u32[]', space=smem, size = 0x4, offset = 0x4, fixed_abs, tag = 'smem constant byte address 0x4 - core index']
  #allocation1 [shape = 'u32[144,128]{1,0:T(1,128)}', space=vmem, size = 0x12000, scoped, tag = 'internal scratch']
  #allocation2 [shape = 'f32[1,1]{1,0:T(1,128)S(1)}', space=vmem, size = 0x200, scoped, tag = 'scoped memory for forward.1']
  %s0 = inlined_call_operand.vmem [shape: f32[256,32], index: 0, kind: input, shape index: {}]
  %s1 = inlined_call_operand.vmem [shape: bf16[256,128], index: 1, kind: input, shape index: {}]
  %s2 = inlined_call_operand.vmem [shape: f32[512,32], index: 2, kind: input, shape index: {}]
  %s3 = inlined_call_operand.vmem [shape: bf16[16,128], index: 3, kind: input, shape index: {}]
  %s4 = inlined_call_operand.vmem [shape: bf16[256,16], index: 4, kind: input, shape index: {}]
  %s5 = inlined_call_operand.vmem [shape: bf16[16,256], index: 5, kind: input, shape index: {}]
  %s6 = inlined_call_operand.vmem [shape: bf16[2,96,32], index: 6, kind: input, shape index: {}]
  %s7 = inlined_call_operand.vmem [shape: f32[2,1,32], index: 7, kind: input, shape index: {}]
  %s8 = inlined_call_operand.vmem [shape: bf16[2,32,32], index: 8, kind: input, shape index: {}]
  %s9 = inlined_call_operand.vmem [shape: f32[2,1,32], index: 9, kind: input, shape index: {}]
  %s10 = inlined_call_operand.vmem [shape: bf16[32,32], index: 10, kind: input, shape index: {}]
  %s11 = inlined_call_operand.vmem [shape: f32[1,32], index: 11, kind: input, shape index: {}]
  %s12 = inlined_call_operand.vmem [shape: bf16[2,64,64], index: 12, kind: input, shape index: {}]
  %s13 = inlined_call_operand.vmem [shape: f32[2,1,64], index: 13, kind: input, shape index: {}]
  %s14 = inlined_call_operand.vmem [shape: bf16[64,128], index: 14, kind: input, shape index: {}]
  %s15 = inlined_call_operand.<no memory space> [shape: f32[1,1], index: 15, kind: input, shape index: {}]
  %s16 = inlined_call_operand.vmem [shape: f32[32,128], index: 16, kind: output, shape index: {}]
  %s17 = sld [smem:[#allocation0]]
  $region97: #{forward.1} parent=0
    _
  %s19 = ssub.s32 1, %s17
  %s20 = scalar_select 0, %s19, %s17
  %v21 = vstv %s15
  %22 = vst [vmem:[#allocation2] sm:$0x1] %v21
  loop: start=0, step=1, limit=4
  $region2: #{forward.1} parent=0 // loop_pre_header
    _
  $region3: #{forward.1} parent=0 // loop_header
    %s24 = sphi 0, %s28
    %p25 = scmp.ge.s32.totalorder %s24, 4
    %s34 = sphi 0, %s36
    %s37 = sphi 0, %s34
    %s38 = sphi 0, %s37
    %s54 = sphi 0, %s38
    %s60 = sphi 0, %s62
    %s63 = sphi 0, %s60
    %s64 = sphi 0, %s63
    %s80 = sphi 0, %s64
    %s86 = sphi 0, %s88
    %s89 = sphi 0, %s86
    %s90 = sphi 0, %s89
    %s106 = sphi 0, %s90
    %s110 = sphi 0, %s110
    %s112 = sphi 0, %s110
    %s113 = sphi 0, %s112
    %s127 = sphi 0, %s113
    %s131 = sphi 0, %s131
    %s133 = sphi 0, %s131
    %s134 = sphi 0, %s133
    %s148 = sphi 0, %s134
    %s152 = sphi 0, %s152
    %s154 = sphi 0, %s152
    %s155 = sphi 0, %s154
    %s169 = sphi 0, %s155
    %s173 = sphi 0, %s173
    %s175 = sphi 0, %s173
    %s176 = sphi 0, %s175
    %s190 = sphi 0, %s176
    %s194 = sphi 0, %s194
    %s196 = sphi 0, %s194
    %s197 = sphi 0, %s196
    %s211 = sphi 0, %s197
    %s215 = sphi 0, %s215
    %s217 = sphi 0, %s215
    %s218 = sphi 0, %s217
    %s232 = sphi 0, %s218
    %s236 = sphi 0, %s236
    %s238 = sphi 0, %s236
    %s239 = sphi 0, %s238
    %s253 = sphi 0, %s239
    %s257 = sphi 0, %s257
    %s259 = sphi 0, %s257
    %s260 = sphi 0, %s259
    %s274 = sphi 0, %s260
    %s278 = sphi 0, %s278
    %s280 = sphi 0, %s278
    %s281 = sphi 0, %s280
    %s295 = sphi 0, %s281
    %s299 = sphi 0, %s299
    %s301 = sphi 0, %s299
    %s302 = sphi 0, %s301
    %s316 = sphi 0, %s302
    %s320 = sphi 0, %s320
    %s322 = sphi 0, %s320
    %s323 = sphi 0, %s322
    %s337 = sphi 0, %s323
    %s341 = sphi 0, %s341
    %s343 = sphi 0, %s341
    %s344 = sphi 0, %s343
    %s358 = sphi 0, %s344
    %s362 = sphi 0, %s362
    %s364 = sphi 0, %s362
    %s365 = sphi 0, %s364
    %s379 = sphi 0, %s365
    %s385 = sphi 0, %s387
    %s388 = sphi 0, %s385
    %s389 = sphi 0, %s388
    %s405 = sphi 0, %s389
  $region4: #{forward.1} parent=0 // loop_header_branch
    %27 = sbr.rel (%p25) target = $region8
  $region5: #{forward.1} parent=0 // loop_body
    %s29 = ssub.s32 %s24, 1
    %s30 = ssub.s32 %s24, 2
    %s31 = sadd.s32 %s24, 1
    %s32 = ssub.s32 %s24, %s31
    %p33 = scmp.eq.s32.totalorder %s32, 0
    %s35 = sadd.s32 %s34, 1
    %s36 = scalar_select %p33, %s34, %s35
    %p39 = pneg %p33
    %p40 = scmp.eq.s32.totalorder %s24, 1
    %p41 = por %p39, %p40
    %p42 = scmp.ne.s32.totalorder %s34, %s37
    %p43 = scmp.eq.s32.totalorder %s24, 0
    %p44 = por %p42, %p43
    %p45 = scmp.ne.s32.totalorder %s34, %s37
    %p46 = scmp.eq.s32.totalorder %s29, 1
    %p47 = por %p45, %p46
    %p48 = scmp.ne.s32.totalorder %s37, %s38
    %p49 = scmp.eq.s32.totalorder %s29, 0
    %p50 = por %p48, %p49
    %p51 = scmp.ne.s32.totalorder %s37, %s38
    %p52 = scmp.eq.s32.totalorder %s30, 1
    %p53 = por %p51, %p52
    %p55 = scmp.ne.s32.totalorder %s38, %s54
    %p56 = scmp.eq.s32.totalorder %s30, 0
    %p57 = por %p55, %p56
    %s58 = ssub.s32 %s24, %s31
    %p59 = scmp.eq.s32.totalorder %s58, 0
    %s61 = sadd.s32 %s60, 1
    %s62 = scalar_select %p59, %s60, %s61
    %p65 = pneg %p59
    %p66 = scmp.eq.s32.totalorder %s24, 1
    %p67 = por %p65, %p66
    %p68 = scmp.ne.s32.totalorder %s60, %s63
    %p69 = scmp.eq.s32.totalorder %s24, 0
    %p70 = por %p68, %p69
    %p71 = scmp.ne.s32.totalorder %s60, %s63
    %p72 = scmp.eq.s32.totalorder %s29, 1
    %p73 = por %p71, %p72
    %p74 = scmp.ne.s32.totalorder %s63, %s64
    %p75 = scmp.eq.s32.totalorder %s29, 0
    %p76 = por %p74, %p75
    %p77 = scmp.ne.s32.totalorder %s63, %s64
    %p78 = scmp.eq.s32.totalorder %s30, 1
    %p79 = por %p77, %p78
    %p81 = scmp.ne.s32.totalorder %s64, %s80
    %p82 = scmp.eq.s32.totalorder %s30, 0
    %p83 = por %p81, %p82
    %s84 = ssub.s32 %s24, %s31
    %p85 = scmp.eq.s32.totalorder %s84, 0
    %s87 = sadd.s32 %s86, 1
    %s88 = scalar_select %p85, %s86, %s87
    %p91 = pneg %p85
    %p92 = scmp.eq.s32.totalorder %s24, 1
    %p93 = por %p91, %p92
    %p94 = scmp.ne.s32.totalorder %s86, %s89
    %p95 = scmp.eq.s32.totalorder %s24, 0
    %p96 = por %p94, %p95
    %p97 = scmp.ne.s32.totalorder %s86, %s89
    %p98 = scmp.eq.s32.totalorder %s29, 1
    %p99 = por %p97, %p98
    %p100 = scmp.ne.s32.totalorder %s89, %s90
    %p101 = scmp.eq.s32.totalorder %s29, 0
    %p102 = por %p100, %p101
    %p103 = scmp.ne.s32.totalorder %s89, %s90
    %p104 = scmp.eq.s32.totalorder %s30, 1
    %p105 = por %p103, %p104
    %p107 = scmp.ne.s32.totalorder %s90, %s106
    %p108 = scmp.eq.s32.totalorder %s30, 0
    %p109 = por %p107, %p108
    %s111 = sadd.s32 %s110, 1
    %p114 = scmp.eq.s32.totalorder %s24, 1
    %p115 = scmp.ne.s32.totalorder %s110, %s112
    %p116 = scmp.eq.s32.totalorder %s24, 0
    %p117 = por %p115, %p116
    %p118 = scmp.ne.s32.totalorder %s110, %s112
    %p119 = scmp.eq.s32.totalorder %s29, 1
    %p120 = por %p118, %p119
    %p121 = scmp.ne.s32.totalorder %s112, %s113
    %p122 = scmp.eq.s32.totalorder %s29, 0
    %p123 = por %p121, %p122
    %p124 = scmp.ne.s32.totalorder %s112, %s113
    %p125 = scmp.eq.s32.totalorder %s30, 1
    %p126 = por %p124, %p125
    %p128 = scmp.ne.s32.totalorder %s113, %s127
    %p129 = scmp.eq.s32.totalorder %s30, 0
    %p130 = por %p128, %p129
    %s132 = sadd.s32 %s131, 1
    %p135 = scmp.eq.s32.totalorder %s24, 1
    %p136 = scmp.ne.s32.totalorder %s131, %s133
    %p137 = scmp.eq.s32.totalorder %s24, 0
    %p138 = por %p136, %p137
    %p139 = scmp.ne.s32.totalorder %s131, %s133
    %p140 = scmp.eq.s32.totalorder %s29, 1
    %p141 = por %p139, %p140
    %p142 = scmp.ne.s32.totalorder %s133, %s134
    %p143 = scmp.eq.s32.totalorder %s29, 0
    %p144 = por %p142, %p143
    %p145 = scmp.ne.s32.totalorder %s133, %s134
    %p146 = scmp.eq.s32.totalorder %s30, 1
    %p147 = por %p145, %p146
    %p149 = scmp.ne.s32.totalorder %s134, %s148
    %p150 = scmp.eq.s32.totalorder %s30, 0
    %p151 = por %p149, %p150
    %s153 = sadd.s32 %s152, 1
    %p156 = scmp.eq.s32.totalorder %s24, 1
    %p157 = scmp.ne.s32.totalorder %s152, %s154
    %p158 = scmp.eq.s32.totalorder %s24, 0
    %p159 = por %p157, %p158
    %p160 = scmp.ne.s32.totalorder %s152, %s154
    %p161 = scmp.eq.s32.totalorder %s29, 1
    %p162 = por %p160, %p161
    %p163 = scmp.ne.s32.totalorder %s154, %s155
    %p164 = scmp.eq.s32.totalorder %s29, 0
    %p165 = por %p163, %p164
    %p166 = scmp.ne.s32.totalorder %s154, %s155
    %p167 = scmp.eq.s32.totalorder %s30, 1
    %p168 = por %p166, %p167
    %p170 = scmp.ne.s32.totalorder %s155, %s169
    %p171 = scmp.eq.s32.totalorder %s30, 0
    %p172 = por %p170, %p171
    %s174 = sadd.s32 %s173, 1
    %p177 = scmp.eq.s32.totalorder %s24, 1
    %p178 = scmp.ne.s32.totalorder %s173, %s175
    %p179 = scmp.eq.s32.totalorder %s24, 0
    %p180 = por %p178, %p179
    %p181 = scmp.ne.s32.totalorder %s173, %s175
    %p182 = scmp.eq.s32.totalorder %s29, 1
    %p183 = por %p181, %p182
    %p184 = scmp.ne.s32.totalorder %s175, %s176
    %p185 = scmp.eq.s32.totalorder %s29, 0
    %p186 = por %p184, %p185
    %p187 = scmp.ne.s32.totalorder %s175, %s176
    %p188 = scmp.eq.s32.totalorder %s30, 1
    %p189 = por %p187, %p188
    %p191 = scmp.ne.s32.totalorder %s176, %s190
    %p192 = scmp.eq.s32.totalorder %s30, 0
    %p193 = por %p191, %p192
    %s195 = sadd.s32 %s194, 1
    %p198 = scmp.eq.s32.totalorder %s24, 1
    %p199 = scmp.ne.s32.totalorder %s194, %s196
    %p200 = scmp.eq.s32.totalorder %s24, 0
    %p201 = por %p199, %p200
    %p202 = scmp.ne.s32.totalorder %s194, %s196
    %p203 = scmp.eq.s32.totalorder %s29, 1
    %p204 = por %p202, %p203
    %p205 = scmp.ne.s32.totalorder %s196, %s197
    %p206 = scmp.eq.s32.totalorder %s29, 0
    %p207 = por %p205, %p206
    %p208 = scmp.ne.s32.totalorder %s196, %s197
    %p209 = scmp.eq.s32.totalorder %s30, 1
    %p210 = por %p208, %p209
    %p212 = scmp.ne.s32.totalorder %s197, %s211
    %p213 = scmp.eq.s32.totalorder %s30, 0
    %p214 = por %p212, %p213
    %s216 = sadd.s32 %s215, 1
    %p219 = scmp.eq.s32.totalorder %s24, 1
    %p220 = scmp.ne.s32.totalorder %s215, %s217
    %p221 = scmp.eq.s32.totalorder %s24, 0
    %p222 = por %p220, %p221
    %p223 = scmp.ne.s32.totalorder %s215, %s217
    %p224 = scmp.eq.s32.totalorder %s29, 1
    %p225 = por %p223, %p224
    %p226 = scmp.ne.s32.totalorder %s217, %s218
    %p227 = scmp.eq.s32.totalorder %s29, 0
    %p228 = por %p226, %p227
    %p229 = scmp.ne.s32.totalorder %s217, %s218
    %p230 = scmp.eq.s32.totalorder %s30, 1
    %p231 = por %p229, %p230
    %p233 = scmp.ne.s32.totalorder %s218, %s232
    %p234 = scmp.eq.s32.totalorder %s30, 0
    %p235 = por %p233, %p234
    %s237 = sadd.s32 %s236, 1
    %p240 = scmp.eq.s32.totalorder %s24, 1
    %p241 = scmp.ne.s32.totalorder %s236, %s238
    %p242 = scmp.eq.s32.totalorder %s24, 0
    %p243 = por %p241, %p242
    %p244 = scmp.ne.s32.totalorder %s236, %s238
    %p245 = scmp.eq.s32.totalorder %s29, 1
    %p246 = por %p244, %p245
    %p247 = scmp.ne.s32.totalorder %s238, %s239
    %p248 = scmp.eq.s32.totalorder %s29, 0
    %p249 = por %p247, %p248
    %p250 = scmp.ne.s32.totalorder %s238, %s239
    %p251 = scmp.eq.s32.totalorder %s30, 1
    %p252 = por %p250, %p251
    %p254 = scmp.ne.s32.totalorder %s239, %s253
    %p255 = scmp.eq.s32.totalorder %s30, 0
    %p256 = por %p254, %p255
    %s258 = sadd.s32 %s257, 1
    %p261 = scmp.eq.s32.totalorder %s24, 1
    %p262 = scmp.ne.s32.totalorder %s257, %s259
    %p263 = scmp.eq.s32.totalorder %s24, 0
    %p264 = por %p262, %p263
    %p265 = scmp.ne.s32.totalorder %s257, %s259
    %p266 = scmp.eq.s32.totalorder %s29, 1
    %p267 = por %p265, %p266
    %p268 = scmp.ne.s32.totalorder %s259, %s260
    %p269 = scmp.eq.s32.totalorder %s29, 0
    %p270 = por %p268, %p269
    %p271 = scmp.ne.s32.totalorder %s259, %s260
    %p272 = scmp.eq.s32.totalorder %s30, 1
    %p273 = por %p271, %p272
    %p275 = scmp.ne.s32.totalorder %s260, %s274
    %p276 = scmp.eq.s32.totalorder %s30, 0
    %p277 = por %p275, %p276
    %s279 = sadd.s32 %s278, 1
    %p282 = scmp.eq.s32.totalorder %s24, 1
    %p283 = scmp.ne.s32.totalorder %s278, %s280
    %p284 = scmp.eq.s32.totalorder %s24, 0
    %p285 = por %p283, %p284
    %p286 = scmp.ne.s32.totalorder %s278, %s280
    %p287 = scmp.eq.s32.totalorder %s29, 1
    %p288 = por %p286, %p287
    %p289 = scmp.ne.s32.totalorder %s280, %s281
    %p290 = scmp.eq.s32.totalorder %s29, 0
    %p291 = por %p289, %p290
    %p292 = scmp.ne.s32.totalorder %s280, %s281
    %p293 = scmp.eq.s32.totalorder %s30, 1
    %p294 = por %p292, %p293
    %p296 = scmp.ne.s32.totalorder %s281, %s295
    %p297 = scmp.eq.s32.totalorder %s30, 0
    %p298 = por %p296, %p297
    %s300 = sadd.s32 %s299, 1
    %p303 = scmp.eq.s32.totalorder %s24, 1
    %p304 = scmp.ne.s32.totalorder %s299, %s301
    %p305 = scmp.eq.s32.totalorder %s24, 0
    %p306 = por %p304, %p305
    %p307 = scmp.ne.s32.totalorder %s299, %s301
    %p308 = scmp.eq.s32.totalorder %s29, 1
    %p309 = por %p307, %p308
    %p310 = scmp.ne.s32.totalorder %s301, %s302
    %p311 = scmp.eq.s32.totalorder %s29, 0
    %p312 = por %p310, %p311
    %p313 = scmp.ne.s32.totalorder %s301, %s302
    %p314 = scmp.eq.s32.totalorder %s30, 1
    %p315 = por %p313, %p314
    %p317 = scmp.ne.s32.totalorder %s302, %s316
    %p318 = scmp.eq.s32.totalorder %s30, 0
    %p319 = por %p317, %p318
    %s321 = sadd.s32 %s320, 1
    %p324 = scmp.eq.s32.totalorder %s24, 1
    %p325 = scmp.ne.s32.totalorder %s320, %s322
    %p326 = scmp.eq.s32.totalorder %s24, 0
    %p327 = por %p325, %p326
    %p328 = scmp.ne.s32.totalorder %s320, %s322
    %p329 = scmp.eq.s32.totalorder %s29, 1
    %p330 = por %p328, %p329
    %p331 = scmp.ne.s32.totalorder %s322, %s323
    %p332 = scmp.eq.s32.totalorder %s29, 0
    %p333 = por %p331, %p332
    %p334 = scmp.ne.s32.totalorder %s322, %s323
    %p335 = scmp.eq.s32.totalorder %s30, 1
    %p336 = por %p334, %p335
    %p338 = scmp.ne.s32.totalorder %s323, %s337
    %p339 = scmp.eq.s32.totalorder %s30, 0
    %p340 = por %p338, %p339
    %s342 = sadd.s32 %s341, 1
    %p345 = scmp.eq.s32.totalorder %s24, 1
    %p346 = scmp.ne.s32.totalorder %s341, %s343
    %p347 = scmp.eq.s32.totalorder %s24, 0
    %p348 = por %p346, %p347
    %p349 = scmp.ne.s32.totalorder %s341, %s343
    %p350 = scmp.eq.s32.totalorder %s29, 1
    %p351 = por %p349, %p350
    %p352 = scmp.ne.s32.totalorder %s343, %s344
    %p353 = scmp.eq.s32.totalorder %s29, 0
    %p354 = por %p352, %p353
    %p355 = scmp.ne.s32.totalorder %s343, %s344
    %p356 = scmp.eq.s32.totalorder %s30, 1
    %p357 = por %p355, %p356
    %p359 = scmp.ne.s32.totalorder %s344, %s358
    %p360 = scmp.eq.s32.totalorder %s30, 0
    %p361 = por %p359, %p360
    %s363 = sadd.s32 %s362, 1
    %p366 = scmp.eq.s32.totalorder %s24, 1
    %p367 = scmp.ne.s32.totalorder %s362, %s364
    %p368 = scmp.eq.s32.totalorder %s24, 0
    %p369 = por %p367, %p368
    %p370 = scmp.ne.s32.totalorder %s362, %s364
    %p371 = scmp.eq.s32.totalorder %s29, 1
    %p372 = por %p370, %p371
    %p373 = scmp.ne.s32.totalorder %s364, %s365
    %p374 = scmp.eq.s32.totalorder %s29, 0
    %p375 = por %p373, %p374
    %p376 = scmp.ne.s32.totalorder %s364, %s365
    %p377 = scmp.eq.s32.totalorder %s30, 1
    %p378 = por %p376, %p377
    %p380 = scmp.ne.s32.totalorder %s365, %s379
    %p381 = scmp.eq.s32.totalorder %s30, 0
    %p382 = por %p380, %p381
    %s383 = ssub.s32 %s24, %s31
    %p384 = scmp.eq.s32.totalorder %s383, 0
    %s386 = sadd.s32 %s385, 1
    %s387 = scalar_select %p384, %s385, %s386
    %p390 = pneg %p384
    %p391 = scmp.eq.s32.totalorder %s24, 1
    %p392 = por %p390, %p391
    %p393 = scmp.ne.s32.totalorder %s385, %s388
    %p394 = scmp.eq.s32.totalorder %s24, 0
    %p395 = por %p393, %p394
    %p396 = scmp.ne.s32.totalorder %s385, %s388
    %p397 = scmp.eq.s32.totalorder %s29, 1
    %p398 = por %p396, %p397
    %p399 = scmp.ne.s32.totalorder %s388, %s389
    %p400 = scmp.eq.s32.totalorder %s29, 0
    %p401 = por %p399, %p400
    %p402 = scmp.ne.s32.totalorder %s388, %s389
    %p403 = scmp.eq.s32.totalorder %s30, 1
    %p404 = por %p402, %p403
    %p406 = scmp.ne.s32.totalorder %s389, %s405
    %p407 = scmp.eq.s32.totalorder %s30, 0
    %p408 = por %p406, %p407
    %p409 = scmp.le.s32.totalorder 1, %s24
    %p410 = scmp.lt.s32.totalorder %s24, 3
    %p411 = pnand %p409, %p410
    %p412 = pneg %p411
    // Predicated region
    $region9: #{forward.1} parent=5 // pred_check
      _
    $region10: #{forward.1} parent=5 // pred_check_branch
      %414 = sbr.rel (%p411) target = $region12
    $region11: #{forward.1} parent=5 // pred_region
      %s415 = ssub.s32 %s24, 1
      // Predicated region
      $region13: #{forward.1} parent=11 // pred_check
        %p416 = pneg %p123
      $region14: #{forward.1} parent=11 // pred_check_branch
        %418 = sbr.rel (%p416) target = $region16
      $region15: #{forward.1} parent=11 // pred_region
        _
      $region16: #{forward.1} parent=11 // pred_fallthru
        _
      // Predicated region
      $region17: #{forward.1} parent=11 // pred_check
        %p419 = pneg %p144
      $region18: #{forward.1} parent=11 // pred_check_branch
        %421 = sbr.rel (%p419) target = $region20
      $region19: #{forward.1} parent=11 // pred_region
        _
      $region20: #{forward.1} parent=11 // pred_fallthru
        _
      // Predicated region
      $region21: #{forward.1} parent=11 // pred_check
        %p422 = pneg %p165
      $region22: #{forward.1} parent=11 // pred_check_branch
        %424 = sbr.rel (%p422) target = $region24
      $region23: #{forward.1} parent=11 // pred_region
        _
      $region24: #{forward.1} parent=11 // pred_fallthru
        _
      // Predicated region
      $region25: #{forward.1} parent=11 // pred_check
        %p425 = pneg %p186
      $region26: #{forward.1} parent=11 // pred_check_branch
        %427 = sbr.rel (%p425) target = $region28
      $region27: #{forward.1} parent=11 // pred_region
        _
      $region28: #{forward.1} parent=11 // pred_fallthru
        _
      // Predicated region
      $region29: #{forward.1} parent=11 // pred_check
        %p428 = pneg %p207
      $region30: #{forward.1} parent=11 // pred_check_branch
        %430 = sbr.rel (%p428) target = $region32
      $region31: #{forward.1} parent=11 // pred_region
        _
      $region32: #{forward.1} parent=11 // pred_fallthru
        _
      // Predicated region
      $region33: #{forward.1} parent=11 // pred_check
        %p431 = pneg %p228
      $region34: #{forward.1} parent=11 // pred_check_branch
        %433 = sbr.rel (%p431) target = $region36
      $region35: #{forward.1} parent=11 // pred_region
        _
      $region36: #{forward.1} parent=11 // pred_fallthru
        _
      // Predicated region
      $region37: #{forward.1} parent=11 // pred_check
        %p434 = pneg %p249
      $region38: #{forward.1} parent=11 // pred_check_branch
        %436 = sbr.rel (%p434) target = $region40
      $region39: #{forward.1} parent=11 // pred_region
        _
      $region40: #{forward.1} parent=11 // pred_fallthru
        _
      // Predicated region
      $region41: #{forward.1} parent=11 // pred_check
        %p437 = pneg %p270
      $region42: #{forward.1} parent=11 // pred_check_branch
        %439 = sbr.rel (%p437) target = $region44
      $region43: #{forward.1} parent=11 // pred_region
        _
      $region44: #{forward.1} parent=11 // pred_fallthru
        _
      // Predicated region
      $region45: #{forward.1} parent=11 // pred_check
        %p440 = pneg %p291
      $region46: #{forward.1} parent=11 // pred_check_branch
        %442 = sbr.rel (%p440) target = $region48
      $region47: #{forward.1} parent=11 // pred_region
        _
      $region48: #{forward.1} parent=11 // pred_fallthru
        _
      // Predicated region
      $region49: #{forward.1} parent=11 // pred_check
        %p443 = pneg %p312
      $region50: #{forward.1} parent=11 // pred_check_branch
        %445 = sbr.rel (%p443) target = $region52
      $region51: #{forward.1} parent=11 // pred_region
        _
      $region52: #{forward.1} parent=11 // pred_fallthru
        _
      // Predicated region
      $region53: #{forward.1} parent=11 // pred_check
        %p446 = pneg %p333
      $region54: #{forward.1} parent=11 // pred_check_branch
        %448 = sbr.rel (%p446) target = $region56
      $region55: #{forward.1} parent=11 // pred_region
        _
      $region56: #{forward.1} parent=11 // pred_fallthru
        _
      // Predicated region
      $region57: #{forward.1} parent=11 // pred_check
        %p449 = pneg %p354
      $region58: #{forward.1} parent=11 // pred_check_branch
        %451 = sbr.rel (%p449) target = $region60
      $region59: #{forward.1} parent=11 // pred_region
        _
      $region60: #{forward.1} parent=11 // pred_fallthru
        _
      // Predicated region
      $region61: #{forward.1} parent=11 // pred_check
        %p452 = pneg %p375
      $region62: #{forward.1} parent=11 // pred_check_branch
        %454 = sbr.rel (%p452) target = $region64
      $region63: #{forward.1} parent=11 // pred_region
        _
      $region64: #{forward.1} parent=11 // pred_fallthru
        _
    $region12: #{forward.1} parent=5 // pred_fallthru
      _
    %p455 = scmp.lt.s32.totalorder %s24, 2
    // Predicated region
    $region65: #{forward.1} parent=5 // pred_check
      %p456 = pneg %p455
    $region66: #{forward.1} parent=5 // pred_check_branch
      %458 = sbr.rel (%p456) target = $region68
    $region67: #{forward.1} parent=5 // pred_region
      // Predicated region
      $region69: #{forward.1} parent=67 // pred_check
        %p459 = pneg %p44
      $region70: #{forward.1} parent=67 // pred_check_branch
        %461 = sbr.rel (%p459) target = $region72
      $region71: #{forward.1} parent=67 // pred_region
        %s462 = smul.u32 16, %s24
        %p463 = scmp.lt.s32.totalorder %s462, 31
        %s464 = scalar_select %p463, %s462, 31
        %s465 = smul.addr %s464, 8
        %s466 = scalar_lea.vmem %s0, %s465
        %s467 = smul.u32 16, %s24
      $region72: #{forward.1} parent=67 // pred_fallthru
        _
      // Predicated region
      $region73: #{forward.1} parent=67 // pred_check
        %p468 = pneg %p70
      $region74: #{forward.1} parent=67 // pred_check_branch
        %470 = sbr.rel (%p468) target = $region76
      $region75: #{forward.1} parent=67 // pred_region
        %s471 = smul.u32 16, %s24
        %p472 = scmp.lt.s32.totalorder %s471, 31
        %s473 = scalar_select %p472, %s471, 31
        %s474 = smul.addr %s473, 4
        %s475 = scalar_lea.vmem %s1, %s474
        %s476 = smul.u32 16, %s24
      $region76: #{forward.1} parent=67 // pred_fallthru
        _
      // Predicated region
      $region77: #{forward.1} parent=67 // pred_check
        %p477 = pneg %p96
      $region78: #{forward.1} parent=67 // pred_check_branch
        %479 = sbr.rel (%p477) target = $region80
      $region79: #{forward.1} parent=67 // pred_region
        %s480 = smul.u32 32, %s24
        %p481 = scmp.lt.s32.totalorder %s480, 63
        %s482 = scalar_select %p481, %s480, 63
        %s483 = smul.addr %s482, 8
        %s484 = scalar_lea.vmem %s2, %s483
        %s485 = smul.u32 32, %s24
      $region80: #{forward.1} parent=67 // pred_fallthru
        _
    $region68: #{forward.1} parent=5 // pred_fallthru
      _
    %p486 = scmp.le.s32.totalorder 1, %s24
    %p487 = scmp.lt.s32.totalorder %s24, 3
    %p488 = pnand %p486, %p487
    %p489 = pneg %p488
    // Predicated region
    $region81: #{forward.1} parent=5 // pred_check
      _
    $region82: #{forward.1} parent=5 // pred_check_branch
      %491 = sbr.rel (%p488) target = $region84
    $region83: #{forward.1} parent=5 // pred_region
      %s492 = ssub.s32 %s24, 1
      %s493 = smul.u32 16, %s29
      %p494 = scmp.lt.s32.totalorder %s493, 31
      %s495 = scalar_select %p494, %s493, 31
      %s496 = smul.addr %s495, 8
      %s497 = scalar_lea.vmem %s0, %s496
      %p498 = pneg %p50
      %p499 = pneg %p47
      %s500 = smul.u32 16, %s29
      %p501 = scmp.lt.s32.totalorder %s500, 31
      %s502 = scalar_select %p501, %s500, 31
      %s503 = smul.addr %s502, 4
      %s504 = scalar_lea.vmem %s1, %s503
      %p505 = pneg %p76
      %p506 = pneg %p73
      %s507 = smul.u32 32, %s29
      %p508 = scmp.lt.s32.totalorder %s507, 63
      %s509 = scalar_select %p508, %s507, 63
      %s510 = smul.addr %s509, 8
      %s511 = scalar_lea.vmem %s2, %s510
      %p512 = pneg %p102
      %p513 = pneg %p99
      %p514 = pneg %p123
      %p515 = pneg %p120
      %p516 = pneg %p144
      %p517 = pneg %p141
      %p518 = pneg %p165
      %p519 = pneg %p162
      %p520 = pneg %p186
      %p521 = pneg %p183
      %p522 = pneg %p207
      %p523 = pneg %p204
      %p524 = pneg %p228
      %p525 = pneg %p225
      %p526 = pneg %p249
      %p527 = pneg %p246
      %p528 = pneg %p270
      %p529 = pneg %p267
      %p530 = pneg %p291
      %p531 = pneg %p288
      %p532 = pneg %p312
      %p533 = pneg %p309
      %p534 = pneg %p333
      %p535 = pneg %p330
      %p536 = pneg %p354
      %p537 = pneg %p351
      %p538 = pneg %p375
      %p539 = pneg %p372
      %p540 = pneg %p401
      %p541 = pneg %p398
      %s542 = smul.u32 2, %s29
      %p543 = scmp.lt.s32.totalorder %s542, 3
      %s544 = scalar_select %p543, %s542, 3
      %s545 = smul.addr %s544, 8
      %s546 = scalar_lea.vmem %s16, %s545
      %s547 = smul.u32 16, %s29
      %p548 = scmp.lt.s32.totalorder %s547, 31
      %s549 = scalar_select %p548, %s547, 31
      %s550 = smul.addr %s549, 8
      %s551 = scalar_lea.vmem %s0, %s550
      %s552 = smul.u32 16, %s29
      %s553 = smul.u32 16, %s29
      %p554 = scmp.lt.s32.totalorder %s553, 31
      %s555 = scalar_select %p554, %s553, 31
      %s556 = smul.addr %s555, 4
      %s557 = scalar_lea.vmem %s1, %s556
      %s558 = smul.u32 16, %s29
      %s559 = smul.u32 32, %s29
      %p560 = scmp.lt.s32.totalorder %s559, 63
      %s561 = scalar_select %p560, %s559, 63
      %s562 = smul.addr %s561, 8
      %s563 = scalar_lea.vmem %s2, %s562
      %s564 = smul.u32 32, %s29
      %s565 = smul.u32 2, %s29
      %p566 = scmp.lt.s32.totalorder %s565, 3
      %s567 = scalar_select %p566, %s565, 3
      %s568 = smul.addr %s567, 8
      %s569 = scalar_lea.vmem %s16, %s568
      %s570 = smul.u32 2, %s29
      %v572 = vld [vmem:[%s551] sm:$0xff]
      %v573 = vld [vmem:[%s551 + $0x8] sm:$0xff]
      %v574 = vld [vmem:[%s551 + $0x10] sm:$0xff]
      %v575 = vld [vmem:[%s551 + $0x18] sm:$0xff]
      %v576 = vld [vmem:[%s551 + $0x20] sm:$0xff]
      %v577 = vld [vmem:[%s551 + $0x28] sm:$0xff]
      %v578 = vld [vmem:[%s551 + $0x30] sm:$0xff]
      %v579 = vld [vmem:[%s551 + $0x38] sm:$0xff]
      %v580 = vld [vmem:[%s551 + $0x40] sm:$0xff]
      %v581 = vld [vmem:[%s551 + $0x48] sm:$0xff]
      %v582 = vld [vmem:[%s551 + $0x50] sm:$0xff]
      %v583 = vld [vmem:[%s551 + $0x58] sm:$0xff]
      %v584 = vld [vmem:[%s551 + $0x60] sm:$0xff]
      %v585 = vld [vmem:[%s551 + $0x68] sm:$0xff]
      %v586 = vld [vmem:[%s551 + $0x70] sm:$0xff]
      %v587 = vld [vmem:[%s551 + $0x78] sm:$0xff]
      %v588 = vld [vmem:[%s557] sm:$0xf]
      %v589 = vld [vmem:[%s557 + $0x4] sm:$0xf]
      %v590 = vld [vmem:[%s557 + $0x8] sm:$0xf]
      %v591 = vld [vmem:[%s557 + $0xc] sm:$0xf]
      %v592 = vld [vmem:[%s557 + $0x10] sm:$0xf]
      %v593 = vld [vmem:[%s557 + $0x14] sm:$0xf]
      %v594 = vld [vmem:[%s557 + $0x18] sm:$0xf]
      %v595 = vld [vmem:[%s557 + $0x1c] sm:$0xf]
      %v596 = vld [vmem:[%s557 + $0x20] sm:$0xf]
      %v597 = vld [vmem:[%s557 + $0x24] sm:$0xf]
      %v598 = vld [vmem:[%s557 + $0x28] sm:$0xf]
      %v599 = vld [vmem:[%s557 + $0x2c] sm:$0xf]
      %v600 = vld [vmem:[%s557 + $0x30] sm:$0xf]
      %v601 = vld [vmem:[%s557 + $0x34] sm:$0xf]
      %v602 = vld [vmem:[%s557 + $0x38] sm:$0xf]
      %v603 = vld [vmem:[%s557 + $0x3c] sm:$0xf]
      %v604 = vpack.c.bf16 %v573, %v572
      %v605 = vpack.c.bf16 %v575, %v574
      %v606 = vpack.c.bf16 %v577, %v576
      %v607 = vpack.c.bf16 %v579, %v578
      %v608 = vpack.c.bf16 %v581, %v580
      %v609 = vpack.c.bf16 %v583, %v582
      %v610 = vpack.c.bf16 %v585, %v584
      %v611 = vpack.c.bf16 %v587, %v586
      %v612 = vld [vmem:[%s8] sm:$0xf]
      %v613 = vld [vmem:[%s8 + $0x4] sm:$0xf]
      %v614 = vld [vmem:[%s8 + $0x8] sm:$0xf]
      %v615 = vld [vmem:[%s8 + $0xc] sm:$0xf]
      %v616 = vld [vmem:[%s9] sm:$0x1]
      %v618 = vlaneseq
      %v619 = vshrl.u32 %v618, 7
      %v620 = vsub.s32 0, %v619
      %v621 = vrot.slane %v616, %v620
      %v627 = vunpack.c.l.b16 %v612
      %v628 = vunpack.c.l.b16 %v613
      %v629 = vunpack.c.l.b16 %v614
      %v630 = vunpack.c.l.b16 %v615
      %v631 = vpack.c.b16 %v628, %v627
      %v632 = vpack.c.b16 %v630, %v629
      %vm635 = vcmask 261120
      %v637 = vsel %vm635, %v604, 0
      %v640 = vsel %vm635, %v605, 0
      %v643 = vsel %vm635, %v606, 0
      %v646 = vsel %vm635, %v607, 0
      %v649 = vsel %vm635, %v608, 0
      %v652 = vsel %vm635, %v609, 0
      %v655 = vsel %vm635, %v610, 0
      %v658 = vsel %vm635, %v611, 0
      %660 = vmatprep.subr.bf16.mxu0 0
      %661 = vmatpush1.bf16.msra.mxu0 %v631
      %662 = vmatprep.subr.bf16.mxu0 0
      %663 = vmatpush1.bf16.msra.mxu0 %v632
      %664 = vmatprep.subr.bf16.mxu0 0
      %665 = vmatpush1.bf16.msra.mxu0 0
      %666 = vmatprep.subr.bf16.mxu0 0
      %667 = vmatpush1.bf16.msra.mxu0 0
      %668 = vmatprep.subr.bf16.mxu0 0
      %669 = vmatpush1.bf16.msra.mxu0 0
      %670 = vmatprep.subr.bf16.mxu0 0
      %671 = vmatpush1.bf16.msra.mxu0 0
      %672 = vmatprep.subr.bf16.mxu0 0
      %673 = vmatpush1.bf16.msra.mxu0 0
      %674 = vmatprep.subr.bf16.mxu0 0
      %675 = vmatpush1.bf16.msra.mxu0 0
      %676 = vmatprep.subr.bf16.mxu0 0
      %677 = vmatpush1.bf16.msra.mxu0 0
      %678 = vmatprep.subr.bf16.mxu0 0
      %679 = vmatpush1.bf16.msra.mxu0 0
      %680 = vmatprep.subr.bf16.mxu0 0
      %681 = vmatpush1.bf16.msra.mxu0 0
      %682 = vmatprep.subr.bf16.mxu0 0
      %683 = vmatpush1.bf16.msra.mxu0 0
      %684 = vmatprep.subr.bf16.mxu0 0
      %685 = vmatpush1.bf16.msra.mxu0 0
      %686 = vmatprep.subr.bf16.mxu0 0
      %687 = vmatpush1.bf16.msra.mxu0 0
      %688 = vmatprep.subr.bf16.mxu0 0
      %689 = vmatpush1.bf16.msra.mxu0 0
      %690 = vmatprep.subr.bf16.mxu0 0
      %691 = vmatpush1.bf16.msra.mxu0 0
      %692 = vmatprep.mubr.bf16.mxu0 0
      %693 = vmatmul.mubr.bf16.gmra.mrb[0].mxu0 %v637
      %v694 = vpop.f32.mrb[0].mxu0
      %v695 = vadd.f32 %v621, %v694
      %v696 = vpop.f32.mrb[0].mxu0
      %v697 = vpop.f32.mrb[0].mxu0
      %v698 = vadd.f32 %v621, %v697
      %v699 = vpop.f32.mrb[0].mxu0
      %700 = vmatprep.mubr.bf16.mxu0 0
      %701 = vmatmul.mubr.bf16.gmra.mrb[0].mxu0 %v640
      %v702 = vpop.f32.mrb[0].mxu0
      %v703 = vadd.f32 %v621, %v702
      %v704 = vpop.f32.mrb[0].mxu0
      %v705 = vpop.f32.mrb[0].mxu0
      %v706 = vadd.f32 %v621, %v705
      %v707 = vpop.f32.mrb[0].mxu0
      %708 = vmatprep.mubr.bf16.mxu0 0
      %709 = vmatmul.mubr.bf16.gmra.mrb[0].mxu0 %v643
      %v710 = vpop.f32.mrb[0].mxu0
      %v711 = vadd.f32 %v621, %v710
      %v712 = vpop.f32.mrb[0].mxu0
      %v713 = vpop.f32.mrb[0].mxu0
      %v714 = vadd.f32 %v621, %v713
      %v715 = vpop.f32.mrb[0].mxu0
      %716 = vmatprep.mubr.bf16.mxu0 0
      %717 = vmatmul.mubr.bf16.gmra.mrb[0].mxu0 %v646
      %v718 = vpop.f32.mrb[0].mxu0
      %v719 = vadd.f32 %v621, %v718
      %v720 = vpop.f32.mrb[0].mxu0
      %v721 = vpop.f32.mrb[0].mxu0
      %v722 = vadd.f32 %v621, %v721
      %v723 = vpop.f32.mrb[0].mxu0
      %724 = vmatprep.mubr.bf16.mxu0 0
      %725 = vmatmul.mubr.bf16.gmra.mrb[0].mxu0 %v649
      %v726 = vpop.f32.mrb[0].mxu0
      %v727 = vadd.f32 %v621, %v726
      %v728 = vpop.f32.mrb[0].mxu0
      %v729 = vpop.f32.mrb[0].mxu0
      %v730 = vadd.f32 %v621, %v729
      %v731 = vpop.f32.mrb[0].mxu0
      %732 = vmatprep.mubr.bf16.mxu0 0
      %733 = vmatmul.mubr.bf16.gmra.mrb[0].mxu0 %v652
      %v734 = vpop.f32.mrb[0].mxu0
      %v735 = vadd.f32 %v621, %v734
      %v736 = vpop.f32.mrb[0].mxu0
      %v737 = vpop.f32.mrb[0].mxu0
      %v738 = vadd.f32 %v621, %v737
      %v739 = vpop.f32.mrb[0].mxu0
      %740 = vmatprep.mubr.bf16.mxu0 0
      %741 = vmatmul.mubr.bf16.gmra.mrb[0].mxu0 %v655
      %v742 = vpop.f32.mrb[0].mxu0
      %v743 = vadd.f32 %v621, %v742
      %v744 = vpop.f32.mrb[0].mxu0
      %v745 = vpop.f32.mrb[0].mxu0
      %v746 = vadd.f32 %v621, %v745
      %v747 = vpop.f32.mrb[0].mxu0
      %748 = vmatprep.mubr.bf16.mxu0 0
      %749 = vmatmul.mubr.bf16.gmra.mrb[0].mxu0 %v658
      %v750 = vpop.f32.mrb[0].mxu0
      %v751 = vadd.f32 %v621, %v750
      %v752 = vpop.f32.mrb[0].mxu0
      %v753 = vpop.f32.mrb[0].mxu0
      %v754 = vadd.f32 %v621, %v753
      %v755 = vpop.f32.mrb[0].mxu0
      %756 = vdwg.mxu0
      %v757 = vmax.f32 %v695, 0.0
      %v758 = vmax.f32 %v698, 0.0
      %v759 = vmax.f32 %v703, 0.0
      %v760 = vmax.f32 %v706, 0.0
      %v761 = vmax.f32 %v711, 0.0
      %v762 = vmax.f32 %v714, 0.0
      %v763 = vmax.f32 %v719, 0.0
      %v764 = vmax.f32 %v722, 0.0
      %v765 = vmax.f32 %v727, 0.0
      %v766 = vmax.f32 %v730, 0.0
      %v767 = vmax.f32 %v735, 0.0
      %v768 = vmax.f32 %v738, 0.0
      %v769 = vmax.f32 %v743, 0.0
      %v770 = vmax.f32 %v746, 0.0
      %v771 = vmax.f32 %v751, 0.0
      %v772 = vmax.f32 %v754, 0.0
      %v773 = vpack.c.bf16 %v758, %v757
      %v774 = vpack.c.bf16 %v760, %v759
      %v775 = vpack.c.bf16 %v762, %v761
      %v776 = vpack.c.bf16 %v764, %v763
      %v777 = vpack.c.bf16 %v766, %v765
      %v778 = vpack.c.bf16 %v768, %v767
      %v779 = vpack.c.bf16 %v770, %v769
      %v780 = vpack.c.bf16 %v772, %v771
      %v797 = vunpack.c.l.b16 %v588
      %v798 = vunpack.c.l.b16 %v589
      %v799 = vunpack.c.l.b16 %v590
      %v800 = vunpack.c.l.b16 %v591
      %v801 = vunpack.c.l.b16 %v592
      %v802 = vunpack.c.l.b16 %v593
      %v803 = vunpack.c.l.b16 %v594
      %v804 = vunpack.c.l.b16 %v595
      %v805 = vunpack.c.l.b16 %v596
      %v806 = vunpack.c.l.b16 %v597
      %v807 = vunpack.c.l.b16 %v598
      %v808 = vunpack.c.l.b16 %v599
      %v809 = vunpack.c.l.b16 %v600
      %v810 = vunpack.c.l.b16 %v601
      %v811 = vunpack.c.l.b16 %v602
      %v812 = vunpack.c.l.b16 %v603
      %v813 = vpack.c.b16 %v798, %v797
      %v814 = vpack.c.b16 %v800, %v799
      %v815 = vpack.c.b16 %v802, %v801
      %v816 = vpack.c.b16 %v804, %v803
      %v817 = vpack.c.b16 %v806, %v805
      %v818 = vpack.c.b16 %v808, %v807
      %v819 = vpack.c.b16 %v810, %v809
      %v820 = vpack.c.b16 %v812, %v811
      %829 = vmatprep.subr.bf16.mxu0 0
      %830 = vmatpush1.bf16.msra.mxu0 %v773
      %831 = vmatprep.subr.bf16.mxu0 0
      %832 = vmatpush1.bf16.msra.mxu0 %v774
      %833 = vmatprep.subr.bf16.mxu0 0
      %834 = vmatpush1.bf16.msra.mxu0 %v775
      %835 = vmatprep.subr.bf16.mxu0 0
      %836 = vmatpush1.bf16.msra.mxu0 %v776
      %837 = vmatprep.subr.bf16.mxu0 0
      %838 = vmatpush1.bf16.msra.mxu0 %v777
      %839 = vmatprep.subr.bf16.mxu0 0
      %840 = vmatpush1.bf16.msra.mxu0 %v778
      %841 = vmatprep.subr.bf16.mxu0 0
      %842 = vmatpush1.bf16.msra.mxu0 %v779
      %843 = vmatprep.subr.bf16.mxu0 0
      %844 = vmatpush1.bf16.msra.mxu0 %v780
      %845 = vmatprep.subr.bf16.mxu0 0
      %846 = vmatpush1.bf16.msra.mxu0 0
      %847 = vmatprep.subr.bf16.mxu0 0
      %848 = vmatpush1.bf16.msra.mxu0 0
      %849 = vmatprep.subr.bf16.mxu0 0
      %850 = vmatpush1.bf16.msra.mxu0 0
      %851 = vmatprep.subr.bf16.mxu0 0
      %852 = vmatpush1.bf16.msra.mxu0 0
      %853 = vmatprep.subr.bf16.mxu0 0
      %854 = vmatpush1.bf16.msra.mxu0 0
      %855 = vmatprep.subr.bf16.mxu0 0
      %856 = vmatpush1.bf16.msra.mxu0 0
      %857 = vmatprep.subr.bf16.mxu0 0
      %858 = vmatpush1.bf16.msra.mxu0 0
      %859 = vmatprep.subr.bf16.mxu0 0
      %860 = vmatpush1.bf16.msra.mxu0 0
      %861 = vmatprep.mubr.bf16.mxu0 0
      %862 = vmatmul.mubr.bf16.gmra.mrb[0].mxu0 %v813
      %v863 = vpop.f32.mrb[0].mxu0
      %v864 = vadd.f32 0.0, %v863
      %v865 = vpop.f32.mrb[0].mxu0
      %v866 = vpop.f32.mrb[0].mxu0
      %v867 = vadd.f32 0.0, %v866
      %v868 = vpop.f32.mrb[0].mxu0
      %869 = vmatprep.mubr.bf16.mxu0 0
      %870 = vmatmul.mubr.bf16.gmra.mrb[0].mxu0 %v814
      %v871 = vpop.f32.mrb[0].mxu0
      %v872 = vadd.f32 0.0, %v871
      %v873 = vpop.f32.mrb[0].mxu0
      %v874 = vpop.f32.mrb[0].mxu0
      %v875 = vadd.f32 0.0, %v874
      %v876 = vpop.f32.mrb[0].mxu0
      %877 = vmatprep.mubr.bf16.mxu0 0
      %878 = vmatmul.mubr.bf16.gmra.mrb[0].mxu0 %v815
      %v879 = vpop.f32.mrb[0].mxu0
      %v880 = vadd.f32 0.0, %v879
      %v881 = vpop.f32.mrb[0].mxu0
      %v882 = vpop.f32.mrb[0].mxu0
      %v883 = vadd.f32 0.0, %v882
      %v884 = vpop.f32.mrb[0].mxu0
      %885 = vmatprep.mubr.bf16.mxu0 0
      %886 = vmatmul.mubr.bf16.gmra.mrb[0].mxu0 %v816
      %v887 = vpop.f32.mrb[0].mxu0
      %v888 = vadd.f32 0.0, %v887
      %v889 = vpop.f32.mrb[0].mxu0
      %v890 = vpop.f32.mrb[0].mxu0
      %v891 = vadd.f32 0.0, %v890
      %v892 = vpop.f32.mrb[0].mxu0
      %893 = vmatprep.mubr.bf16.mxu0 0
      %894 = vmatmul.mubr.bf16.gmra.mrb[0].mxu0 %v817
      %v895 = vpop.f32.mrb[0].mxu0
      %v896 = vadd.f32 0.0, %v895
      %v897 = vpop.f32.mrb[0].mxu0
      %v898 = vpop.f32.mrb[0].mxu0
      %v899 = vadd.f32 0.0, %v898
      %v900 = vpop.f32.mrb[0].mxu0
      %901 = vmatprep.mubr.bf16.mxu0 0
      %902 = vmatmul.mubr.bf16.gmra.mrb[0].mxu0 %v818
      %v903 = vpop.f32.mrb[0].mxu0
      %v904 = vadd.f32 0.0, %v903
      %v905 = vpop.f32.mrb[0].mxu0
      %v906 = vpop.f32.mrb[0].mxu0
      %v907 = vadd.f32 0.0, %v906
      %v908 = vpop.f32.mrb[0].mxu0
      %909 = vmatprep.mubr.bf16.mxu0 0
      %910 = vmatmul.mubr.bf16.gmra.mrb[0].mxu0 %v819
      %v911 = vpop.f32.mrb[0].mxu0
      %v912 = vadd.f32 0.0, %v911
      %v913 = vpop.f32.mrb[0].mxu0
      %v914 = vpop.f32.mrb[0].mxu0
      %v915 = vadd.f32 0.0, %v914
      %v916 = vpop.f32.mrb[0].mxu0
      %917 = vmatprep.mubr.bf16.mxu0 0
      %918 = vmatmul.mubr.bf16.gmra.mrb[0].mxu0 %v820
      %v919 = vpop.f32.mrb[0].mxu0
      %v920 = vadd.f32 0.0, %v919
      %v921 = vpop.f32.mrb[0].mxu0
      %v922 = vpop.f32.mrb[0].mxu0
      %v923 = vadd.f32 0.0, %v922
      %v924 = vpop.f32.mrb[0].mxu0
      %925 = vdwg.mxu0
      %v926 = vadd.f32 %v572, %v864
      %v927 = vadd.f32 %v573, %v867
      %v928 = vadd.f32 %v574, %v872
      %v929 = vadd.f32 %v575, %v875
      %v930 = vadd.f32 %v576, %v880
      %v931 = vadd.f32 %v577, %v883
      %v932 = vadd.f32 %v578, %v888
      %v933 = vadd.f32 %v579, %v891
      %v934 = vadd.f32 %v580, %v896
      %v935 = vadd.f32 %v581, %v899
      %v936 = vadd.f32 %v582, %v904
      %v937 = vadd.f32 %v583, %v907
      %v938 = vadd.f32 %v584, %v912
      %v939 = vadd.f32 %v585, %v915
      %v940 = vadd.f32 %v586, %v920
      %v941 = vadd.f32 %v587, %v923
      %v942 = vpack.c.bf16 %v927, %v926
      %v943 = vpack.c.bf16 %v929, %v928
      %v944 = vpack.c.bf16 %v931, %v930
      %v945 = vpack.c.bf16 %v933, %v932
      %v946 = vpack.c.bf16 %v935, %v934
      %v947 = vpack.c.bf16 %v937, %v936
      %v948 = vpack.c.bf16 %v939, %v938
      %v949 = vpack.c.bf16 %v941, %v940
      %s950 = scalar_lea.vmem %s8, 16
      %v951 = vld [vmem:[%s950] sm:$0xf]
      %v952 = vld [vmem:[%s950 + $0x4] sm:$0xf]
      %v953 = vld [vmem:[%s950 + $0x8] sm:$0xf]
      %v954 = vld [vmem:[%s950 + $0xc] sm:$0xf]
      %s955 = scalar_lea.vmem %s9, 1
      %v956 = vld [vmem:[%s955] sm:$0x1]
      %v958 = vlaneseq
      %v959 = vshrl.u32 %v958, 7
      %v960 = vsub.s32 0, %v959
      %v961 = vrot.slane %v956, %v960
      %v967 = vunpack.c.l.b16 %v951
      %v968 = vunpack.c.l.b16 %v952
      %v969 = vunpack.c.l.b16 %v953
      %v970 = vunpack.c.l.b16 %v954
      %v971 = vpack.c.b16 %v968, %v967
      %v972 = vpack.c.b16 %v970, %v969
      %v976 = vsel %vm635, %v942, 0
      %v979 = vsel %vm635, %v943, 0
      %v982 = vsel %vm635, %v944, 0
      %v985 = vsel %vm635, %v945, 0
      %v988 = vsel %vm635, %v946, 0
      %v991 = vsel %vm635, %v947, 0
      %v994 = vsel %vm635, %v948, 0
      %v997 = vsel %vm635, %v949, 0
      %999 = vmatprep.subr.bf16.mxu0 0
      %1000 = vmatpush1.bf16.msra.mxu0 %v971
      %1001 = vmatprep.subr.bf16.mxu0 0
      %1002 = vmatpush1.bf16.msra.mxu0 %v972
      %1003 = vmatprep.subr.bf16.mxu0 0
      %1004 = vmatpush1.bf16.msra.mxu0 0
      %1005 = vmatprep.subr.bf16.mxu0 0
      %1006 = vmatpush1.bf16.msra.mxu0 0
      %1007 = vmatprep.subr.bf16.mxu0 0
      %1008 = vmatpush1.bf16.msra.mxu0 0
      %1009 = vmatprep.subr.bf16.mxu0 0
      %1010 = vmatpush1.bf16.msra.mxu0 0
      %1011 = vmatprep.subr.bf16.mxu0 0
      %1012 = vmatpush1.bf16.msra.mxu0 0
      %1013 = vmatprep.subr.bf16.mxu0 0
      %1014 = vmatpush1.bf16.msra.mxu0 0
      %1015 = vmatprep.subr.bf16.mxu0 0
      %1016 = vmatpush1.bf16.msra.mxu0 0
      %1017 = vmatprep.subr.bf16.mxu0 0
      %1018 = vmatpush1.bf16.msra.mxu0 0
      %1019 = vmatprep.subr.bf16.mxu0 0
      %1020 = vmatpush1.bf16.msra.mxu0 0
      %1021 = vmatprep.subr.bf16.mxu0 0
      %1022 = vmatpush1.bf16.msra.mxu0 0
      %1023 = vmatprep.subr.bf16.mxu0 0
      %1024 = vmatpush1.bf16.msra.mxu0 0
      %1025 = vmatprep.subr.bf16.mxu0 0
      %1026 = vmatpush1.bf16.msra.mxu0 0
      %1027 = vmatprep.subr.bf16.mxu0 0
      %1028 = vmatpush1.bf16.msra.mxu0 0
      %1029 = vmatprep.subr.bf16.mxu0 0
      %1030 = vmatpush1.bf16.msra.mxu0 0
      %1031 = vmatprep.mubr.bf16.mxu0 0
      %1032 = vmatmul.mubr.bf16.gmra.mrb[0].mxu0 %v976
      %v1033 = vpop.f32.mrb[0].mxu0
      %v1034 = vadd.f32 %v961, %v1033
      %v1035 = vpop.f32.mrb[0].mxu0
      %v1036 = vpop.f32.mrb[0].mxu0
      %v1037 = vadd.f32 %v961, %v1036
      %v1038 = vpop.f32.mrb[0].mxu0
      %1039 = vmatprep.mubr.bf16.mxu0 0
      %1040 = vmatmul.mubr.bf16.gmra.mrb[0].mxu0 %v979
      %v1041 = vpop.f32.mrb[0].mxu0
      %v1042 = vadd.f32 %v961, %v1041
      %v1043 = vpop.f32.mrb[0].mxu0
      %v1044 = vpop.f32.mrb[0].mxu0
      %v1045 = vadd.f32 %v961, %v1044
      %v1046 = vpop.f32.mrb[0].mxu0
      %1047 = vmatprep.mubr.bf16.mxu0 0
      %1048 = vmatmul.mubr.bf16.gmra.mrb[0].mxu0 %v982
      %v1049 = vpop.f32.mrb[0].mxu0
      %v1050 = vadd.f32 %v961, %v1049
      %v1051 = vpop.f32.mrb[0].mxu0
      %v1052 = vpop.f32.mrb[0].mxu0
      %v1053 = vadd.f32 %v961, %v1052
      %v1054 = vpop.f32.mrb[0].mxu0
      %1055 = vmatprep.mubr.bf16.mxu0 0
      %1056 = vmatmul.mubr.bf16.gmra.mrb[0].mxu0 %v985
      %v1057 = vpop.f32.mrb[0].mxu0
      %v1058 = vadd.f32 %v961, %v1057
      %v1059 = vpop.f32.mrb[0].mxu0
      %v1060 = vpop.f32.mrb[0].mxu0
      %v1061 = vadd.f32 %v961, %v1060
      %v1062 = vpop.f32.mrb[0].mxu0
      %1063 = vmatprep.mubr.bf16.mxu0 0
      %1064 = vmatmul.mubr.bf16.gmra.mrb[0].mxu0 %v988
      %v1065 = vpop.f32.mrb[0].mxu0
      %v1066 = vadd.f32 %v961, %v1065
      %v1067 = vpop.f32.mrb[0].mxu0
      %v1068 = vpop.f32.mrb[0].mxu0
      %v1069 = vadd.f32 %v961, %v1068
      %v1070 = vpop.f32.mrb[0].mxu0
      %1071 = vmatprep.mubr.bf16.mxu0 0
      %1072 = vmatmul.mubr.bf16.gmra.mrb[0].mxu0 %v991
      %v1073 = vpop.f32.mrb[0].mxu0
      %v1074 = vadd.f32 %v961, %v1073
      %v1075 = vpop.f32.mrb[0].mxu0
      %v1076 = vpop.f32.mrb[0].mxu0
      %v1077 = vadd.f32 %v961, %v1076
      %v1078 = vpop.f32.mrb[0].mxu0
      %1079 = vmatprep.mubr.bf16.mxu0 0
      %1080 = vmatmul.mubr.bf16.gmra.mrb[0].mxu0 %v994
      %v1081 = vpop.f32.mrb[0].mxu0
      %v1082 = vadd.f32 %v961, %v1081
      %v1083 = vpop.f32.mrb[0].mxu0
      %v1084 = vpop.f32.mrb[0].mxu0
      %v1085 = vadd.f32 %v961, %v1084
      %v1086 = vpop.f32.mrb[0].mxu0
      %1087 = vmatprep.mubr.bf16.mxu0 0
      %1088 = vmatmul.mubr.bf16.gmra.mrb[0].mxu0 %v997
      %v1089 = vpop.f32.mrb[0].mxu0
      %v1090 = vadd.f32 %v961, %v1089
      %v1091 = vpop.f32.mrb[0].mxu0
      %v1092 = vpop.f32.mrb[0].mxu0
      %v1093 = vadd.f32 %v961, %v1092
      %v1094 = vpop.f32.mrb[0].mxu0
      %1095 = vdwg.mxu0
      %v1096 = vmax.f32 %v1034, 0.0
      %v1097 = vmax.f32 %v1037, 0.0
      %v1098 = vmax.f32 %v1042, 0.0
      %v1099 = vmax.f32 %v1045, 0.0
      %v1100 = vmax.f32 %v1050, 0.0
      %v1101 = vmax.f32 %v1053, 0.0
      %v1102 = vmax.f32 %v1058, 0.0
      %v1103 = vmax.f32 %v1061, 0.0
      %v1104 = vmax.f32 %v1066, 0.0
      %v1105 = vmax.f32 %v1069, 0.0
      %v1106 = vmax.f32 %v1074, 0.0
      %v1107 = vmax.f32 %v1077, 0.0
      %v1108 = vmax.f32 %v1082, 0.0
      %v1109 = vmax.f32 %v1085, 0.0
      %v1110 = vmax.f32 %v1090, 0.0
      %v1111 = vmax.f32 %v1093, 0.0
      %v1112 = vpack.c.bf16 %v1097, %v1096
      %v1113 = vpack.c.bf16 %v1099, %v1098
      %v1114 = vpack.c.bf16 %v1101, %v1100
      %v1115 = vpack.c.bf16 %v1103, %v1102
      %v1116 = vpack.c.bf16 %v1105, %v1104
      %v1117 = vpack.c.bf16 %v1107, %v1106
      %v1118 = vpack.c.bf16 %v1109, %v1108
      %v1119 = vpack.c.bf16 %v1111, %v1110
      %1120 = vmatprep.subr.bf16.mxu0 0
      %1121 = vmatpush1.bf16.msra.mxu0 %v1112
      %1122 = vmatprep.subr.bf16.mxu0 0
      %1123 = vmatpush1.bf16.msra.mxu0 %v1113
      %1124 = vmatprep.subr.bf16.mxu0 0
      %1125 = vmatpush1.bf16.msra.mxu0 %v1114
      %1126 = vmatprep.subr.bf16.mxu0 0
      %1127 = vmatpush1.bf16.msra.mxu0 %v1115
      %1128 = vmatprep.subr.bf16.mxu0 0
      %1129 = vmatpush1.bf16.msra.mxu0 %v1116
      %1130 = vmatprep.subr.bf16.mxu0 0
      %1131 = vmatpush1.bf16.msra.mxu0 %v1117
      %1132 = vmatprep.subr.bf16.mxu0 0
      %1133 = vmatpush1.bf16.msra.mxu0 %v1118
      %1134 = vmatprep.subr.bf16.mxu0 0
      %1135 = vmatpush1.bf16.msra.mxu0 %v1119
      %1136 = vmatprep.subr.bf16.mxu0 0
      %1137 = vmatpush1.bf16.msra.mxu0 0
      %1138 = vmatprep.subr.bf16.mxu0 0
      %1139 = vmatpush1.bf16.msra.mxu0 0
      %1140 = vmatprep.subr.bf16.mxu0 0
      %1141 = vmatpush1.bf16.msra.mxu0 0
      %1142 = vmatprep.subr.bf16.mxu0 0
      %1143 = vmatpush1.bf16.msra.mxu0 0
      %1144 = vmatprep.subr.bf16.mxu0 0
      %1145 = vmatpush1.bf16.msra.mxu0 0
      %1146 = vmatprep.subr.bf16.mxu0 0
      %1147 = vmatpush1.bf16.msra.mxu0 0
      %1148 = vmatprep.subr.bf16.mxu0 0
      %1149 = vmatpush1.bf16.msra.mxu0 0
      %1150 = vmatprep.subr.bf16.mxu0 0
      %1151 = vmatpush1.bf16.msra.mxu0 0
      %1152 = vmatprep.mubr.bf16.mxu0 0
      %1153 = vmatmul.mubr.bf16.gmra.mrb[0].mxu0 %v813
      %v1154 = vpop.f32.mrb[0].mxu0
      %v1155 = vadd.f32 0.0, %v1154
      %v1156 = vpop.f32.mrb[0].mxu0
      %v1157 = vpop.f32.mrb[0].mxu0
      %v1158 = vadd.f32 0.0, %v1157
      %v1159 = vpop.f32.mrb[0].mxu0
      %1160 = vmatprep.mubr.bf16.mxu0 0
      %1161 = vmatmul.mubr.bf16.gmra.mrb[0].mxu0 %v814
      %v1162 = vpop.f32.mrb[0].mxu0
      %v1163 = vadd.f32 0.0, %v1162
      %v1164 = vpop.f32.mrb[0].mxu0
      %v1165 = vpop.f32.mrb[0].mxu0
      %v1166 = vadd.f32 0.0, %v1165
      %v1167 = vpop.f32.mrb[0].mxu0
      %1168 = vmatprep.mubr.bf16.mxu0 0
      %1169 = vmatmul.mubr.bf16.gmra.mrb[0].mxu0 %v815
      %v1170 = vpop.f32.mrb[0].mxu0
      %v1171 = vadd.f32 0.0, %v1170
      %v1172 = vpop.f32.mrb[0].mxu0
      %v1173 = vpop.f32.mrb[0].mxu0
      %v1174 = vadd.f32 0.0, %v1173
      %v1175 = vpop.f32.mrb[0].mxu0
      %1176 = vmatprep.mubr.bf16.mxu0 0
      %1177 = vmatmul.mubr.bf16.gmra.mrb[0].mxu0 %v816
      %v1178 = vpop.f32.mrb[0].mxu0
      %v1179 = vadd.f32 0.0, %v1178
      %v1180 = vpop.f32.mrb[0].mxu0
      %v1181 = vpop.f32.mrb[0].mxu0
      %v1182 = vadd.f32 0.0, %v1181
      %v1183 = vpop.f32.mrb[0].mxu0
      %1184 = vmatprep.mubr.bf16.mxu0 0
      %1185 = vmatmul.mubr.bf16.gmra.mrb[0].mxu0 %v817
      %v1186 = vpop.f32.mrb[0].mxu0
      %v1187 = vadd.f32 0.0, %v1186
      %v1188 = vpop.f32.mrb[0].mxu0
      %v1189 = vpop.f32.mrb[0].mxu0
      %v1190 = vadd.f32 0.0, %v1189
      %v1191 = vpop.f32.mrb[0].mxu0
      %1192 = vmatprep.mubr.bf16.mxu0 0
      %1193 = vmatmul.mubr.bf16.gmra.mrb[0].mxu0 %v818
      %v1194 = vpop.f32.mrb[0].mxu0
      %v1195 = vadd.f32 0.0, %v1194
      %v1196 = vpop.f32.mrb[0].mxu0
      %v1197 = vpop.f32.mrb[0].mxu0
      %v1198 = vadd.f32 0.0, %v1197
      %v1199 = vpop.f32.mrb[0].mxu0
      %1200 = vmatprep.mubr.bf16.mxu0 0
      %1201 = vmatmul.mubr.bf16.gmra.mrb[0].mxu0 %v819
      %v1202 = vpop.f32.mrb[0].mxu0
      %v1203 = vadd.f32 0.0, %v1202
      %v1204 = vpop.f32.mrb[0].mxu0
      %v1205 = vpop.f32.mrb[0].mxu0
      %v1206 = vadd.f32 0.0, %v1205
      %v1207 = vpop.f32.mrb[0].mxu0
      %1208 = vmatprep.mubr.bf16.mxu0 0
      %1209 = vmatmul.mubr.bf16.gmra.mrb[0].mxu0 %v820
      %v1210 = vpop.f32.mrb[0].mxu0
      %v1211 = vadd.f32 0.0, %v1210
      %v1212 = vpop.f32.mrb[0].mxu0
      %v1213 = vpop.f32.mrb[0].mxu0
      %v1214 = vadd.f32 0.0, %v1213
      %v1215 = vpop.f32.mrb[0].mxu0
      %1216 = vdwg.mxu0
      %v1217 = vadd.f32 %v926, %v1155
      %v1218 = vadd.f32 %v927, %v1158
      %v1219 = vadd.f32 %v928, %v1163
      %v1220 = vadd.f32 %v929, %v1166
      %v1221 = vadd.f32 %v930, %v1171
      %v1222 = vadd.f32 %v931, %v1174
      %v1223 = vadd.f32 %v932, %v1179
      %v1224 = vadd.f32 %v933, %v1182
      %v1225 = vadd.f32 %v934, %v1187
      %v1226 = vadd.f32 %v935, %v1190
      %v1227 = vadd.f32 %v936, %v1195
      %v1228 = vadd.f32 %v937, %v1198
      %v1229 = vadd.f32 %v938, %v1203
      %v1230 = vadd.f32 %v939, %v1206
      %v1231 = vadd.f32 %v940, %v1211
      %v1232 = vadd.f32 %v941, %v1214
      %v1233 = vld [vmem:[%s3] sm:$0xf]
      %v1234 = vld [vmem:[%s3 + $0x4] sm:$0xf]
      %v1235 = vpack.c.bf16 %v1218, %v1217
      %v1236 = vpack.c.bf16 %v1220, %v1219
      %v1237 = vpack.c.bf16 %v1222, %v1221
      %v1238 = vpack.c.bf16 %v1224, %v1223
      %v1239 = vpack.c.bf16 %v1226, %v1225
      %v1240 = vpack.c.bf16 %v1228, %v1227
      %v1241 = vpack.c.bf16 %v1230, %v1229
      %v1242 = vpack.c.bf16 %v1232, %v1231
      %v1245 = vunpack.c.l.b16 %v1233
      %v1246 = vunpack.c.l.b16 %v1234
      %v1247 = vpack.c.b16 %v1246, %v1245
      %1249 = vmatprep.subr.bf16.mxu0 0
      %1250 = vmatpush1.bf16.msra.mxu0 %v1235
      %1251 = vmatprep.subr.bf16.mxu0 0
      %1252 = vmatpush1.bf16.msra.mxu0 %v1236
      %1253 = vmatprep.subr.bf16.mxu0 0
      %1254 = vmatpush1.bf16.msra.mxu0 %v1237
      %1255 = vmatprep.subr.bf16.mxu0 0
      %1256 = vmatpush1.bf16.msra.mxu0 %v1238
      %1257 = vmatprep.subr.bf16.mxu0 0
      %1258 = vmatpush1.bf16.msra.mxu0 %v1239
      %1259 = vmatprep.subr.bf16.mxu0 0
      %1260 = vmatpush1.bf16.msra.mxu0 %v1240
      %1261 = vmatprep.subr.bf16.mxu0 0
      %1262 = vmatpush1.bf16.msra.mxu0 %v1241
      %1263 = vmatprep.subr.bf16.mxu0 0
      %1264 = vmatpush1.bf16.msra.mxu0 %v1242
      %1265 = vmatprep.subr.bf16.mxu0 0
      %1266 = vmatpush1.bf16.msra.mxu0 0
      %1267 = vmatprep.subr.bf16.mxu0 0
      %1268 = vmatpush1.bf16.msra.mxu0 0
      %1269 = vmatprep.subr.bf16.mxu0 0
      %1270 = vmatpush1.bf16.msra.mxu0 0
      %1271 = vmatprep.subr.bf16.mxu0 0
      %1272 = vmatpush1.bf16.msra.mxu0 0
      %1273 = vmatprep.subr.bf16.mxu0 0
      %1274 = vmatpush1.bf16.msra.mxu0 0
      %1275 = vmatprep.subr.bf16.mxu0 0
      %1276 = vmatpush1.bf16.msra.mxu0 0
      %1277 = vmatprep.subr.bf16.mxu0 0
      %1278 = vmatpush1.bf16.msra.mxu0 0
      %1279 = vmatprep.subr.bf16.mxu0 0
      %1280 = vmatpush1.bf16.msra.mxu0 0
      %1281 = vmatprep.mubr.bf16.mxu0 0
      %1282 = vmatmul.mubr.bf16.gmra.mrb[0].mxu0 %v1247
      %v1283 = vpop.f32.mrb[0].mxu0
      %v1284 = vadd.f32 0.0, %v1283
      %v1285 = vpop.f32.mrb[0].mxu0
      %v1286 = vpop.f32.mrb[0].mxu0
      %v1287 = vadd.f32 0.0, %v1286
      %v1288 = vpop.f32.mrb[0].mxu0
      %1289 = vdwg.mxu0
      %v1290 = vmul.f32 %v1284, 0.125
      %v1291 = vmul.f32 %v1287, 0.125
      %v1292 = vld [vmem:[%s563] sm:$0xff]
      %v1293 = vld [vmem:[%s563 + $0x8] sm:$0xff]
      %v1294 = vld [vmem:[%s563 + $0x10] sm:$0xff]
      %v1295 = vld [vmem:[%s563 + $0x18] sm:$0xff]
      %v1296 = vld [vmem:[%s563 + $0x20] sm:$0xff]
      %v1297 = vld [vmem:[%s563 + $0x28] sm:$0xff]
      %v1298 = vld [vmem:[%s563 + $0x30] sm:$0xff]
      %v1299 = vld [vmem:[%s563 + $0x38] sm:$0xff]
      %v1300 = vld [vmem:[%s563 + $0x40] sm:$0xff]
      %v1301 = vld [vmem:[%s563 + $0x48] sm:$0xff]
      %v1302 = vld [vmem:[%s563 + $0x50] sm:$0xff]
      %v1303 = vld [vmem:[%s563 + $0x58] sm:$0xff]
      %v1304 = vld [vmem:[%s563 + $0x60] sm:$0xff]
      %v1305 = vld [vmem:[%s563 + $0x68] sm:$0xff]
      %v1306 = vld [vmem:[%s563 + $0x70] sm:$0xff]
      %v1307 = vld [vmem:[%s563 + $0x78] sm:$0xff]
      %v1308 = vld [vmem:[%s563 + $0x80] sm:$0xff]
      %v1309 = vld [vmem:[%s563 + $0x88] sm:$0xff]
      %v1310 = vld [vmem:[%s563 + $0x90] sm:$0xff]
      %v1311 = vld [vmem:[%s563 + $0x98] sm:$0xff]
      %v1312 = vld [vmem:[%s563 + $0xa0] sm:$0xff]
      %v1313 = vld [vmem:[%s563 + $0xa8] sm:$0xff]
      %v1314 = vld [vmem:[%s563 + $0xb0] sm:$0xff]
      %v1315 = vld [vmem:[%s563 + $0xb8] sm:$0xff]
      %v1316 = vld [vmem:[%s563 + $0xc0] sm:$0xff]
      %v1317 = vld [vmem:[%s563 + $0xc8] sm:$0xff]
      %v1318 = vld [vmem:[%s563 + $0xd0] sm:$0xff]
      %v1319 = vld [vmem:[%s563 + $0xd8] sm:$0xff]
      %v1320 = vld [vmem:[%s563 + $0xe0] sm:$0xff]
      %v1321 = vld [vmem:[%s563 + $0xe8] sm:$0xff]
      %v1322 = vld [vmem:[%s563 + $0xf0] sm:$0xff]
      %v1323 = vld [vmem:[%s563 + $0xf8] sm:$0xff]
      %v1324 = vlaneseq
      %v1325 = vshrl.u32 %v1324, 7
      %v1326 = vadd.s32 %v1325, 8
      %v1327 = vadd.s32 %v1325, 16
      %v1328 = vadd.s32 %v1325, 24
      %v1329 = vadd.s32 %v1325, 32
      %v1330 = vadd.s32 %v1325, 40
      %v1331 = vadd.s32 %v1325, 48
      %v1332 = vadd.s32 %v1325, 56
      %v1333 = vadd.s32 %v1325, 64
      %v1334 = vadd.s32 %v1325, 72
      %v1335 = vadd.s32 %v1325, 80
      %v1336 = vadd.s32 %v1325, 88
      %v1337 = vadd.s32 %v1325, 96
      %v1338 = vadd.s32 %v1325, 104
      %v1339 = vadd.s32 %v1325, 112
      %v1340 = vadd.s32 %v1325, 120
      %v1341 = vadd.s32 %v1325, 128
      %v1342 = vadd.s32 %v1325, 136
      %v1343 = vadd.s32 %v1325, 144
      %v1344 = vadd.s32 %v1325, 152
      %v1345 = vadd.s32 %v1325, 160
      %v1346 = vadd.s32 %v1325, 168
      %v1347 = vadd.s32 %v1325, 176
      %v1348 = vadd.s32 %v1325, 184
      %v1349 = vadd.s32 %v1325, 192
      %v1350 = vadd.s32 %v1325, 200
      %v1351 = vadd.s32 %v1325, 208
      %v1352 = vadd.s32 %v1325, 216
      %v1353 = vadd.s32 %v1325, 224
      %v1354 = vadd.s32 %v1325, 232
      %v1355 = vadd.s32 %v1325, 240
      %v1356 = vadd.s32 %v1325, 248
      %vm1357 = vcmp.lt.s32.totalorder %v1325, 0
      %v1358 = vsub.s32 0, %v1325
      %v1359 = vsel %vm1357, %v1358, %v1325
      %v1360 = vshrl.u32 %v1359, 4
      %v1361 = vand.u32 %v1359, 15
      %v1362 = vsub.s32 0, %v1361
      %v1363 = vsel %vm1357, %v1362, %v1361
      %vm1364 = vcmp.lt.s32.totalorder %v1326, 0
      %v1365 = vsub.s32 0, %v1326
      %v1366 = vsel %vm1364, %v1365, %v1326
      %v1367 = vshrl.u32 %v1366, 4
      %v1368 = vand.u32 %v1366, 15
      %v1369 = vsub.s32 0, %v1368
      %v1370 = vsel %vm1364, %v1369, %v1368
      %vm1371 = vcmp.lt.s32.totalorder %v1327, 0
      %v1372 = vsub.s32 0, %v1327
      %v1373 = vsel %vm1371, %v1372, %v1327
      %v1374 = vshrl.u32 %v1373, 4
      %v1375 = vand.u32 %v1373, 15
      %v1376 = vsub.s32 0, %v1375
      %v1377 = vsel %vm1371, %v1376, %v1375
      %vm1378 = vcmp.lt.s32.totalorder %v1328, 0
      %v1379 = vsub.s32 0, %v1328
      %v1380 = vsel %vm1378, %v1379, %v1328
      %v1381 = vshrl.u32 %v1380, 4
      %v1382 = vand.u32 %v1380, 15
      %v1383 = vsub.s32 0, %v1382
      %v1384 = vsel %vm1378, %v1383, %v1382
      %vm1385 = vcmp.lt.s32.totalorder %v1329, 0
      %v1386 = vsub.s32 0, %v1329
      %v1387 = vsel %vm1385, %v1386, %v1329
      %v1388 = vshrl.u32 %v1387, 4
      %v1389 = vand.u32 %v1387, 15
      %v1390 = vsub.s32 0, %v1389
      %v1391 = vsel %vm1385, %v1390, %v1389
      %vm1392 = vcmp.lt.s32.totalorder %v1330, 0
      %v1393 = vsub.s32 0, %v1330
      %v1394 = vsel %vm1392, %v1393, %v1330
      %v1395 = vshrl.u32 %v1394, 4
      %v1396 = vand.u32 %v1394, 15
      %v1397 = vsub.s32 0, %v1396
      %v1398 = vsel %vm1392, %v1397, %v1396
      %vm1399 = vcmp.lt.s32.totalorder %v1331, 0
      %v1400 = vsub.s32 0, %v1331
      %v1401 = vsel %vm1399, %v1400, %v1331
      %v1402 = vshrl.u32 %v1401, 4
      %v1403 = vand.u32 %v1401, 15
      %v1404 = vsub.s32 0, %v1403
      %v1405 = vsel %vm1399, %v1404, %v1403
      %vm1406 = vcmp.lt.s32.totalorder %v1332, 0
      %v1407 = vsub.s32 0, %v1332
      %v1408 = vsel %vm1406, %v1407, %v1332
      %v1409 = vshrl.u32 %v1408, 4
      %v1410 = vand.u32 %v1408, 15
      %v1411 = vsub.s32 0, %v1410
      %v1412 = vsel %vm1406, %v1411, %v1410
      %vm1413 = vcmp.lt.s32.totalorder %v1333, 0
      %v1414 = vsub.s32 0, %v1333
      %v1415 = vsel %vm1413, %v1414, %v1333
      %v1416 = vshrl.u32 %v1415, 4
      %v1417 = vand.u32 %v1415, 15
      %v1418 = vsub.s32 0, %v1417
      %v1419 = vsel %vm1413, %v1418, %v1417
      %vm1420 = vcmp.lt.s32.totalorder %v1334, 0
      %v1421 = vsub.s32 0, %v1334
      %v1422 = vsel %vm1420, %v1421, %v1334
      %v1423 = vshrl.u32 %v1422, 4
      %v1424 = vand.u32 %v1422, 15
      %v1425 = vsub.s32 0, %v1424
      %v1426 = vsel %vm1420, %v1425, %v1424
      %vm1427 = vcmp.lt.s32.totalorder %v1335, 0
      %v1428 = vsub.s32 0, %v1335
      %v1429 = vsel %vm1427, %v1428, %v1335
      %v1430 = vshrl.u32 %v1429, 4
      %v1431 = vand.u32 %v1429, 15
      %v1432 = vsub.s32 0, %v1431
      %v1433 = vsel %vm1427, %v1432, %v1431
      %vm1434 = vcmp.lt.s32.totalorder %v1336, 0
      %v1435 = vsub.s32 0, %v1336
      %v1436 = vsel %vm1434, %v1435, %v1336
      %v1437 = vshrl.u32 %v1436, 4
      %v1438 = vand.u32 %v1436, 15
      %v1439 = vsub.s32 0, %v1438
      %v1440 = vsel %vm1434, %v1439, %v1438
      %vm1441 = vcmp.lt.s32.totalorder %v1337, 0
      %v1442 = vsub.s32 0, %v1337
      %v1443 = vsel %vm1441, %v1442, %v1337
      %v1444 = vshrl.u32 %v1443, 4
      %v1445 = vand.u32 %v1443, 15
      %v1446 = vsub.s32 0, %v1445
      %v1447 = vsel %vm1441, %v1446, %v1445
      %vm1448 = vcmp.lt.s32.totalorder %v1338, 0
      %v1449 = vsub.s32 0, %v1338
      %v1450 = vsel %vm1448, %v1449, %v1338
      %v1451 = vshrl.u32 %v1450, 4
      %v1452 = vand.u32 %v1450, 15
      %v1453 = vsub.s32 0, %v1452
      %v1454 = vsel %vm1448, %v1453, %v1452
      %vm1455 = vcmp.lt.s32.totalorder %v1339, 0
      %v1456 = vsub.s32 0, %v1339
      %v1457 = vsel %vm1455, %v1456, %v1339
      %v1458 = vshrl.u32 %v1457, 4
      %v1459 = vand.u32 %v1457, 15
      %v1460 = vsub.s32 0, %v1459
      %v1461 = vsel %vm1455, %v1460, %v1459
      %vm1462 = vcmp.lt.s32.totalorder %v1340, 0
      %v1463 = vsub.s32 0, %v1340
      %v1464 = vsel %vm1462, %v1463, %v1340
      %v1465 = vshrl.u32 %v1464, 4
      %v1466 = vand.u32 %v1464, 15
      %v1467 = vsub.s32 0, %v1466
      %v1468 = vsel %vm1462, %v1467, %v1466
      %vm1469 = vcmp.lt.s32.totalorder %v1341, 0
      %v1470 = vsub.s32 0, %v1341
      %v1471 = vsel %vm1469, %v1470, %v1341
      %v1472 = vshrl.u32 %v1471, 4
      %v1473 = vand.u32 %v1471, 15
      %v1474 = vsub.s32 0, %v1473
      %v1475 = vsel %vm1469, %v1474, %v1473
      %vm1476 = vcmp.lt.s32.totalorder %v1342, 0
      %v1477 = vsub.s32 0, %v1342
      %v1478 = vsel %vm1476, %v1477, %v1342
      %v1479 = vshrl.u32 %v1478, 4
      %v1480 = vand.u32 %v1478, 15
      %v1481 = vsub.s32 0, %v1480
      %v1482 = vsel %vm1476, %v1481, %v1480
      %vm1483 = vcmp.lt.s32.totalorder %v1343, 0
      %v1484 = vsub.s32 0, %v1343
      %v1485 = vsel %vm1483, %v1484, %v1343
      %v1486 = vshrl.u32 %v1485, 4
      %v1487 = vand.u32 %v1485, 15
      %v1488 = vsub.s32 0, %v1487
      %v1489 = vsel %vm1483, %v1488, %v1487
      %vm1490 = vcmp.lt.s32.totalorder %v1344, 0
      %v1491 = vsub.s32 0, %v1344
      %v1492 = vsel %vm1490, %v1491, %v1344
      %v1493 = vshrl.u32 %v1492, 4
      %v1494 = vand.u32 %v1492, 15
      %v1495 = vsub.s32 0, %v1494
      %v1496 = vsel %vm1490, %v1495, %v1494
      %vm1497 = vcmp.lt.s32.totalorder %v1345, 0
      %v1498 = vsub.s32 0, %v1345
      %v1499 = vsel %vm1497, %v1498, %v1345
      %v1500 = vshrl.u32 %v1499, 4
      %v1501 = vand.u32 %v1499, 15
      %v1502 = vsub.s32 0, %v1501
      %v1503 = vsel %vm1497, %v1502, %v1501
      %vm1504 = vcmp.lt.s32.totalorder %v1346, 0
      %v1505 = vsub.s32 0, %v1346
      %v1506 = vsel %vm1504, %v1505, %v1346
      %v1507 = vshrl.u32 %v1506, 4
      %v1508 = vand.u32 %v1506, 15
      %v1509 = vsub.s32 0, %v1508
      %v1510 = vsel %vm1504, %v1509, %v1508
      %vm1511 = vcmp.lt.s32.totalorder %v1347, 0
      %v1512 = vsub.s32 0, %v1347
      %v1513 = vsel %vm1511, %v1512, %v1347
      %v1514 = vshrl.u32 %v1513, 4
      %v1515 = vand.u32 %v1513, 15
      %v1516 = vsub.s32 0, %v1515
      %v1517 = vsel %vm1511, %v1516, %v1515
      %vm1518 = vcmp.lt.s32.totalorder %v1348, 0
      %v1519 = vsub.s32 0, %v1348
      %v1520 = vsel %vm1518, %v1519, %v1348
      %v1521 = vshrl.u32 %v1520, 4
      %v1522 = vand.u32 %v1520, 15
      %v1523 = vsub.s32 0, %v1522
      %v1524 = vsel %vm1518, %v1523, %v1522
      %vm1525 = vcmp.lt.s32.totalorder %v1349, 0
      %v1526 = vsub.s32 0, %v1349
      %v1527 = vsel %vm1525, %v1526, %v1349
      %v1528 = vshrl.u32 %v1527, 4
      %v1529 = vand.u32 %v1527, 15
      %v1530 = vsub.s32 0, %v1529
      %v1531 = vsel %vm1525, %v1530, %v1529
      %vm1532 = vcmp.lt.s32.totalorder %v1350, 0
      %v1533 = vsub.s32 0, %v1350
      %v1534 = vsel %vm1532, %v1533, %v1350
      %v1535 = vshrl.u32 %v1534, 4
      %v1536 = vand.u32 %v1534, 15
      %v1537 = vsub.s32 0, %v1536
      %v1538 = vsel %vm1532, %v1537, %v1536
      %vm1539 = vcmp.lt.s32.totalorder %v1351, 0
      %v1540 = vsub.s32 0, %v1351
      %v1541 = vsel %vm1539, %v1540, %v1351
      %v1542 = vshrl.u32 %v1541, 4
      %v1543 = vand.u32 %v1541, 15
      %v1544 = vsub.s32 0, %v1543
      %v1545 = vsel %vm1539, %v1544, %v1543
      %vm1546 = vcmp.lt.s32.totalorder %v1352, 0
      %v1547 = vsub.s32 0, %v1352
      %v1548 = vsel %vm1546, %v1547, %v1352
      %v1549 = vshrl.u32 %v1548, 4
      %v1550 = vand.u32 %v1548, 15
      %v1551 = vsub.s32 0, %v1550
      %v1552 = vsel %vm1546, %v1551, %v1550
      %vm1553 = vcmp.lt.s32.totalorder %v1353, 0
      %v1554 = vsub.s32 0, %v1353
      %v1555 = vsel %vm1553, %v1554, %v1353
      %v1556 = vshrl.u32 %v1555, 4
      %v1557 = vand.u32 %v1555, 15
      %v1558 = vsub.s32 0, %v1557
      %v1559 = vsel %vm1553, %v1558, %v1557
      %vm1560 = vcmp.lt.s32.totalorder %v1354, 0
      %v1561 = vsub.s32 0, %v1354
      %v1562 = vsel %vm1560, %v1561, %v1354
      %v1563 = vshrl.u32 %v1562, 4
      %v1564 = vand.u32 %v1562, 15
      %v1565 = vsub.s32 0, %v1564
      %v1566 = vsel %vm1560, %v1565, %v1564
      %vm1567 = vcmp.lt.s32.totalorder %v1355, 0
      %v1568 = vsub.s32 0, %v1355
      %v1569 = vsel %vm1567, %v1568, %v1355
      %v1570 = vshrl.u32 %v1569, 4
      %v1571 = vand.u32 %v1569, 15
      %v1572 = vsub.s32 0, %v1571
      %v1573 = vsel %vm1567, %v1572, %v1571
      %vm1574 = vcmp.lt.s32.totalorder %v1356, 0
      %v1575 = vsub.s32 0, %v1356
      %v1576 = vsel %vm1574, %v1575, %v1356
      %v1577 = vshrl.u32 %v1576, 4
      %v1578 = vand.u32 %v1576, 15
      %v1579 = vsub.s32 0, %v1578
      %v1580 = vsel %vm1574, %v1579, %v1578
      %vm1581 = vcmp.ne.s32.totalorder %v1363, 0
      %vm1582 = vcmp.ne.s32.totalorder %v1370, 0
      %vm1583 = vcmp.ne.s32.totalorder %v1377, 0
      %vm1584 = vcmp.ne.s32.totalorder %v1384, 0
      %vm1585 = vcmp.ne.s32.totalorder %v1391, 0
      %vm1586 = vcmp.ne.s32.totalorder %v1398, 0
      %vm1587 = vcmp.ne.s32.totalorder %v1405, 0
      %vm1588 = vcmp.ne.s32.totalorder %v1412, 0
      %vm1589 = vcmp.ne.s32.totalorder %v1419, 0
      %vm1590 = vcmp.ne.s32.totalorder %v1426, 0
      %vm1591 = vcmp.ne.s32.totalorder %v1433, 0
      %vm1592 = vcmp.ne.s32.totalorder %v1440, 0
      %vm1593 = vcmp.ne.s32.totalorder %v1447, 0
      %vm1594 = vcmp.ne.s32.totalorder %v1454, 0
      %vm1595 = vcmp.ne.s32.totalorder %v1461, 0
      %vm1596 = vcmp.ne.s32.totalorder %v1468, 0
      %vm1597 = vcmp.ne.s32.totalorder %v1475, 0
      %vm1598 = vcmp.ne.s32.totalorder %v1482, 0
      %vm1599 = vcmp.ne.s32.totalorder %v1489, 0
      %vm1600 = vcmp.ne.s32.totalorder %v1496, 0
      %vm1601 = vcmp.ne.s32.totalorder %v1503, 0
      %vm1602 = vcmp.ne.s32.totalorder %v1510, 0
      %vm1603 = vcmp.ne.s32.totalorder %v1517, 0
      %vm1604 = vcmp.ne.s32.totalorder %v1524, 0
      %vm1605 = vcmp.ne.s32.totalorder %v1531, 0
      %vm1606 = vcmp.ne.s32.totalorder %v1538, 0
      %vm1607 = vcmp.ne.s32.totalorder %v1545, 0
      %vm1608 = vcmp.ne.s32.totalorder %v1552, 0
      %vm1609 = vcmp.ne.s32.totalorder %v1559, 0
      %vm1610 = vcmp.ne.s32.totalorder %v1566, 0
      %vm1611 = vcmp.ne.s32.totalorder %v1573, 0
      %vm1612 = vcmp.ne.s32.totalorder %v1580, 0
      %vm1613 = vcmp.lt.s32.totalorder %v1363, 0
      %vm1614 = vcmp.lt.s32.totalorder %v1370, 0
      %vm1615 = vcmp.lt.s32.totalorder %v1377, 0
      %vm1616 = vcmp.lt.s32.totalorder %v1384, 0
      %vm1617 = vcmp.lt.s32.totalorder %v1391, 0
      %vm1618 = vcmp.lt.s32.totalorder %v1398, 0
      %vm1619 = vcmp.lt.s32.totalorder %v1405, 0
      %vm1620 = vcmp.lt.s32.totalorder %v1412, 0
      %vm1621 = vcmp.lt.s32.totalorder %v1419, 0
      %vm1622 = vcmp.lt.s32.totalorder %v1426, 0
      %vm1623 = vcmp.lt.s32.totalorder %v1433, 0
      %vm1624 = vcmp.lt.s32.totalorder %v1440, 0
      %vm1625 = vcmp.lt.s32.totalorder %v1447, 0
      %vm1626 = vcmp.lt.s32.totalorder %v1454, 0
      %vm1627 = vcmp.lt.s32.totalorder %v1461, 0
      %vm1628 = vcmp.lt.s32.totalorder %v1468, 0
      %vm1629 = vcmp.lt.s32.totalorder %v1475, 0
      %vm1630 = vcmp.lt.s32.totalorder %v1482, 0
      %vm1631 = vcmp.lt.s32.totalorder %v1489, 0
      %vm1632 = vcmp.lt.s32.totalorder %v1496, 0
      %vm1633 = vcmp.lt.s32.totalorder %v1503, 0
      %vm1634 = vcmp.lt.s32.totalorder %v1510, 0
      %vm1635 = vcmp.lt.s32.totalorder %v1517, 0
      %vm1636 = vcmp.lt.s32.totalorder %v1524, 0
      %vm1637 = vcmp.lt.s32.totalorder %v1531, 0
      %vm1638 = vcmp.lt.s32.totalorder %v1538, 0
      %vm1639 = vcmp.lt.s32.totalorder %v1545, 0
      %vm1640 = vcmp.lt.s32.totalorder %v1552, 0
      %vm1641 = vcmp.lt.s32.totalorder %v1559, 0
      %vm1642 = vcmp.lt.s32.totalorder %v1566, 0
      %vm1643 = vcmp.lt.s32.totalorder %v1573, 0
      %vm1644 = vcmp.lt.s32.totalorder %v1580, 0
      %vm1645 = vmand %vm1613, %vm1581
      %vm1646 = vmand %vm1614, %vm1582
      %vm1647 = vmand %vm1615, %vm1583
      %vm1648 = vmand %vm1616, %vm1584
      %vm1649 = vmand %vm1617, %vm1585
      %vm1650 = vmand %vm1618, %vm1586
      %vm1651 = vmand %vm1619, %vm1587
      %vm1652 = vmand %vm1620, %vm1588
      %vm1653 = vmand %vm1621, %vm1589
      %vm1654 = vmand %vm1622, %vm1590
      %vm1655 = vmand %vm1623, %vm1591
      %vm1656 = vmand %vm1624, %vm1592
      %vm1657 = vmand %vm1625, %vm1593
      %vm1658 = vmand %vm1626, %vm1594
      %vm1659 = vmand %vm1627, %vm1595
      %vm1660 = vmand %vm1628, %vm1596
      %vm1661 = vmand %vm1629, %vm1597
      %vm1662 = vmand %vm1630, %vm1598
      %vm1663 = vmand %vm1631, %vm1599
      %vm1664 = vmand %vm1632, %vm1600
      %vm1665 = vmand %vm1633, %vm1601
      %vm1666 = vmand %vm1634, %vm1602
      %vm1667 = vmand %vm1635, %vm1603
      %vm1668 = vmand %vm1636, %vm1604
      %vm1669 = vmand %vm1637, %vm1605
      %vm1670 = vmand %vm1638, %vm1606
      %vm1671 = vmand %vm1639, %vm1607
      %vm1672 = vmand %vm1640, %vm1608
      %vm1673 = vmand %vm1641, %vm1609
      %vm1674 = vmand %vm1642, %vm1610
      %vm1675 = vmand %vm1643, %vm1611
      %vm1676 = vmand %vm1644, %vm1612
      %v1677 = vadd.s32 %v1363, 16
      %v1678 = vadd.s32 %v1370, 16
      %v1679 = vadd.s32 %v1377, 16
      %v1680 = vadd.s32 %v1384, 16
      %v1681 = vadd.s32 %v1391, 16
      %v1682 = vadd.s32 %v1398, 16
      %v1683 = vadd.s32 %v1405, 16
      %v1684 = vadd.s32 %v1412, 16
      %v1685 = vadd.s32 %v1419, 16
      %v1686 = vadd.s32 %v1426, 16
      %v1687 = vadd.s32 %v1433, 16
      %v1688 = vadd.s32 %v1440, 16
      %v1689 = vadd.s32 %v1447, 16
      %v1690 = vadd.s32 %v1454, 16
      %v1691 = vadd.s32 %v1461, 16
      %v1692 = vadd.s32 %v1468, 16
      %v1693 = vadd.s32 %v1475, 16
      %v1694 = vadd.s32 %v1482, 16
      %v1695 = vadd.s32 %v1489, 16
      %v1696 = vadd.s32 %v1496, 16
      %v1697 = vadd.s32 %v1503, 16
      %v1698 = vadd.s32 %v1510, 16
      %v1699 = vadd.s32 %v1517, 16
      %v1700 = vadd.s32 %v1524, 16
      %v1701 = vadd.s32 %v1531, 16
      %v1702 = vadd.s32 %v1538, 16
      %v1703 = vadd.s32 %v1545, 16
      %v1704 = vadd.s32 %v1552, 16
      %v1705 = vadd.s32 %v1559, 16
      %v1706 = vadd.s32 %v1566, 16
      %v1707 = vadd.s32 %v1573, 16
      %v1708 = vadd.s32 %v1580, 16
      %v1709 = vsel %vm1645, %v1677, %v1363
      %v1710 = vsel %vm1646, %v1678, %v1370
      %v1711 = vsel %vm1647, %v1679, %v1377
      %v1712 = vsel %vm1648, %v1680, %v1384
      %v1713 = vsel %vm1649, %v1681, %v1391
      %v1714 = vsel %vm1650, %v1682, %v1398
      %v1715 = vsel %vm1651, %v1683, %v1405
      %v1716 = vsel %vm1652, %v1684, %v1412
      %v1717 = vsel %vm1653, %v1685, %v1419
      %v1718 = vsel %vm1654, %v1686, %v1426
      %v1719 = vsel %vm1655, %v1687, %v1433
      %v1720 = vsel %vm1656, %v1688, %v1440
      %v1721 = vsel %vm1657, %v1689, %v1447
      %v1722 = vsel %vm1658, %v1690, %v1454
      %v1723 = vsel %vm1659, %v1691, %v1461
      %v1724 = vsel %vm1660, %v1692, %v1468
      %v1725 = vsel %vm1661, %v1693, %v1475
      %v1726 = vsel %vm1662, %v1694, %v1482
      %v1727 = vsel %vm1663, %v1695, %v1489
      %v1728 = vsel %vm1664, %v1696, %v1496
      %v1729 = vsel %vm1665, %v1697, %v1503
      %v1730 = vsel %vm1666, %v1698, %v1510
      %v1731 = vsel %vm1667, %v1699, %v1517
      %v1732 = vsel %vm1668, %v1700, %v1524
      %v1733 = vsel %vm1669, %v1701, %v1531
      %v1734 = vsel %vm1670, %v1702, %v1538
      %v1735 = vsel %vm1671, %v1703, %v1545
      %v1736 = vsel %vm1672, %v1704, %v1552
      %v1737 = vsel %vm1673, %v1705, %v1559
      %v1738 = vsel %vm1674, %v1706, %v1566
      %v1739 = vsel %vm1675, %v1707, %v1573
      %v1740 = vsel %vm1676, %v1708, %v1580
      %vm1741 = vcmp.ne.s32.totalorder %v1709, 0
      %vm1742 = vcmp.ne.s32.totalorder %v1710, 0
      %vm1743 = vcmp.ne.s32.totalorder %v1711, 0
      %vm1744 = vcmp.ne.s32.totalorder %v1712, 0
      %vm1745 = vcmp.ne.s32.totalorder %v1713, 0
      %vm1746 = vcmp.ne.s32.totalorder %v1714, 0
      %vm1747 = vcmp.ne.s32.totalorder %v1715, 0
      %vm1748 = vcmp.ne.s32.totalorder %v1716, 0
      %vm1749 = vcmp.ne.s32.totalorder %v1717, 0
      %vm1750 = vcmp.ne.s32.totalorder %v1718, 0
      %vm1751 = vcmp.ne.s32.totalorder %v1719, 0
      %vm1752 = vcmp.ne.s32.totalorder %v1720, 0
      %vm1753 = vcmp.ne.s32.totalorder %v1721, 0
      %vm1754 = vcmp.ne.s32.totalorder %v1722, 0
      %vm1755 = vcmp.ne.s32.totalorder %v1723, 0
      %vm1756 = vcmp.ne.s32.totalorder %v1724, 0
      %vm1757 = vcmp.ne.s32.totalorder %v1725, 0
      %vm1758 = vcmp.ne.s32.totalorder %v1726, 0
      %vm1759 = vcmp.ne.s32.totalorder %v1727, 0
      %vm1760 = vcmp.ne.s32.totalorder %v1728, 0
      %vm1761 = vcmp.ne.s32.totalorder %v1729, 0
      %vm1762 = vcmp.ne.s32.totalorder %v1730, 0
      %vm1763 = vcmp.ne.s32.totalorder %v1731, 0
      %vm1764 = vcmp.ne.s32.totalorder %v1732, 0
      %vm1765 = vcmp.ne.s32.totalorder %v1733, 0
      %vm1766 = vcmp.ne.s32.totalorder %v1734, 0
      %vm1767 = vcmp.ne.s32.totalorder %v1735, 0
      %vm1768 = vcmp.ne.s32.totalorder %v1736, 0
      %vm1769 = vcmp.ne.s32.totalorder %v1737, 0
      %vm1770 = vcmp.ne.s32.totalorder %v1738, 0
      %vm1771 = vcmp.ne.s32.totalorder %v1739, 0
      %vm1772 = vcmp.ne.s32.totalorder %v1740, 0
      %vm1773 = vcmp.ne.s32.totalorder %v1709, 15
      %vm1774 = vcmp.ne.s32.totalorder %v1710, 15
      %vm1775 = vcmp.ne.s32.totalorder %v1711, 15
      %vm1776 = vcmp.ne.s32.totalorder %v1712, 15
      %vm1777 = vcmp.ne.s32.totalorder %v1713, 15
      %vm1778 = vcmp.ne.s32.totalorder %v1714, 15
      %vm1779 = vcmp.ne.s32.totalorder %v1715, 15
      %vm1780 = vcmp.ne.s32.totalorder %v1716, 15
      %vm1781 = vcmp.ne.s32.totalorder %v1717, 15
      %vm1782 = vcmp.ne.s32.totalorder %v1718, 15
      %vm1783 = vcmp.ne.s32.totalorder %v1719, 15
      %vm1784 = vcmp.ne.s32.totalorder %v1720, 15
      %vm1785 = vcmp.ne.s32.totalorder %v1721, 15
      %vm1786 = vcmp.ne.s32.totalorder %v1722, 15
      %vm1787 = vcmp.ne.s32.totalorder %v1723, 15
      %vm1788 = vcmp.ne.s32.totalorder %v1724, 15
      %vm1789 = vcmp.ne.s32.totalorder %v1725, 15
      %vm1790 = vcmp.ne.s32.totalorder %v1726, 15
      %vm1791 = vcmp.ne.s32.totalorder %v1727, 15
      %vm1792 = vcmp.ne.s32.totalorder %v1728, 15
      %vm1793 = vcmp.ne.s32.totalorder %v1729, 15
      %vm1794 = vcmp.ne.s32.totalorder %v1730, 15
      %vm1795 = vcmp.ne.s32.totalorder %v1731, 15
      %vm1796 = vcmp.ne.s32.totalorder %v1732, 15
      %vm1797 = vcmp.ne.s32.totalorder %v1733, 15
      %vm1798 = vcmp.ne.s32.totalorder %v1734, 15
      %vm1799 = vcmp.ne.s32.totalorder %v1735, 15
      %vm1800 = vcmp.ne.s32.totalorder %v1736, 15
      %vm1801 = vcmp.ne.s32.totalorder %v1737, 15
      %vm1802 = vcmp.ne.s32.totalorder %v1738, 15
      %vm1803 = vcmp.ne.s32.totalorder %v1739, 15
      %vm1804 = vcmp.ne.s32.totalorder %v1740, 15
      %v1805 = vrot.slane %v1292, 7
      %v1806 = vrot.slane %v1293, 7
      %v1807 = vrot.slane %v1294, 7
      %v1808 = vrot.slane %v1295, 7
      %v1809 = vrot.slane %v1296, 7
      %v1810 = vrot.slane %v1297, 7
      %v1811 = vrot.slane %v1298, 7
      %v1812 = vrot.slane %v1299, 7
      %v1813 = vrot.slane %v1300, 7
      %v1814 = vrot.slane %v1301, 7
      %v1815 = vrot.slane %v1302, 7
      %v1816 = vrot.slane %v1303, 7
      %v1817 = vrot.slane %v1304, 7
      %v1818 = vrot.slane %v1305, 7
      %v1819 = vrot.slane %v1306, 7
      %v1820 = vrot.slane %v1307, 7
      %v1821 = vrot.slane %v1308, 7
      %v1822 = vrot.slane %v1309, 7
      %v1823 = vrot.slane %v1310, 7
      %v1824 = vrot.slane %v1311, 7
      %v1825 = vrot.slane %v1312, 7
      %v1826 = vrot.slane %v1313, 7
      %v1827 = vrot.slane %v1314, 7
      %v1828 = vrot.slane %v1315, 7
      %v1829 = vrot.slane %v1316, 7
      %v1830 = vrot.slane %v1317, 7
      %v1831 = vrot.slane %v1318, 7
      %v1832 = vrot.slane %v1319, 7
      %v1833 = vrot.slane %v1320, 7
      %v1834 = vrot.slane %v1321, 7
      %v1835 = vrot.slane %v1322, 7
      %v1836 = vrot.slane %v1323, 7
      %vm1837 = vcmp.lt.s32.totalorder %v1325, 1
      %v1838 = vsel %vm1837, %v1835, %v1836
      %v1839 = vsel %vm1837, %v1834, %v1835
      %v1840 = vsel %vm1837, %v1833, %v1834
      %v1841 = vsel %vm1837, %v1832, %v1833
      %v1842 = vsel %vm1837, %v1831, %v1832
      %v1843 = vsel %vm1837, %v1830, %v1831
      %v1844 = vsel %vm1837, %v1829, %v1830
      %v1845 = vsel %vm1837, %v1828, %v1829
      %v1846 = vsel %vm1837, %v1827, %v1828
      %v1847 = vsel %vm1837, %v1826, %v1827
      %v1848 = vsel %vm1837, %v1825, %v1826
      %v1849 = vsel %vm1837, %v1824, %v1825
      %v1850 = vsel %vm1837, %v1823, %v1824
      %v1851 = vsel %vm1837, %v1822, %v1823
      %v1852 = vsel %vm1837, %v1821, %v1822
      %v1853 = vsel %vm1837, %v1820, %v1821
      %v1854 = vsel %vm1837, %v1819, %v1820
      %v1855 = vsel %vm1837, %v1818, %v1819
      %v1856 = vsel %vm1837, %v1817, %v1818
      %v1857 = vsel %vm1837, %v1816, %v1817
      %v1858 = vsel %vm1837, %v1815, %v1816
      %v1859 = vsel %vm1837, %v1814, %v1815
      %v1860 = vsel %vm1837, %v1813, %v1814
      %v1861 = vsel %vm1837, %v1812, %v1813
      %v1862 = vsel %vm1837, %v1811, %v1812
      %v1863 = vsel %vm1837, %v1810, %v1811
      %v1864 = vsel %vm1837, %v1809, %v1810
      %v1865 = vsel %vm1837, %v1808, %v1809
      %v1866 = vsel %vm1837, %v1807, %v1808
      %v1867 = vsel %vm1837, %v1806, %v1807
      %v1868 = vsel %vm1837, %v1805, %v1806
      %v1869 = vsel %vm1837, %v1836, %v1805
      %v1870 = vsel %vm1741, %v1869, 0.0
      %v1871 = vsel %vm1742, %v1868, 0.0
      %v1872 = vsel %vm1743, %v1867, 0.0
      %v1873 = vsel %vm1744, %v1866, 0.0
      %v1874 = vsel %vm1745, %v1865, 0.0
      %v1875 = vsel %vm1746, %v1864, 0.0
      %v1876 = vsel %vm1747, %v1863, 0.0
      %v1877 = vsel %vm1748, %v1862, 0.0
      %v1878 = vsel %vm1749, %v1861, 0.0
      %v1879 = vsel %vm1750, %v1860, 0.0
      %v1880 = vsel %vm1751, %v1859, 0.0
      %v1881 = vsel %vm1752, %v1858, 0.0
      %v1882 = vsel %vm1753, %v1857, 0.0
      %v1883 = vsel %vm1754, %v1856, 0.0
      %v1884 = vsel %vm1755, %v1855, 0.0
      %v1885 = vsel %vm1756, %v1854, 0.0
      %v1886 = vsel %vm1757, %v1853, 0.0
      %v1887 = vsel %vm1758, %v1852, 0.0
      %v1888 = vsel %vm1759, %v1851, 0.0
      %v1889 = vsel %vm1760, %v1850, 0.0
      %v1890 = vsel %vm1761, %v1849, 0.0
      %v1891 = vsel %vm1762, %v1848, 0.0
      %v1892 = vsel %vm1763, %v1847, 0.0
      %v1893 = vsel %vm1764, %v1846, 0.0
      %v1894 = vsel %vm1765, %v1845, 0.0
      %v1895 = vsel %vm1766, %v1844, 0.0
      %v1896 = vsel %vm1767, %v1843, 0.0
      %v1897 = vsel %vm1768, %v1842, 0.0
      %v1898 = vsel %vm1769, %v1841, 0.0
      %v1899 = vsel %vm1770, %v1840, 0.0
      %v1900 = vsel %vm1771, %v1839, 0.0
      %v1901 = vsel %vm1772, %v1838, 0.0
      %v1902 = vrot.slane %v1292, 1
      %v1903 = vrot.slane %v1293, 1
      %v1904 = vrot.slane %v1294, 1
      %v1905 = vrot.slane %v1295, 1
      %v1906 = vrot.slane %v1296, 1
      %v1907 = vrot.slane %v1297, 1
      %v1908 = vrot.slane %v1298, 1
      %v1909 = vrot.slane %v1299, 1
      %v1910 = vrot.slane %v1300, 1
      %v1911 = vrot.slane %v1301, 1
      %v1912 = vrot.slane %v1302, 1
      %v1913 = vrot.slane %v1303, 1
      %v1914 = vrot.slane %v1304, 1
      %v1915 = vrot.slane %v1305, 1
      %v1916 = vrot.slane %v1306, 1
      %v1917 = vrot.slane %v1307, 1
      %v1918 = vrot.slane %v1308, 1
      %v1919 = vrot.slane %v1309, 1
      %v1920 = vrot.slane %v1310, 1
      %v1921 = vrot.slane %v1311, 1
      %v1922 = vrot.slane %v1312, 1
      %v1923 = vrot.slane %v1313, 1
      %v1924 = vrot.slane %v1314, 1
      %v1925 = vrot.slane %v1315, 1
      %v1926 = vrot.slane %v1316, 1
      %v1927 = vrot.slane %v1317, 1
      %v1928 = vrot.slane %v1318, 1
      %v1929 = vrot.slane %v1319, 1
      %v1930 = vrot.slane %v1320, 1
      %v1931 = vrot.slane %v1321, 1
      %v1932 = vrot.slane %v1322, 1
      %v1933 = vrot.slane %v1323, 1
      %vm1934 = vcmp.lt.s32.totalorder %v1325, 7
      %v1935 = vsel %vm1934, %v1932, %v1933
      %v1936 = vsel %vm1934, %v1931, %v1932
      %v1937 = vsel %vm1934, %v1930, %v1931
      %v1938 = vsel %vm1934, %v1929, %v1930
      %v1939 = vsel %vm1934, %v1928, %v1929
      %v1940 = vsel %vm1934, %v1927, %v1928
      %v1941 = vsel %vm1934, %v1926, %v1927
      %v1942 = vsel %vm1934, %v1925, %v1926
      %v1943 = vsel %vm1934, %v1924, %v1925
      %v1944 = vsel %vm1934, %v1923, %v1924
      %v1945 = vsel %vm1934, %v1922, %v1923
      %v1946 = vsel %vm1934, %v1921, %v1922
      %v1947 = vsel %vm1934, %v1920, %v1921
      %v1948 = vsel %vm1934, %v1919, %v1920
      %v1949 = vsel %vm1934, %v1918, %v1919
      %v1950 = vsel %vm1934, %v1917, %v1918
      %v1951 = vsel %vm1934, %v1916, %v1917
      %v1952 = vsel %vm1934, %v1915, %v1916
      %v1953 = vsel %vm1934, %v1914, %v1915
      %v1954 = vsel %vm1934, %v1913, %v1914
      %v1955 = vsel %vm1934, %v1912, %v1913
      %v1956 = vsel %vm1934, %v1911, %v1912
      %v1957 = vsel %vm1934, %v1910, %v1911
      %v1958 = vsel %vm1934, %v1909, %v1910
      %v1959 = vsel %vm1934, %v1908, %v1909
      %v1960 = vsel %vm1934, %v1907, %v1908
      %v1961 = vsel %vm1934, %v1906, %v1907
      %v1962 = vsel %vm1934, %v1905, %v1906
      %v1963 = vsel %vm1934, %v1904, %v1905
      %v1964 = vsel %vm1934, %v1903, %v1904
      %v1965 = vsel %vm1934, %v1902, %v1903
      %v1966 = vsel %vm1934, %v1933, %v1902
      %v1967 = vsel %vm1773, %v1965, 0.0
      %v1968 = vsel %vm1774, %v1964, 0.0
      %v1969 = vsel %vm1775, %v1963, 0.0
      %v1970 = vsel %vm1776, %v1962, 0.0
      %v1971 = vsel %vm1777, %v1961, 0.0
      %v1972 = vsel %vm1778, %v1960, 0.0
      %v1973 = vsel %vm1779, %v1959, 0.0
      %v1974 = vsel %vm1780, %v1958, 0.0
      %v1975 = vsel %vm1781, %v1957, 0.0
      %v1976 = vsel %vm1782, %v1956, 0.0
      %v1977 = vsel %vm1783, %v1955, 0.0
      %v1978 = vsel %vm1784, %v1954, 0.0
      %v1979 = vsel %vm1785, %v1953, 0.0
      %v1980 = vsel %vm1786, %v1952, 0.0
      %v1981 = vsel %vm1787, %v1951, 0.0
      %v1982 = vsel %vm1788, %v1950, 0.0
      %v1983 = vsel %vm1789, %v1949, 0.0
      %v1984 = vsel %vm1790, %v1948, 0.0
      %v1985 = vsel %vm1791, %v1947, 0.0
      %v1986 = vsel %vm1792, %v1946, 0.0
      %v1987 = vsel %vm1793, %v1945, 0.0
      %v1988 = vsel %vm1794, %v1944, 0.0
      %v1989 = vsel %vm1795, %v1943, 0.0
      %v1990 = vsel %vm1796, %v1942, 0.0
      %v1991 = vsel %vm1797, %v1941, 0.0
      %v1992 = vsel %vm1798, %v1940, 0.0
      %v1993 = vsel %vm1799, %v1939, 0.0
      %v1994 = vsel %vm1800, %v1938, 0.0
      %v1995 = vsel %vm1801, %v1937, 0.0
      %v1996 = vsel %vm1802, %v1936, 0.0
      %v1997 = vsel %vm1803, %v1935, 0.0
      %v1998 = vsel %vm1804, %v1966, 0.0
      %2031 = vrot.lane.b32.xlu0 %v1292, 32
      %v2032 = vpop.permute.xlu0 %2031
      %2033 = vrot.lane.b32.xlu0 %v1293, 32
      %v2034 = vpop.permute.xlu0 %2033
      %2035 = vrot.lane.b32.xlu0 %v1294, 32
      %v2036 = vpop.permute.xlu0 %2035
      %2037 = vrot.lane.b32.xlu0 %v1295, 32
      %v2038 = vpop.permute.xlu0 %2037
      %2039 = vrot.lane.b32.xlu0 %v1296, 32
      %v2040 = vpop.permute.xlu0 %2039
      %2041 = vrot.lane.b32.xlu0 %v1297, 32
      %v2042 = vpop.permute.xlu0 %2041
      %2043 = vrot.lane.b32.xlu0 %v1298, 32
      %v2044 = vpop.permute.xlu0 %2043
      %2045 = vrot.lane.b32.xlu0 %v1299, 32
      %v2046 = vpop.permute.xlu0 %2045
      %2047 = vrot.lane.b32.xlu0 %v1300, 32
      %v2048 = vpop.permute.xlu0 %2047
      %2049 = vrot.lane.b32.xlu0 %v1301, 32
      %v2050 = vpop.permute.xlu0 %2049
      %2051 = vrot.lane.b32.xlu0 %v1302, 32
      %v2052 = vpop.permute.xlu0 %2051
      %2053 = vrot.lane.b32.xlu0 %v1303, 32
      %v2054 = vpop.permute.xlu0 %2053
      %2055 = vrot.lane.b32.xlu0 %v1304, 32
      %v2056 = vpop.permute.xlu0 %2055
      %2057 = vrot.lane.b32.xlu0 %v1305, 32
      %v2058 = vpop.permute.xlu0 %2057
      %2059 = vrot.lane.b32.xlu0 %v1306, 32
      %v2060 = vpop.permute.xlu0 %2059
      %2061 = vrot.lane.b32.xlu0 %v1307, 32
      %v2062 = vpop.permute.xlu0 %2061
      %2063 = vrot.lane.b32.xlu0 %v1308, 32
      %v2064 = vpop.permute.xlu0 %2063
      %2065 = vrot.lane.b32.xlu0 %v1309, 32
      %v2066 = vpop.permute.xlu0 %2065
      %2067 = vrot.lane.b32.xlu0 %v1310, 32
      %v2068 = vpop.permute.xlu0 %2067
      %2069 = vrot.lane.b32.xlu0 %v1311, 32
      %v2070 = vpop.permute.xlu0 %2069
      %2071 = vrot.lane.b32.xlu0 %v1312, 32
      %v2072 = vpop.permute.xlu0 %2071
      %2073 = vrot.lane.b32.xlu0 %v1313, 32
      %v2074 = vpop.permute.xlu0 %2073
      %2075 = vrot.lane.b32.xlu0 %v1314, 32
      %v2076 = vpop.permute.xlu0 %2075
      %2077 = vrot.lane.b32.xlu0 %v1315, 32
      %v2078 = vpop.permute.xlu0 %2077
      %2079 = vrot.lane.b32.xlu0 %v1316, 32
      %v2080 = vpop.permute.xlu0 %2079
      %2081 = vrot.lane.b32.xlu0 %v1317, 32
      %v2082 = vpop.permute.xlu0 %2081
      %2083 = vrot.lane.b32.xlu0 %v1318, 32
      %v2084 = vpop.permute.xlu0 %2083
      %2085 = vrot.lane.b32.xlu0 %v1319, 32
      %v2086 = vpop.permute.xlu0 %2085
      %2087 = vrot.lane.b32.xlu0 %v1320, 32
      %v2088 = vpop.permute.xlu0 %2087
      %2089 = vrot.lane.b32.xlu0 %v1321, 32
      %v2090 = vpop.permute.xlu0 %2089
      %2091 = vrot.lane.b32.xlu0 %v1322, 32
      %v2092 = vpop.permute.xlu0 %2091
      %2093 = vrot.lane.b32.xlu0 %v1323, 32
      %v2094 = vpop.permute.xlu0 %2093
      %2159 = vrot.lane.b32.xlu0 %v1967, 64
      %v2160 = vpop.permute.xlu0 %2159
      %2161 = vrot.lane.b32.xlu0 %v1968, 64
      %v2162 = vpop.permute.xlu0 %2161
      %2163 = vrot.lane.b32.xlu0 %v1969, 64
      %v2164 = vpop.permute.xlu0 %2163
      %2165 = vrot.lane.b32.xlu0 %v1970, 64
      %v2166 = vpop.permute.xlu0 %2165
      %2167 = vrot.lane.b32.xlu0 %v1971, 64
      %v2168 = vpop.permute.xlu0 %2167
      %2169 = vrot.lane.b32.xlu0 %v1972, 64
      %v2170 = vpop.permute.xlu0 %2169
      %2171 = vrot.lane.b32.xlu0 %v1973, 64
      %v2172 = vpop.permute.xlu0 %2171
      %2173 = vrot.lane.b32.xlu0 %v1974, 64
      %v2174 = vpop.permute.xlu0 %2173
      %2175 = vrot.lane.b32.xlu0 %v1975, 64
      %v2176 = vpop.permute.xlu0 %2175
      %2177 = vrot.lane.b32.xlu0 %v1976, 64
      %v2178 = vpop.permute.xlu0 %2177
      %2179 = vrot.lane.b32.xlu0 %v1977, 64
      %v2180 = vpop.permute.xlu0 %2179
      %2181 = vrot.lane.b32.xlu0 %v1978, 64
      %v2182 = vpop.permute.xlu0 %2181
      %2183 = vrot.lane.b32.xlu0 %v1979, 64
      %v2184 = vpop.permute.xlu0 %2183
      %2185 = vrot.lane.b32.xlu0 %v1980, 64
      %v2186 = vpop.permute.xlu0 %2185
      %2187 = vrot.lane.b32.xlu0 %v1981, 64
      %v2188 = vpop.permute.xlu0 %2187
      %2189 = vrot.lane.b32.xlu0 %v1982, 64
      %v2190 = vpop.permute.xlu0 %2189
      %2191 = vrot.lane.b32.xlu0 %v1983, 64
      %v2192 = vpop.permute.xlu0 %2191
      %2193 = vrot.lane.b32.xlu0 %v1984, 64
      %v2194 = vpop.permute.xlu0 %2193
      %2195 = vrot.lane.b32.xlu0 %v1985, 64
      %v2196 = vpop.permute.xlu0 %2195
      %2197 = vrot.lane.b32.xlu0 %v1986, 64
      %v2198 = vpop.permute.xlu0 %2197
      %2199 = vrot.lane.b32.xlu0 %v1987, 64
      %v2200 = vpop.permute.xlu0 %2199
      %2201 = vrot.lane.b32.xlu0 %v1988, 64
      %v2202 = vpop.permute.xlu0 %2201
      %2203 = vrot.lane.b32.xlu0 %v1989, 64
      %v2204 = vpop.permute.xlu0 %2203
      %2205 = vrot.lane.b32.xlu0 %v1990, 64
      %v2206 = vpop.permute.xlu0 %2205
      %2207 = vrot.lane.b32.xlu0 %v1991, 64
      %v2208 = vpop.permute.xlu0 %2207
      %2209 = vrot.lane.b32.xlu0 %v1992, 64
      %v2210 = vpop.permute.xlu0 %2209
      %2211 = vrot.lane.b32.xlu0 %v1993, 64
      %v2212 = vpop.permute.xlu0 %2211
      %2213 = vrot.lane.b32.xlu0 %v1994, 64
      %v2214 = vpop.permute.xlu0 %2213
      %2215 = vrot.lane.b32.xlu0 %v1995, 64
      %v2216 = vpop.permute.xlu0 %2215
      %2217 = vrot.lane.b32.xlu0 %v1996, 64
      %v2218 = vpop.permute.xlu0 %2217
      %2219 = vrot.lane.b32.xlu0 %v1997, 64
      %v2220 = vpop.permute.xlu0 %2219
      %2221 = vrot.lane.b32.xlu0 %v1998, 64
      %v2222 = vpop.permute.xlu0 %2221
      %v2255 = vsel %vm635, %v1870, %v2032
      %v2256 = vsel %vm635, %v1871, %v2034
      %v2257 = vsel %vm635, %v1872, %v2036
      %v2258 = vsel %vm635, %v1873, %v2038
      %v2259 = vsel %vm635, %v1874, %v2040
      %v2260 = vsel %vm635, %v1875, %v2042
      %v2261 = vsel %vm635, %v1876, %v2044
      %v2262 = vsel %vm635, %v1877, %v2046
      %v2263 = vsel %vm635, %v1878, %v2048
      %v2264 = vsel %vm635, %v1879, %v2050
      %v2265 = vsel %vm635, %v1880, %v2052
      %v2266 = vsel %vm635, %v1881, %v2054
      %v2267 = vsel %vm635, %v1882, %v2056
      %v2268 = vsel %vm635, %v1883, %v2058
      %v2269 = vsel %vm635, %v1884, %v2060
      %v2270 = vsel %vm635, %v1885, %v2062
      %v2271 = vsel %vm635, %v1886, %v2064
      %v2272 = vsel %vm635, %v1887, %v2066
      %v2273 = vsel %vm635, %v1888, %v2068
      %v2274 = vsel %vm635, %v1889, %v2070
      %v2275 = vsel %vm635, %v1890, %v2072
      %v2276 = vsel %vm635, %v1891, %v2074
      %v2277 = vsel %vm635, %v1892, %v2076
      %v2278 = vsel %vm635, %v1893, %v2078
      %v2279 = vsel %vm635, %v1894, %v2080
      %v2280 = vsel %vm635, %v1895, %v2082
      %v2281 = vsel %vm635, %v1896, %v2084
      %v2282 = vsel %vm635, %v1897, %v2086
      %v2283 = vsel %vm635, %v1898, %v2088
      %v2284 = vsel %vm635, %v1899, %v2090
      %v2285 = vsel %vm635, %v1900, %v2092
      %v2286 = vsel %vm635, %v1901, %v2094
      %vm2287 = vcmask 523264
      %v2288 = vsel %vm2287, %v2255, %v2160
      %v2289 = vsel %vm2287, %v2256, %v2162
      %v2290 = vsel %vm2287, %v2257, %v2164
      %v2291 = vsel %vm2287, %v2258, %v2166
      %v2292 = vsel %vm2287, %v2259, %v2168
      %v2293 = vsel %vm2287, %v2260, %v2170
      %v2294 = vsel %vm2287, %v2261, %v2172
      %v2295 = vsel %vm2287, %v2262, %v2174
      %v2296 = vsel %vm2287, %v2263, %v2176
      %v2297 = vsel %vm2287, %v2264, %v2178
      %v2298 = vsel %vm2287, %v2265, %v2180
      %v2299 = vsel %vm2287, %v2266, %v2182
      %v2300 = vsel %vm2287, %v2267, %v2184
      %v2301 = vsel %vm2287, %v2268, %v2186
      %v2302 = vsel %vm2287, %v2269, %v2188
      %v2303 = vsel %vm2287, %v2270, %v2190
      %v2304 = vsel %vm2287, %v2271, %v2192
      %v2305 = vsel %vm2287, %v2272, %v2194
      %v2306 = vsel %vm2287, %v2273, %v2196
      %v2307 = vsel %vm2287, %v2274, %v2198
      %v2308 = vsel %vm2287, %v2275, %v2200
      %v2309 = vsel %vm2287, %v2276, %v2202
      %v2310 = vsel %vm2287, %v2277, %v2204
      %v2311 = vsel %vm2287, %v2278, %v2206
      %v2312 = vsel %vm2287, %v2279, %v2208
      %v2313 = vsel %vm2287, %v2280, %v2210
      %v2314 = vsel %vm2287, %v2281, %v2212
      %v2315 = vsel %vm2287, %v2282, %v2214
      %v2316 = vsel %vm2287, %v2283, %v2216
      %v2317 = vsel %vm2287, %v2284, %v2218
      %v2318 = vsel %vm2287, %v2285, %v2220
      %v2319 = vsel %vm2287, %v2286, %v2222
      %v2320 = vpack.c.bf16 %v2289, %v2288
      %v2321 = vpack.c.bf16 %v2291, %v2290
      %v2322 = vpack.c.bf16 %v2293, %v2292
      %v2323 = vpack.c.bf16 %v2295, %v2294
      %v2324 = vpack.c.bf16 %v2297, %v2296
      %v2325 = vpack.c.bf16 %v2299, %v2298
      %v2326 = vpack.c.bf16 %v2301, %v2300
      %v2327 = vpack.c.bf16 %v2303, %v2302
      %v2328 = vpack.c.bf16 %v2305, %v2304
      %v2329 = vpack.c.bf16 %v2307, %v2306
      %v2330 = vpack.c.bf16 %v2309, %v2308
      %v2331 = vpack.c.bf16 %v2311, %v2310
      %v2332 = vpack.c.bf16 %v2313, %v2312
      %v2333 = vpack.c.bf16 %v2315, %v2314
      %v2334 = vpack.c.bf16 %v2317, %v2316
      %v2335 = vpack.c.bf16 %v2319, %v2318
      %v2336 = vld [vmem:[%s6] sm:$0xf]
      %v2337 = vld [vmem:[%s6 + $0x4] sm:$0xf]
      %v2338 = vld [vmem:[%s6 + $0x8] sm:$0xf]
      %v2339 = vld [vmem:[%s6 + $0xc] sm:$0xf]
      %v2340 = vld [vmem:[%s6 + $0x10] sm:$0xf]
      %v2341 = vld [vmem:[%s6 + $0x14] sm:$0xf]
      %v2342 = vld [vmem:[%s6 + $0x18] sm:$0xf]
      %v2343 = vld [vmem:[%s6 + $0x1c] sm:$0xf]
      %v2344 = vld [vmem:[%s6 + $0x20] sm:$0xf]
      %v2345 = vld [vmem:[%s6 + $0x24] sm:$0xf]
      %v2346 = vld [vmem:[%s6 + $0x28] sm:$0xf]
      %v2347 = vld [vmem:[%s6 + $0x2c] sm:$0xf]
      %v2348 = vld [vmem:[%s7] sm:$0x1]
      %v2350 = vlaneseq
      %v2351 = vshrl.u32 %v2350, 7
      %v2352 = vsub.s32 0, %v2351
      %v2353 = vrot.slane %v2348, %v2352
      %v2367 = vunpack.c.l.b16 %v2336
      %v2368 = vunpack.c.l.b16 %v2337
      %v2369 = vunpack.c.l.b16 %v2338
      %v2370 = vunpack.c.l.b16 %v2339
      %v2371 = vunpack.c.l.b16 %v2340
      %v2372 = vunpack.c.l.b16 %v2341
      %v2373 = vunpack.c.l.b16 %v2342
      %v2374 = vunpack.c.l.b16 %v2343
      %v2375 = vunpack.c.l.b16 %v2344
      %v2376 = vunpack.c.l.b16 %v2345
      %v2377 = vunpack.c.l.b16 %v2346
      %v2378 = vunpack.c.l.b16 %v2347
      %v2379 = vpack.c.b16 %v2368, %v2367
      %v2380 = vpack.c.b16 %v2370, %v2369
      %v2381 = vpack.c.b16 %v2372, %v2371
      %v2382 = vpack.c.b16 %v2374, %v2373
      %v2383 = vpack.c.b16 %v2376, %v2375
      %v2384 = vpack.c.b16 %v2378, %v2377
      %vm2391 = vcmask 785408
      %v2393 = vsel %vm2391, %v2320, 0
      %v2396 = vsel %vm2391, %v2321, 0
      %v2399 = vsel %vm2391, %v2322, 0
      %v2402 = vsel %vm2391, %v2323, 0
      %v2405 = vsel %vm2391, %v2324, 0
      %v2408 = vsel %vm2391, %v2325, 0
      %v2411 = vsel %vm2391, %v2326, 0
      %v2414 = vsel %vm2391, %v2327, 0
      %v2417 = vsel %vm2391, %v2328, 0
      %v2420 = vsel %vm2391, %v2329, 0
      %v2423 = vsel %vm2391, %v2330, 0
      %v2426 = vsel %vm2391, %v2331, 0
      %v2429 = vsel %vm2391, %v2332, 0
      %v2432 = vsel %vm2391, %v2333, 0
      %v2435 = vsel %vm2391, %v2334, 0
      %v2438 = vsel %vm2391, %v2335, 0
      %2440 = vmatprep.subr.bf16.mxu0 0
      %2441 = vmatpush1.bf16.msra.mxu0 %v2379
      %2442 = vmatprep.subr.bf16.mxu0 0
      %2443 = vmatpush1.bf16.msra.mxu0 %v2380
      %2444 = vmatprep.subr.bf16.mxu0 0
      %2445 = vmatpush1.bf16.msra.mxu0 %v2381
      %2446 = vmatprep.subr.bf16.mxu0 0
      %2447 = vmatpush1.bf16.msra.mxu0 %v2382
      %2448 = vmatprep.subr.bf16.mxu0 0
      %2449 = vmatpush1.bf16.msra.mxu0 %v2383
      %2450 = vmatprep.subr.bf16.mxu0 0
      %2451 = vmatpush1.bf16.msra.mxu0 %v2384
      %2452 = vmatprep.subr.bf16.mxu0 0
      %2453 = vmatpush1.bf16.msra.mxu0 0
      %2454 = vmatprep.subr.bf16.mxu0 0
      %2455 = vmatpush1.bf16.msra.mxu0 0
      %2456 = vmatprep.subr.bf16.mxu0 0
      %2457 = vmatpush1.bf16.msra.mxu0 0
      %2458 = vmatprep.subr.bf16.mxu0 0
      %2459 = vmatpush1.bf16.msra.mxu0 0
      %2460 = vmatprep.subr.bf16.mxu0 0
      %2461 = vmatpush1.bf16.msra.mxu0 0
      %2462 = vmatprep.subr.bf16.mxu0 0
      %2463 = vmatpush1.bf16.msra.mxu0 0
      %2464 = vmatprep.subr.bf16.mxu0 0
      %2465 = vmatpush1.bf16.msra.mxu0 0
      %2466 = vmatprep.subr.bf16.mxu0 0
      %2467 = vmatpush1.bf16.msra.mxu0 0
      %2468 = vmatprep.subr.bf16.mxu0 0
      %2469 = vmatpush1.bf16.msra.mxu0 0
      %2470 = vmatprep.subr.bf16.mxu0 0
      %2471 = vmatpush1.bf16.msra.mxu0 0
      %2472 = vmatprep.mubr.bf16.mxu0 0
      %2473 = vmatmul.mubr.bf16.gmra.mrb[0].mxu0 %v2393
      %v2474 = vpop.f32.mrb[0].mxu0
      %v2475 = vadd.f32 %v2353, %v2474
      %v2476 = vpop.f32.mrb[0].mxu0
      %v2477 = vpop.f32.mrb[0].mxu0
      %v2478 = vadd.f32 %v2353, %v2477
      %v2479 = vpop.f32.mrb[0].mxu0
      %2480 = vmatprep.mubr.bf16.mxu0 0
      %2481 = vmatmul.mubr.bf16.gmra.mrb[0].mxu0 %v2396
      %v2482 = vpop.f32.mrb[0].mxu0
      %v2483 = vadd.f32 %v2353, %v2482
      %v2484 = vpop.f32.mrb[0].mxu0
      %v2485 = vpop.f32.mrb[0].mxu0
      %v2486 = vadd.f32 %v2353, %v2485
      %v2487 = vpop.f32.mrb[0].mxu0
      %2488 = vmatprep.mubr.bf16.mxu0 0
      %2489 = vmatmul.mubr.bf16.gmra.mrb[0].mxu0 %v2399
      %v2490 = vpop.f32.mrb[0].mxu0
      %v2491 = vadd.f32 %v2353, %v2490
      %v2492 = vpop.f32.mrb[0].mxu0
      %v2493 = vpop.f32.mrb[0].mxu0
      %v2494 = vadd.f32 %v2353, %v2493
      %v2495 = vpop.f32.mrb[0].mxu0
      %2496 = vmatprep.mubr.bf16.mxu0 0
      %2497 = vmatmul.mubr.bf16.gmra.mrb[0].mxu0 %v2402
      %v2498 = vpop.f32.mrb[0].mxu0
      %v2499 = vadd.f32 %v2353, %v2498
      %v2500 = vpop.f32.mrb[0].mxu0
      %v2501 = vpop.f32.mrb[0].mxu0
      %v2502 = vadd.f32 %v2353, %v2501
      %v2503 = vpop.f32.mrb[0].mxu0
      %2504 = vmatprep.mubr.bf16.mxu0 0
      %2505 = vmatmul.mubr.bf16.gmra.mrb[0].mxu0 %v2405
      %v2506 = vpop.f32.mrb[0].mxu0
      %v2507 = vadd.f32 %v2353, %v2506
      %v2508 = vpop.f32.mrb[0].mxu0
      %v2509 = vpop.f32.mrb[0].mxu0
      %v2510 = vadd.f32 %v2353, %v2509
      %v2511 = vpop.f32.mrb[0].mxu0
      %2512 = vmatprep.mubr.bf16.mxu0 0
      %2513 = vmatmul.mubr.bf16.gmra.mrb[0].mxu0 %v2408
      %v2514 = vpop.f32.mrb[0].mxu0
      %v2515 = vadd.f32 %v2353, %v2514
      %v2516 = vpop.f32.mrb[0].mxu0
      %v2517 = vpop.f32.mrb[0].mxu0
      %v2518 = vadd.f32 %v2353, %v2517
      %v2519 = vpop.f32.mrb[0].mxu0
      %2520 = vmatprep.mubr.bf16.mxu0 0
      %2521 = vmatmul.mubr.bf16.gmra.mrb[0].mxu0 %v2411
      %v2522 = vpop.f32.mrb[0].mxu0
      %v2523 = vadd.f32 %v2353, %v2522
      %v2524 = vpop.f32.mrb[0].mxu0
      %v2525 = vpop.f32.mrb[0].mxu0
      %v2526 = vadd.f32 %v2353, %v2525
      %v2527 = vpop.f32.mrb[0].mxu0
      %2528 = vmatprep.mubr.bf16.mxu0 0
      %2529 = vmatmul.mubr.bf16.gmra.mrb[0].mxu0 %v2414
      %v2530 = vpop.f32.mrb[0].mxu0
      %v2531 = vadd.f32 %v2353, %v2530
      %v2532 = vpop.f32.mrb[0].mxu0
      %v2533 = vpop.f32.mrb[0].mxu0
      %v2534 = vadd.f32 %v2353, %v2533
      %v2535 = vpop.f32.mrb[0].mxu0
      %2536 = vmatprep.mubr.bf16.mxu0 0
      %2537 = vmatmul.mubr.bf16.gmra.mrb[0].mxu0 %v2417
      %v2538 = vpop.f32.mrb[0].mxu0
      %v2539 = vadd.f32 %v2353, %v2538
      %v2540 = vpop.f32.mrb[0].mxu0
      %v2541 = vpop.f32.mrb[0].mxu0
      %v2542 = vadd.f32 %v2353, %v2541
      %v2543 = vpop.f32.mrb[0].mxu0
      %2544 = vmatprep.mubr.bf16.mxu0 0
      %2545 = vmatmul.mubr.bf16.gmra.mrb[0].mxu0 %v2420
      %v2546 = vpop.f32.mrb[0].mxu0
      %v2547 = vadd.f32 %v2353, %v2546
      %v2548 = vpop.f32.mrb[0].mxu0
      %v2549 = vpop.f32.mrb[0].mxu0
      %v2550 = vadd.f32 %v2353, %v2549
      %v2551 = vpop.f32.mrb[0].mxu0
      %2552 = vmatprep.mubr.bf16.mxu0 0
      %2553 = vmatmul.mubr.bf16.gmra.mrb[0].mxu0 %v2423
      %v2554 = vpop.f32.mrb[0].mxu0
      %v2555 = vadd.f32 %v2353, %v2554
      %v2556 = vpop.f32.mrb[0].mxu0
      %v2557 = vpop.f32.mrb[0].mxu0
      %v2558 = vadd.f32 %v2353, %v2557
      %v2559 = vpop.f32.mrb[0].mxu0
      %2560 = vmatprep.mubr.bf16.mxu0 0
      %2561 = vmatmul.mubr.bf16.gmra.mrb[0].mxu0 %v2426
      %v2562 = vpop.f32.mrb[0].mxu0
      %v2563 = vadd.f32 %v2353, %v2562
      %v2564 = vpop.f32.mrb[0].mxu0
      %v2565 = vpop.f32.mrb[0].mxu0
      %v2566 = vadd.f32 %v2353, %v2565
      %v2567 = vpop.f32.mrb[0].mxu0
      %2568 = vmatprep.mubr.bf16.mxu0 0
      %2569 = vmatmul.mubr.bf16.gmra.mrb[0].mxu0 %v2429
      %v2570 = vpop.f32.mrb[0].mxu0
      %v2571 = vadd.f32 %v2353, %v2570
      %v2572 = vpop.f32.mrb[0].mxu0
      %v2573 = vpop.f32.mrb[0].mxu0
      %v2574 = vadd.f32 %v2353, %v2573
      %v2575 = vpop.f32.mrb[0].mxu0
      %2576 = vmatprep.mubr.bf16.mxu0 0
      %2577 = vmatmul.mubr.bf16.gmra.mrb[0].mxu0 %v2432
      %v2578 = vpop.f32.mrb[0].mxu0
      %v2579 = vadd.f32 %v2353, %v2578
      %v2580 = vpop.f32.mrb[0].mxu0
      %v2581 = vpop.f32.mrb[0].mxu0
      %v2582 = vadd.f32 %v2353, %v2581
      %v2583 = vpop.f32.mrb[0].mxu0
      %2584 = vmatprep.mubr.bf16.mxu0 0
      %2585 = vmatmul.mubr.bf16.gmra.mrb[0].mxu0 %v2435
      %v2586 = vpop.f32.mrb[0].mxu0
      %v2587 = vadd.f32 %v2353, %v2586
      %v2588 = vpop.f32.mrb[0].mxu0
      %v2589 = vpop.f32.mrb[0].mxu0
      %v2590 = vadd.f32 %v2353, %v2589
      %v2591 = vpop.f32.mrb[0].mxu0
      %2592 = vmatprep.mubr.bf16.mxu0 0
      %2593 = vmatmul.mubr.bf16.gmra.mrb[0].mxu0 %v2438
      %v2594 = vpop.f32.mrb[0].mxu0
      %v2595 = vadd.f32 %v2353, %v2594
      %v2596 = vpop.f32.mrb[0].mxu0
      %v2597 = vpop.f32.mrb[0].mxu0
      %v2598 = vadd.f32 %v2353, %v2597
      %v2599 = vpop.f32.mrb[0].mxu0
      %2600 = vdwg.mxu0
      %v2601 = vmax.f32 %v2475, 0.0
      %v2602 = vmax.f32 %v2478, 0.0
      %v2603 = vmax.f32 %v2483, 0.0
      %v2604 = vmax.f32 %v2486, 0.0
      %v2605 = vmax.f32 %v2491, 0.0
      %v2606 = vmax.f32 %v2494, 0.0
      %v2607 = vmax.f32 %v2499, 0.0
      %v2608 = vmax.f32 %v2502, 0.0
      %v2609 = vmax.f32 %v2507, 0.0
      %v2610 = vmax.f32 %v2510, 0.0
      %v2611 = vmax.f32 %v2515, 0.0
      %v2612 = vmax.f32 %v2518, 0.0
      %v2613 = vmax.f32 %v2523, 0.0
      %v2614 = vmax.f32 %v2526, 0.0
      %v2615 = vmax.f32 %v2531, 0.0
      %v2616 = vmax.f32 %v2534, 0.0
      %v2617 = vmax.f32 %v2539, 0.0
      %v2618 = vmax.f32 %v2542, 0.0
      %v2619 = vmax.f32 %v2547, 0.0
      %v2620 = vmax.f32 %v2550, 0.0
      %v2621 = vmax.f32 %v2555, 0.0
      %v2622 = vmax.f32 %v2558, 0.0
      %v2623 = vmax.f32 %v2563, 0.0
      %v2624 = vmax.f32 %v2566, 0.0
      %v2625 = vmax.f32 %v2571, 0.0
      %v2626 = vmax.f32 %v2574, 0.0
      %v2627 = vmax.f32 %v2579, 0.0
      %v2628 = vmax.f32 %v2582, 0.0
      %v2629 = vmax.f32 %v2587, 0.0
      %v2630 = vmax.f32 %v2590, 0.0
      %v2631 = vmax.f32 %v2595, 0.0
      %v2632 = vmax.f32 %v2598, 0.0
      %v2633 = vrot.slane %v2601, 7
      %v2634 = vrot.slane %v2602, 7
      %v2635 = vrot.slane %v2603, 7
      %v2636 = vrot.slane %v2604, 7
      %v2637 = vrot.slane %v2605, 7
      %v2638 = vrot.slane %v2606, 7
      %v2639 = vrot.slane %v2607, 7
      %v2640 = vrot.slane %v2608, 7
      %v2641 = vrot.slane %v2609, 7
      %v2642 = vrot.slane %v2610, 7
      %v2643 = vrot.slane %v2611, 7
      %v2644 = vrot.slane %v2612, 7
      %v2645 = vrot.slane %v2613, 7
      %v2646 = vrot.slane %v2614, 7
      %v2647 = vrot.slane %v2615, 7
      %v2648 = vrot.slane %v2616, 7
      %v2649 = vrot.slane %v2617, 7
      %v2650 = vrot.slane %v2618, 7
      %v2651 = vrot.slane %v2619, 7
      %v2652 = vrot.slane %v2620, 7
      %v2653 = vrot.slane %v2621, 7
      %v2654 = vrot.slane %v2622, 7
      %v2655 = vrot.slane %v2623, 7
      %v2656 = vrot.slane %v2624, 7
      %v2657 = vrot.slane %v2625, 7
      %v2658 = vrot.slane %v2626, 7
      %v2659 = vrot.slane %v2627, 7
      %v2660 = vrot.slane %v2628, 7
      %v2661 = vrot.slane %v2629, 7
      %v2662 = vrot.slane %v2630, 7
      %v2663 = vrot.slane %v2631, 7
      %v2664 = vrot.slane %v2632, 7
      %v2665 = vsel %vm1837, %v2663, %v2664
      %v2666 = vsel %vm1837, %v2662, %v2663
      %v2667 = vsel %vm1837, %v2661, %v2662
      %v2668 = vsel %vm1837, %v2660, %v2661
      %v2669 = vsel %vm1837, %v2659, %v2660
      %v2670 = vsel %vm1837, %v2658, %v2659
      %v2671 = vsel %vm1837, %v2657, %v2658
      %v2672 = vsel %vm1837, %v2656, %v2657
      %v2673 = vsel %vm1837, %v2655, %v2656
      %v2674 = vsel %vm1837, %v2654, %v2655
      %v2675 = vsel %vm1837, %v2653, %v2654
      %v2676 = vsel %vm1837, %v2652, %v2653
      %v2677 = vsel %vm1837, %v2651, %v2652
      %v2678 = vsel %vm1837, %v2650, %v2651
      %v2679 = vsel %vm1837, %v2649, %v2650
      %v2680 = vsel %vm1837, %v2648, %v2649
      %v2681 = vsel %vm1837, %v2647, %v2648
      %v2682 = vsel %vm1837, %v2646, %v2647
      %v2683 = vsel %vm1837, %v2645, %v2646
      %v2684 = vsel %vm1837, %v2644, %v2645
      %v2685 = vsel %vm1837, %v2643, %v2644
      %v2686 = vsel %vm1837, %v2642, %v2643
      %v2687 = vsel %vm1837, %v2641, %v2642
      %v2688 = vsel %vm1837, %v2640, %v2641
      %v2689 = vsel %vm1837, %v2639, %v2640
      %v2690 = vsel %vm1837, %v2638, %v2639
      %v2691 = vsel %vm1837, %v2637, %v2638
      %v2692 = vsel %vm1837, %v2636, %v2637
      %v2693 = vsel %vm1837, %v2635, %v2636
      %v2694 = vsel %vm1837, %v2634, %v2635
      %v2695 = vsel %vm1837, %v2633, %v2634
      %v2696 = vsel %vm1837, %v2664, %v2633
      %v2697 = vsel %vm1741, %v2696, 0.0
      %v2698 = vsel %vm1742, %v2695, 0.0
      %v2699 = vsel %vm1743, %v2694, 0.0
      %v2700 = vsel %vm1744, %v2693, 0.0
      %v2701 = vsel %vm1745, %v2692, 0.0
      %v2702 = vsel %vm1746, %v2691, 0.0
      %v2703 = vsel %vm1747, %v2690, 0.0
      %v2704 = vsel %vm1748, %v2689, 0.0
      %v2705 = vsel %vm1749, %v2688, 0.0
      %v2706 = vsel %vm1750, %v2687, 0.0
      %v2707 = vsel %vm1751, %v2686, 0.0
      %v2708 = vsel %vm1752, %v2685, 0.0
      %v2709 = vsel %vm1753, %v2684, 0.0
      %v2710 = vsel %vm1754, %v2683, 0.0
      %v2711 = vsel %vm1755, %v2682, 0.0
      %v2712 = vsel %vm1756, %v2681, 0.0
      %v2713 = vsel %vm1757, %v2680, 0.0
      %v2714 = vsel %vm1758, %v2679, 0.0
      %v2715 = vsel %vm1759, %v2678, 0.0
      %v2716 = vsel %vm1760, %v2677, 0.0
      %v2717 = vsel %vm1761, %v2676, 0.0
      %v2718 = vsel %vm1762, %v2675, 0.0
      %v2719 = vsel %vm1763, %v2674, 0.0
      %v2720 = vsel %vm1764, %v2673, 0.0
      %v2721 = vsel %vm1765, %v2672, 0.0
      %v2722 = vsel %vm1766, %v2671, 0.0
      %v2723 = vsel %vm1767, %v2670, 0.0
      %v2724 = vsel %vm1768, %v2669, 0.0
      %v2725 = vsel %vm1769, %v2668, 0.0
      %v2726 = vsel %vm1770, %v2667, 0.0
      %v2727 = vsel %vm1771, %v2666, 0.0
      %v2728 = vsel %vm1772, %v2665, 0.0
      %v2729 = vrot.slane %v2601, 1
      %v2730 = vrot.slane %v2602, 1
      %v2731 = vrot.slane %v2603, 1
      %v2732 = vrot.slane %v2604, 1
      %v2733 = vrot.slane %v2605, 1
      %v2734 = vrot.slane %v2606, 1
      %v2735 = vrot.slane %v2607, 1
      %v2736 = vrot.slane %v2608, 1
      %v2737 = vrot.slane %v2609, 1
      %v2738 = vrot.slane %v2610, 1
      %v2739 = vrot.slane %v2611, 1
      %v2740 = vrot.slane %v2612, 1
      %v2741 = vrot.slane %v2613, 1
      %v2742 = vrot.slane %v2614, 1
      %v2743 = vrot.slane %v2615, 1
      %v2744 = vrot.slane %v2616, 1
      %v2745 = vrot.slane %v2617, 1
      %v2746 = vrot.slane %v2618, 1
      %v2747 = vrot.slane %v2619, 1
      %v2748 = vrot.slane %v2620, 1
      %v2749 = vrot.slane %v2621, 1
      %v2750 = vrot.slane %v2622, 1
      %v2751 = vrot.slane %v2623, 1
      %v2752 = vrot.slane %v2624, 1
      %v2753 = vrot.slane %v2625, 1
      %v2754 = vrot.slane %v2626, 1
      %v2755 = vrot.slane %v2627, 1
      %v2756 = vrot.slane %v2628, 1
      %v2757 = vrot.slane %v2629, 1
      %v2758 = vrot.slane %v2630, 1
      %v2759 = vrot.slane %v2631, 1
      %v2760 = vrot.slane %v2632, 1
      %v2761 = vsel %vm1934, %v2759, %v2760
      %v2762 = vsel %vm1934, %v2758, %v2759
      %v2763 = vsel %vm1934, %v2757, %v2758
      %v2764 = vsel %vm1934, %v2756, %v2757
      %v2765 = vsel %vm1934, %v2755, %v2756
      %v2766 = vsel %vm1934, %v2754, %v2755
      %v2767 = vsel %vm1934, %v2753, %v2754
      %v2768 = vsel %vm1934, %v2752, %v2753
      %v2769 = vsel %vm1934, %v2751, %v2752
      %v2770 = vsel %vm1934, %v2750, %v2751
      %v2771 = vsel %vm1934, %v2749, %v2750
      %v2772 = vsel %vm1934, %v2748, %v2749
      %v2773 = vsel %vm1934, %v2747, %v2748
      %v2774 = vsel %vm1934, %v2746, %v2747
      %v2775 = vsel %vm1934, %v2745, %v2746
      %v2776 = vsel %vm1934, %v2744, %v2745
      %v2777 = vsel %vm1934, %v2743, %v2744
      %v2778 = vsel %vm1934, %v2742, %v2743
      %v2779 = vsel %vm1934, %v2741, %v2742
      %v2780 = vsel %vm1934, %v2740, %v2741
      %v2781 = vsel %vm1934, %v2739, %v2740
      %v2782 = vsel %vm1934, %v2738, %v2739
      %v2783 = vsel %vm1934, %v2737, %v2738
      %v2784 = vsel %vm1934, %v2736, %v2737
      %v2785 = vsel %vm1934, %v2735, %v2736
      %v2786 = vsel %vm1934, %v2734, %v2735
      %v2787 = vsel %vm1934, %v2733, %v2734
      %v2788 = vsel %vm1934, %v2732, %v2733
      %v2789 = vsel %vm1934, %v2731, %v2732
      %v2790 = vsel %vm1934, %v2730, %v2731
      %v2791 = vsel %vm1934, %v2729, %v2730
      %v2792 = vsel %vm1934, %v2760, %v2729
      %v2793 = vsel %vm1773, %v2791, 0.0
      %v2794 = vsel %vm1774, %v2790, 0.0
      %v2795 = vsel %vm1775, %v2789, 0.0
      %v2796 = vsel %vm1776, %v2788, 0.0
      %v2797 = vsel %vm1777, %v2787, 0.0
      %v2798 = vsel %vm1778, %v2786, 0.0
      %v2799 = vsel %vm1779, %v2785, 0.0
      %v2800 = vsel %vm1780, %v2784, 0.0
      %v2801 = vsel %vm1781, %v2783, 0.0
      %v2802 = vsel %vm1782, %v2782, 0.0
      %v2803 = vsel %vm1783, %v2781, 0.0
      %v2804 = vsel %vm1784, %v2780, 0.0
      %v2805 = vsel %vm1785, %v2779, 0.0
      %v2806 = vsel %vm1786, %v2778, 0.0
      %v2807 = vsel %vm1787, %v2777, 0.0
      %v2808 = vsel %vm1788, %v2776, 0.0
      %v2809 = vsel %vm1789, %v2775, 0.0
      %v2810 = vsel %vm1790, %v2774, 0.0
      %v2811 = vsel %vm1791, %v2773, 0.0
      %v2812 = vsel %vm1792, %v2772, 0.0
      %v2813 = vsel %vm1793, %v2771, 0.0
      %v2814 = vsel %vm1794, %v2770, 0.0
      %v2815 = vsel %vm1795, %v2769, 0.0
      %v2816 = vsel %vm1796, %v2768, 0.0
      %v2817 = vsel %vm1797, %v2767, 0.0
      %v2818 = vsel %vm1798, %v2766, 0.0
      %v2819 = vsel %vm1799, %v2765, 0.0
      %v2820 = vsel %vm1800, %v2764, 0.0
      %v2821 = vsel %vm1801, %v2763, 0.0
      %v2822 = vsel %vm1802, %v2762, 0.0
      %v2823 = vsel %vm1803, %v2761, 0.0
      %v2824 = vsel %vm1804, %v2792, 0.0
      %2857 = vrot.lane.b32.xlu0 %v2601, 32
      %v2858 = vpop.permute.xlu0 %2857
      %2859 = vrot.lane.b32.xlu0 %v2602, 32
      %v2860 = vpop.permute.xlu0 %2859
      %2861 = vrot.lane.b32.xlu0 %v2603, 32
      %v2862 = vpop.permute.xlu0 %2861
      %2863 = vrot.lane.b32.xlu0 %v2604, 32
      %v2864 = vpop.permute.xlu0 %2863
      %2865 = vrot.lane.b32.xlu0 %v2605, 32
      %v2866 = vpop.permute.xlu0 %2865
      %2867 = vrot.lane.b32.xlu0 %v2606, 32
      %v2868 = vpop.permute.xlu0 %2867
      %2869 = vrot.lane.b32.xlu0 %v2607, 32
      %v2870 = vpop.permute.xlu0 %2869
      %2871 = vrot.lane.b32.xlu0 %v2608, 32
      %v2872 = vpop.permute.xlu0 %2871
      %2873 = vrot.lane.b32.xlu0 %v2609, 32
      %v2874 = vpop.permute.xlu0 %2873
      %2875 = vrot.lane.b32.xlu0 %v2610, 32
      %v2876 = vpop.permute.xlu0 %2875
      %2877 = vrot.lane.b32.xlu0 %v2611, 32
      %v2878 = vpop.permute.xlu0 %2877
      %2879 = vrot.lane.b32.xlu0 %v2612, 32
      %v2880 = vpop.permute.xlu0 %2879
      %2881 = vrot.lane.b32.xlu0 %v2613, 32
      %v2882 = vpop.permute.xlu0 %2881
      %2883 = vrot.lane.b32.xlu0 %v2614, 32
      %v2884 = vpop.permute.xlu0 %2883
      %2885 = vrot.lane.b32.xlu0 %v2615, 32
      %v2886 = vpop.permute.xlu0 %2885
      %2887 = vrot.lane.b32.xlu0 %v2616, 32
      %v2888 = vpop.permute.xlu0 %2887
      %2889 = vrot.lane.b32.xlu0 %v2617, 32
      %v2890 = vpop.permute.xlu0 %2889
      %2891 = vrot.lane.b32.xlu0 %v2618, 32
      %v2892 = vpop.permute.xlu0 %2891
      %2893 = vrot.lane.b32.xlu0 %v2619, 32
      %v2894 = vpop.permute.xlu0 %2893
      %2895 = vrot.lane.b32.xlu0 %v2620, 32
      %v2896 = vpop.permute.xlu0 %2895
      %2897 = vrot.lane.b32.xlu0 %v2621, 32
      %v2898 = vpop.permute.xlu0 %2897
      %2899 = vrot.lane.b32.xlu0 %v2622, 32
      %v2900 = vpop.permute.xlu0 %2899
      %2901 = vrot.lane.b32.xlu0 %v2623, 32
      %v2902 = vpop.permute.xlu0 %2901
      %2903 = vrot.lane.b32.xlu0 %v2624, 32
      %v2904 = vpop.permute.xlu0 %2903
      %2905 = vrot.lane.b32.xlu0 %v2625, 32
      %v2906 = vpop.permute.xlu0 %2905
      %2907 = vrot.lane.b32.xlu0 %v2626, 32
      %v2908 = vpop.permute.xlu0 %2907
      %2909 = vrot.lane.b32.xlu0 %v2627, 32
      %v2910 = vpop.permute.xlu0 %2909
      %2911 = vrot.lane.b32.xlu0 %v2628, 32
      %v2912 = vpop.permute.xlu0 %2911
      %2913 = vrot.lane.b32.xlu0 %v2629, 32
      %v2914 = vpop.permute.xlu0 %2913
      %2915 = vrot.lane.b32.xlu0 %v2630, 32
      %v2916 = vpop.permute.xlu0 %2915
      %2917 = vrot.lane.b32.xlu0 %v2631, 32
      %v2918 = vpop.permute.xlu0 %2917
      %2919 = vrot.lane.b32.xlu0 %v2632, 32
      %v2920 = vpop.permute.xlu0 %2919
      %2985 = vrot.lane.b32.xlu0 %v2793, 64
      %v2986 = vpop.permute.xlu0 %2985
      %2987 = vrot.lane.b32.xlu0 %v2794, 64
      %v2988 = vpop.permute.xlu0 %2987
      %2989 = vrot.lane.b32.xlu0 %v2795, 64
      %v2990 = vpop.permute.xlu0 %2989
      %2991 = vrot.lane.b32.xlu0 %v2796, 64
      %v2992 = vpop.permute.xlu0 %2991
      %2993 = vrot.lane.b32.xlu0 %v2797, 64
      %v2994 = vpop.permute.xlu0 %2993
      %2995 = vrot.lane.b32.xlu0 %v2798, 64
      %v2996 = vpop.permute.xlu0 %2995
      %2997 = vrot.lane.b32.xlu0 %v2799, 64
      %v2998 = vpop.permute.xlu0 %2997
      %2999 = vrot.lane.b32.xlu0 %v2800, 64
      %v3000 = vpop.permute.xlu0 %2999
      %3001 = vrot.lane.b32.xlu0 %v2801, 64
      %v3002 = vpop.permute.xlu0 %3001
      %3003 = vrot.lane.b32.xlu0 %v2802, 64
      %v3004 = vpop.permute.xlu0 %3003
      %3005 = vrot.lane.b32.xlu0 %v2803, 64
      %v3006 = vpop.permute.xlu0 %3005
      %3007 = vrot.lane.b32.xlu0 %v2804, 64
      %v3008 = vpop.permute.xlu0 %3007
      %3009 = vrot.lane.b32.xlu0 %v2805, 64
      %v3010 = vpop.permute.xlu0 %3009
      %3011 = vrot.lane.b32.xlu0 %v2806, 64
      %v3012 = vpop.permute.xlu0 %3011
      %3013 = vrot.lane.b32.xlu0 %v2807, 64
      %v3014 = vpop.permute.xlu0 %3013
      %3015 = vrot.lane.b32.xlu0 %v2808, 64
      %v3016 = vpop.permute.xlu0 %3015
      %3017 = vrot.lane.b32.xlu0 %v2809, 64
      %v3018 = vpop.permute.xlu0 %3017
      %3019 = vrot.lane.b32.xlu0 %v2810, 64
      %v3020 = vpop.permute.xlu0 %3019
      %3021 = vrot.lane.b32.xlu0 %v2811, 64
      %v3022 = vpop.permute.xlu0 %3021
      %3023 = vrot.lane.b32.xlu0 %v2812, 64
      %v3024 = vpop.permute.xlu0 %3023
      %3025 = vrot.lane.b32.xlu0 %v2813, 64
      %v3026 = vpop.permute.xlu0 %3025
      %3027 = vrot.lane.b32.xlu0 %v2814, 64
      %v3028 = vpop.permute.xlu0 %3027
      %3029 = vrot.lane.b32.xlu0 %v2815, 64
      %v3030 = vpop.permute.xlu0 %3029
      %3031 = vrot.lane.b32.xlu0 %v2816, 64
      %v3032 = vpop.permute.xlu0 %3031
      %3033 = vrot.lane.b32.xlu0 %v2817, 64
      %v3034 = vpop.permute.xlu0 %3033
      %3035 = vrot.lane.b32.xlu0 %v2818, 64
      %v3036 = vpop.permute.xlu0 %3035
      %3037 = vrot.lane.b32.xlu0 %v2819, 64
      %v3038 = vpop.permute.xlu0 %3037
      %3039 = vrot.lane.b32.xlu0 %v2820, 64
      %v3040 = vpop.permute.xlu0 %3039
      %3041 = vrot.lane.b32.xlu0 %v2821, 64
      %v3042 = vpop.permute.xlu0 %3041
      %3043 = vrot.lane.b32.xlu0 %v2822, 64
      %v3044 = vpop.permute.xlu0 %3043
      %3045 = vrot.lane.b32.xlu0 %v2823, 64
      %v3046 = vpop.permute.xlu0 %3045
      %3047 = vrot.lane.b32.xlu0 %v2824, 64
      %v3048 = vpop.permute.xlu0 %3047
      %v3081 = vsel %vm635, %v2697, %v2858
      %v3082 = vsel %vm635, %v2698, %v2860
      %v3083 = vsel %vm635, %v2699, %v2862
      %v3084 = vsel %vm635, %v2700, %v2864
      %v3085 = vsel %vm635, %v2701, %v2866
      %v3086 = vsel %vm635, %v2702, %v2868
      %v3087 = vsel %vm635, %v2703, %v2870
      %v3088 = vsel %vm635, %v2704, %v2872
      %v3089 = vsel %vm635, %v2705, %v2874
      %v3090 = vsel %vm635, %v2706, %v2876
      %v3091 = vsel %vm635, %v2707, %v2878
      %v3092 = vsel %vm635, %v2708, %v2880
      %v3093 = vsel %vm635, %v2709, %v2882
      %v3094 = vsel %vm635, %v2710, %v2884
      %v3095 = vsel %vm635, %v2711, %v2886
      %v3096 = vsel %vm635, %v2712, %v2888
      %v3097 = vsel %vm635, %v2713, %v2890
      %v3098 = vsel %vm635, %v2714, %v2892
      %v3099 = vsel %vm635, %v2715, %v2894
      %v3100 = vsel %vm635, %v2716, %v2896
      %v3101 = vsel %vm635, %v2717, %v2898
      %v3102 = vsel %vm635, %v2718, %v2900
      %v3103 = vsel %vm635, %v2719, %v2902
      %v3104 = vsel %vm635, %v2720, %v2904
      %v3105 = vsel %vm635, %v2721, %v2906
      %v3106 = vsel %vm635, %v2722, %v2908
      %v3107 = vsel %vm635, %v2723, %v2910
      %v3108 = vsel %vm635, %v2724, %v2912
      %v3109 = vsel %vm635, %v2725, %v2914
      %v3110 = vsel %vm635, %v2726, %v2916
      %v3111 = vsel %vm635, %v2727, %v2918
      %v3112 = vsel %vm635, %v2728, %v2920
      %v3113 = vsel %vm2287, %v3081, %v2986
      %v3114 = vsel %vm2287, %v3082, %v2988
      %v3115 = vsel %vm2287, %v3083, %v2990
      %v3116 = vsel %vm2287, %v3084, %v2992
      %v3117 = vsel %vm2287, %v3085, %v2994
      %v3118 = vsel %vm2287, %v3086, %v2996
      %v3119 = vsel %vm2287, %v3087, %v2998
      %v3120 = vsel %vm2287, %v3088, %v3000
      %v3121 = vsel %vm2287, %v3089, %v3002
      %v3122 = vsel %vm2287, %v3090, %v3004
      %v3123 = vsel %vm2287, %v3091, %v3006
      %v3124 = vsel %vm2287, %v3092, %v3008
      %v3125 = vsel %vm2287, %v3093, %v3010
      %v3126 = vsel %vm2287, %v3094, %v3012
      %v3127 = vsel %vm2287, %v3095, %v3014
      %v3128 = vsel %vm2287, %v3096, %v3016
      %v3129 = vsel %vm2287, %v3097, %v3018
      %v3130 = vsel %vm2287, %v3098, %v3020
      %v3131 = vsel %vm2287, %v3099, %v3022
      %v3132 = vsel %vm2287, %v3100, %v3024
      %v3133 = vsel %vm2287, %v3101, %v3026
      %v3134 = vsel %vm2287, %v3102, %v3028
      %v3135 = vsel %vm2287, %v3103, %v3030
      %v3136 = vsel %vm2287, %v3104, %v3032
      %v3137 = vsel %vm2287, %v3105, %v3034
      %v3138 = vsel %vm2287, %v3106, %v3036
      %v3139 = vsel %vm2287, %v3107, %v3038
      %v3140 = vsel %vm2287, %v3108, %v3040
      %v3141 = vsel %vm2287, %v3109, %v3042
      %v3142 = vsel %vm2287, %v3110, %v3044
      %v3143 = vsel %vm2287, %v3111, %v3046
      %v3144 = vsel %vm2287, %v3112, %v3048
      %v3145 = vpack.c.bf16 %v3114, %v3113
      %v3146 = vpack.c.bf16 %v3116, %v3115
      %v3147 = vpack.c.bf16 %v3118, %v3117
      %v3148 = vpack.c.bf16 %v3120, %v3119
      %v3149 = vpack.c.bf16 %v3122, %v3121
      %v3150 = vpack.c.bf16 %v3124, %v3123
      %v3151 = vpack.c.bf16 %v3126, %v3125
      %v3152 = vpack.c.bf16 %v3128, %v3127
      %v3153 = vpack.c.bf16 %v3130, %v3129
      %v3154 = vpack.c.bf16 %v3132, %v3131
      %v3155 = vpack.c.bf16 %v3134, %v3133
      %v3156 = vpack.c.bf16 %v3136, %v3135
      %v3157 = vpack.c.bf16 %v3138, %v3137
      %v3158 = vpack.c.bf16 %v3140, %v3139
      %v3159 = vpack.c.bf16 %v3142, %v3141
      %v3160 = vpack.c.bf16 %v3144, %v3143
      %s3161 = scalar_lea.vmem %s6, 48
      %v3162 = vld [vmem:[%s3161] sm:$0xf]
      %v3163 = vld [vmem:[%s3161 + $0x4] sm:$0xf]
      %v3164 = vld [vmem:[%s3161 + $0x8] sm:$0xf]
      %v3165 = vld [vmem:[%s3161 + $0xc] sm:$0xf]
      %v3166 = vld [vmem:[%s3161 + $0x10] sm:$0xf]
      %v3167 = vld [vmem:[%s3161 + $0x14] sm:$0xf]
      %v3168 = vld [vmem:[%s3161 + $0x18] sm:$0xf]
      %v3169 = vld [vmem:[%s3161 + $0x1c] sm:$0xf]
      %v3170 = vld [vmem:[%s3161 + $0x20] sm:$0xf]
      %v3171 = vld [vmem:[%s3161 + $0x24] sm:$0xf]
      %v3172 = vld [vmem:[%s3161 + $0x28] sm:$0xf]
      %v3173 = vld [vmem:[%s3161 + $0x2c] sm:$0xf]
      %s3174 = scalar_lea.vmem %s7, 1
      %v3175 = vld [vmem:[%s3174] sm:$0x1]
      %v3177 = vlaneseq
      %v3178 = vshrl.u32 %v3177, 7
      %v3179 = vsub.s32 0, %v3178
      %v3180 = vrot.slane %v3175, %v3179
      %v3194 = vunpack.c.l.b16 %v3162
      %v3195 = vunpack.c.l.b16 %v3163
      %v3196 = vunpack.c.l.b16 %v3164
      %v3197 = vunpack.c.l.b16 %v3165
      %v3198 = vunpack.c.l.b16 %v3166
      %v3199 = vunpack.c.l.b16 %v3167
      %v3200 = vunpack.c.l.b16 %v3168
      %v3201 = vunpack.c.l.b16 %v3169
      %v3202 = vunpack.c.l.b16 %v3170
      %v3203 = vunpack.c.l.b16 %v3171
      %v3204 = vunpack.c.l.b16 %v3172
      %v3205 = vunpack.c.l.b16 %v3173
      %v3206 = vpack.c.b16 %v3195, %v3194
      %v3207 = vpack.c.b16 %v3197, %v3196
      %v3208 = vpack.c.b16 %v3199, %v3198
      %v3209 = vpack.c.b16 %v3201, %v3200
      %v3210 = vpack.c.b16 %v3203, %v3202
      %v3211 = vpack.c.b16 %v3205, %v3204
      %v3219 = vsel %vm2391, %v3145, 0
      %v3222 = vsel %vm2391, %v3146, 0
      %v3225 = vsel %vm2391, %v3147, 0
      %v3228 = vsel %vm2391, %v3148, 0
      %v3231 = vsel %vm2391, %v3149, 0
      %v3234 = vsel %vm2391, %v3150, 0
      %v3237 = vsel %vm2391, %v3151, 0
      %v3240 = vsel %vm2391, %v3152, 0
      %v3243 = vsel %vm2391, %v3153, 0
      %v3246 = vsel %vm2391, %v3154, 0
      %v3249 = vsel %vm2391, %v3155, 0
      %v3252 = vsel %vm2391, %v3156, 0
      %v3255 = vsel %vm2391, %v3157, 0
      %v3258 = vsel %vm2391, %v3158, 0
      %v3261 = vsel %vm2391, %v3159, 0
      %v3264 = vsel %vm2391, %v3160, 0
      %3266 = vmatprep.subr.bf16.mxu0 0
      %3267 = vmatpush1.bf16.msra.mxu0 %v3206
      %3268 = vmatprep.subr.bf16.mxu0 0
      %3269 = vmatpush1.bf16.msra.mxu0 %v3207
      %3270 = vmatprep.subr.bf16.mxu0 0
      %3271 = vmatpush1.bf16.msra.mxu0 %v3208
      %3272 = vmatprep.subr.bf16.mxu0 0
      %3273 = vmatpush1.bf16.msra.mxu0 %v3209
      %3274 = vmatprep.subr.bf16.mxu0 0
      %3275 = vmatpush1.bf16.msra.mxu0 %v3210
      %3276 = vmatprep.subr.bf16.mxu0 0
      %3277 = vmatpush1.bf16.msra.mxu0 %v3211
      %3278 = vmatprep.subr.bf16.mxu0 0
      %3279 = vmatpush1.bf16.msra.mxu0 0
      %3280 = vmatprep.subr.bf16.mxu0 0
      %3281 = vmatpush1.bf16.msra.mxu0 0
      %3282 = vmatprep.subr.bf16.mxu0 0
      %3283 = vmatpush1.bf16.msra.mxu0 0
      %3284 = vmatprep.subr.bf16.mxu0 0
      %3285 = vmatpush1.bf16.msra.mxu0 0
      %3286 = vmatprep.subr.bf16.mxu0 0
      %3287 = vmatpush1.bf16.msra.mxu0 0
      %3288 = vmatprep.subr.bf16.mxu0 0
      %3289 = vmatpush1.bf16.msra.mxu0 0
      %3290 = vmatprep.subr.bf16.mxu0 0
      %3291 = vmatpush1.bf16.msra.mxu0 0
      %3292 = vmatprep.subr.bf16.mxu0 0
      %3293 = vmatpush1.bf16.msra.mxu0 0
      %3294 = vmatprep.subr.bf16.mxu0 0
      %3295 = vmatpush1.bf16.msra.mxu0 0
      %3296 = vmatprep.subr.bf16.mxu0 0
      %3297 = vmatpush1.bf16.msra.mxu0 0
      %3298 = vmatprep.mubr.bf16.mxu0 0
      %3299 = vmatmul.mubr.bf16.gmra.mrb[0].mxu0 %v3219
      %v3300 = vpop.f32.mrb[0].mxu0
      %v3301 = vadd.f32 %v3180, %v3300
      %v3302 = vpop.f32.mrb[0].mxu0
      %v3303 = vpop.f32.mrb[0].mxu0
      %v3304 = vadd.f32 %v3180, %v3303
      %v3305 = vpop.f32.mrb[0].mxu0
      %3306 = vmatprep.mubr.bf16.mxu0 0
      %3307 = vmatmul.mubr.bf16.gmra.mrb[0].mxu0 %v3222
      %v3308 = vpop.f32.mrb[0].mxu0
      %v3309 = vadd.f32 %v3180, %v3308
      %v3310 = vpop.f32.mrb[0].mxu0
      %v3311 = vpop.f32.mrb[0].mxu0
      %v3312 = vadd.f32 %v3180, %v3311
      %v3313 = vpop.f32.mrb[0].mxu0
      %3314 = vmatprep.mubr.bf16.mxu0 0
      %3315 = vmatmul.mubr.bf16.gmra.mrb[0].mxu0 %v3225
      %v3316 = vpop.f32.mrb[0].mxu0
      %v3317 = vadd.f32 %v3180, %v3316
      %v3318 = vpop.f32.mrb[0].mxu0
      %v3319 = vpop.f32.mrb[0].mxu0
      %v3320 = vadd.f32 %v3180, %v3319
      %v3321 = vpop.f32.mrb[0].mxu0
      %3322 = vmatprep.mubr.bf16.mxu0 0
      %3323 = vmatmul.mubr.bf16.gmra.mrb[0].mxu0 %v3228
      %v3324 = vpop.f32.mrb[0].mxu0
      %v3325 = vadd.f32 %v3180, %v3324
      %v3326 = vpop.f32.mrb[0].mxu0
      %v3327 = vpop.f32.mrb[0].mxu0
      %v3328 = vadd.f32 %v3180, %v3327
      %v3329 = vpop.f32.mrb[0].mxu0
      %3330 = vmatprep.mubr.bf16.mxu0 0
      %3331 = vmatmul.mubr.bf16.gmra.mrb[0].mxu0 %v3231
      %v3332 = vpop.f32.mrb[0].mxu0
      %v3333 = vadd.f32 %v3180, %v3332
      %v3334 = vpop.f32.mrb[0].mxu0
      %v3335 = vpop.f32.mrb[0].mxu0
      %v3336 = vadd.f32 %v3180, %v3335
      %v3337 = vpop.f32.mrb[0].mxu0
      %3338 = vmatprep.mubr.bf16.mxu0 0
      %3339 = vmatmul.mubr.bf16.gmra.mrb[0].mxu0 %v3234
      %v3340 = vpop.f32.mrb[0].mxu0
      %v3341 = vadd.f32 %v3180, %v3340
      %v3342 = vpop.f32.mrb[0].mxu0
      %v3343 = vpop.f32.mrb[0].mxu0
      %v3344 = vadd.f32 %v3180, %v3343
      %v3345 = vpop.f32.mrb[0].mxu0
      %3346 = vmatprep.mubr.bf16.mxu0 0
      %3347 = vmatmul.mubr.bf16.gmra.mrb[0].mxu0 %v3237
      %v3348 = vpop.f32.mrb[0].mxu0
      %v3349 = vadd.f32 %v3180, %v3348
      %v3350 = vpop.f32.mrb[0].mxu0
      %v3351 = vpop.f32.mrb[0].mxu0
      %v3352 = vadd.f32 %v3180, %v3351
      %v3353 = vpop.f32.mrb[0].mxu0
      %3354 = vmatprep.mubr.bf16.mxu0 0
      %3355 = vmatmul.mubr.bf16.gmra.mrb[0].mxu0 %v3240
      %v3356 = vpop.f32.mrb[0].mxu0
      %v3357 = vadd.f32 %v3180, %v3356
      %v3358 = vpop.f32.mrb[0].mxu0
      %v3359 = vpop.f32.mrb[0].mxu0
      %v3360 = vadd.f32 %v3180, %v3359
      %v3361 = vpop.f32.mrb[0].mxu0
      %3362 = vmatprep.mubr.bf16.mxu0 0
      %3363 = vmatmul.mubr.bf16.gmra.mrb[0].mxu0 %v3243
      %v3364 = vpop.f32.mrb[0].mxu0
      %v3365 = vadd.f32 %v3180, %v3364
      %v3366 = vpop.f32.mrb[0].mxu0
      %v3367 = vpop.f32.mrb[0].mxu0
      %v3368 = vadd.f32 %v3180, %v3367
      %v3369 = vpop.f32.mrb[0].mxu0
      %3370 = vmatprep.mubr.bf16.mxu0 0
      %3371 = vmatmul.mubr.bf16.gmra.mrb[0].mxu0 %v3246
      %v3372 = vpop.f32.mrb[0].mxu0
      %v3373 = vadd.f32 %v3180, %v3372
      %v3374 = vpop.f32.mrb[0].mxu0
      %v3375 = vpop.f32.mrb[0].mxu0
      %v3376 = vadd.f32 %v3180, %v3375
      %v3377 = vpop.f32.mrb[0].mxu0
      %3378 = vmatprep.mubr.bf16.mxu0 0
      %3379 = vmatmul.mubr.bf16.gmra.mrb[0].mxu0 %v3249
      %v3380 = vpop.f32.mrb[0].mxu0
      %v3381 = vadd.f32 %v3180, %v3380
      %v3382 = vpop.f32.mrb[0].mxu0
      %v3383 = vpop.f32.mrb[0].mxu0
      %v3384 = vadd.f32 %v3180, %v3383
      %v3385 = vpop.f32.mrb[0].mxu0
      %3386 = vmatprep.mubr.bf16.mxu0 0
      %3387 = vmatmul.mubr.bf16.gmra.mrb[0].mxu0 %v3252
      %v3388 = vpop.f32.mrb[0].mxu0
      %v3389 = vadd.f32 %v3180, %v3388
      %v3390 = vpop.f32.mrb[0].mxu0
      %v3391 = vpop.f32.mrb[0].mxu0
      %v3392 = vadd.f32 %v3180, %v3391
      %v3393 = vpop.f32.mrb[0].mxu0
      %3394 = vmatprep.mubr.bf16.mxu0 0
      %3395 = vmatmul.mubr.bf16.gmra.mrb[0].mxu0 %v3255
      %v3396 = vpop.f32.mrb[0].mxu0
      %v3397 = vadd.f32 %v3180, %v3396
      %v3398 = vpop.f32.mrb[0].mxu0
      %v3399 = vpop.f32.mrb[0].mxu0
      %v3400 = vadd.f32 %v3180, %v3399
      %v3401 = vpop.f32.mrb[0].mxu0
      %3402 = vmatprep.mubr.bf16.mxu0 0
      %3403 = vmatmul.mubr.bf16.gmra.mrb[0].mxu0 %v3258
      %v3404 = vpop.f32.mrb[0].mxu0
      %v3405 = vadd.f32 %v3180, %v3404
      %v3406 = vpop.f32.mrb[0].mxu0
      %v3407 = vpop.f32.mrb[0].mxu0
      %v3408 = vadd.f32 %v3180, %v3407
      %v3409 = vpop.f32.mrb[0].mxu0
      %3410 = vmatprep.mubr.bf16.mxu0 0
      %3411 = vmatmul.mubr.bf16.gmra.mrb[0].mxu0 %v3261
      %v3412 = vpop.f32.mrb[0].mxu0
      %v3413 = vadd.f32 %v3180, %v3412
      %v3414 = vpop.f32.mrb[0].mxu0
      %v3415 = vpop.f32.mrb[0].mxu0
      %v3416 = vadd.f32 %v3180, %v3415
      %v3417 = vpop.f32.mrb[0].mxu0
      %3418 = vmatprep.mubr.bf16.mxu0 0
      %3419 = vmatmul.mubr.bf16.gmra.mrb[0].mxu0 %v3264
      %v3420 = vpop.f32.mrb[0].mxu0
      %v3421 = vadd.f32 %v3180, %v3420
      %v3422 = vpop.f32.mrb[0].mxu0
      %v3423 = vpop.f32.mrb[0].mxu0
      %v3424 = vadd.f32 %v3180, %v3423
      %v3425 = vpop.f32.mrb[0].mxu0
      %3426 = vdwg.mxu0
      %v3427 = vmax.f32 %v3301, 0.0
      %v3428 = vmax.f32 %v3304, 0.0
      %v3429 = vmax.f32 %v3309, 0.0
      %v3430 = vmax.f32 %v3312, 0.0
      %v3431 = vmax.f32 %v3317, 0.0
      %v3432 = vmax.f32 %v3320, 0.0
      %v3433 = vmax.f32 %v3325, 0.0
      %v3434 = vmax.f32 %v3328, 0.0
      %v3435 = vmax.f32 %v3333, 0.0
      %v3436 = vmax.f32 %v3336, 0.0
      %v3437 = vmax.f32 %v3341, 0.0
      %v3438 = vmax.f32 %v3344, 0.0
      %v3439 = vmax.f32 %v3349, 0.0
      %v3440 = vmax.f32 %v3352, 0.0
      %v3441 = vmax.f32 %v3357, 0.0
      %v3442 = vmax.f32 %v3360, 0.0
      %v3443 = vmax.f32 %v3365, 0.0
      %v3444 = vmax.f32 %v3368, 0.0
      %v3445 = vmax.f32 %v3373, 0.0
      %v3446 = vmax.f32 %v3376, 0.0
      %v3447 = vmax.f32 %v3381, 0.0
      %v3448 = vmax.f32 %v3384, 0.0
      %v3449 = vmax.f32 %v3389, 0.0
      %v3450 = vmax.f32 %v3392, 0.0
      %v3451 = vmax.f32 %v3397, 0.0
      %v3452 = vmax.f32 %v3400, 0.0
      %v3453 = vmax.f32 %v3405, 0.0
      %v3454 = vmax.f32 %v3408, 0.0
      %v3455 = vmax.f32 %v3413, 0.0
      %v3456 = vmax.f32 %v3416, 0.0
      %v3457 = vmax.f32 %v3421, 0.0
      %v3458 = vmax.f32 %v3424, 0.0
      %v3459 = vpack.c.bf16 %v3428, %v3427
      %v3460 = vpack.c.bf16 %v3430, %v3429
      %v3461 = vpack.c.bf16 %v3432, %v3431
      %v3462 = vpack.c.bf16 %v3434, %v3433
      %v3463 = vpack.c.bf16 %v3436, %v3435
      %v3464 = vpack.c.bf16 %v3438, %v3437
      %v3465 = vpack.c.bf16 %v3440, %v3439
      %v3466 = vpack.c.bf16 %v3442, %v3441
      %v3467 = vpack.c.bf16 %v3444, %v3443
      %v3468 = vpack.c.bf16 %v3446, %v3445
      %v3469 = vpack.c.bf16 %v3448, %v3447
      %v3470 = vpack.c.bf16 %v3450, %v3449
      %v3471 = vpack.c.bf16 %v3452, %v3451
      %v3472 = vpack.c.bf16 %v3454, %v3453
      %v3473 = vpack.c.bf16 %v3456, %v3455
      %v3474 = vpack.c.bf16 %v3458, %v3457
      %v3475 = vpack.c.bf16 %v1291, %v1290
      %v3476 = vld [vmem:[%s10] sm:$0xf]
      %v3477 = vld [vmem:[%s10 + $0x4] sm:$0xf]
      %v3478 = vld [vmem:[%s10 + $0x8] sm:$0xf]
      %v3479 = vld [vmem:[%s10 + $0xc] sm:$0xf]
      %v3480 = vld [vmem:[%s11] sm:$0x1]
      %v3482 = vlaneseq
      %v3483 = vshrl.u32 %v3482, 7
      %v3484 = vsub.s32 0, %v3483
      %v3485 = vrot.slane %v3480, %v3484
      %v3491 = vunpack.c.l.b16 %v3476
      %v3492 = vunpack.c.l.b16 %v3477
      %v3493 = vunpack.c.l.b16 %v3478
      %v3494 = vunpack.c.l.b16 %v3479
      %v3495 = vpack.c.b16 %v3492, %v3491
      %v3496 = vpack.c.b16 %v3494, %v3493
      %v3500 = vsel %vm635, %v3459, 0
      %v3503 = vsel %vm635, %v3460, 0
      %v3506 = vsel %vm635, %v3461, 0
      %v3509 = vsel %vm635, %v3462, 0
      %v3512 = vsel %vm635, %v3463, 0
      %v3515 = vsel %vm635, %v3464, 0
      %v3518 = vsel %vm635, %v3465, 0
      %v3521 = vsel %vm635, %v3466, 0
      %v3524 = vsel %vm635, %v3467, 0
      %v3527 = vsel %vm635, %v3468, 0
      %v3530 = vsel %vm635, %v3469, 0
      %v3533 = vsel %vm635, %v3470, 0
      %v3536 = vsel %vm635, %v3471, 0
      %v3539 = vsel %vm635, %v3472, 0
      %v3542 = vsel %vm635, %v3473, 0
      %v3545 = vsel %vm635, %v3474, 0
      %v3548 = vsel %vm635, %v3475, 0
      %3550 = vmatprep.subr.bf16.mxu0 0
      %3551 = vmatpush1.bf16.msra.mxu0 %v3495
      %3552 = vmatprep.subr.bf16.mxu0 0
      %3553 = vmatpush1.bf16.msra.mxu0 %v3496
      %3554 = vmatprep.subr.bf16.mxu0 0
      %3555 = vmatpush1.bf16.msra.mxu0 0
      %3556 = vmatprep.subr.bf16.mxu0 0
      %3557 = vmatpush1.bf16.msra.mxu0 0
      %3558 = vmatprep.subr.bf16.mxu0 0
      %3559 = vmatpush1.bf16.msra.mxu0 0
      %3560 = vmatprep.subr.bf16.mxu0 0
      %3561 = vmatpush1.bf16.msra.mxu0 0
      %3562 = vmatprep.subr.bf16.mxu0 0
      %3563 = vmatpush1.bf16.msra.mxu0 0
      %3564 = vmatprep.subr.bf16.mxu0 0
      %3565 = vmatpush1.bf16.msra.mxu0 0
      %3566 = vmatprep.subr.bf16.mxu0 0
      %3567 = vmatpush1.bf16.msra.mxu0 0
      %3568 = vmatprep.subr.bf16.mxu0 0
      %3569 = vmatpush1.bf16.msra.mxu0 0
      %3570 = vmatprep.subr.bf16.mxu0 0
      %3571 = vmatpush1.bf16.msra.mxu0 0
      %3572 = vmatprep.subr.bf16.mxu0 0
      %3573 = vmatpush1.bf16.msra.mxu0 0
      %3574 = vmatprep.subr.bf16.mxu0 0
      %3575 = vmatpush1.bf16.msra.mxu0 0
      %3576 = vmatprep.subr.bf16.mxu0 0
      %3577 = vmatpush1.bf16.msra.mxu0 0
      %3578 = vmatprep.subr.bf16.mxu0 0
      %3579 = vmatpush1.bf16.msra.mxu0 0
      %3580 = vmatprep.subr.bf16.mxu0 0
      %3581 = vmatpush1.bf16.msra.mxu0 0
      %3582 = vmatprep.mubr.bf16.mxu0 0
      %3583 = vmatmul.mubr.bf16.gmra.mrb[0].mxu0 %v3500
      %v3584 = vpop.f32.mrb[0].mxu0
      %v3585 = vadd.f32 %v3485, %v3584
      %v3586 = vpop.f32.mrb[0].mxu0
      %v3587 = vpop.f32.mrb[0].mxu0
      %v3588 = vadd.f32 %v3485, %v3587
      %v3589 = vpop.f32.mrb[0].mxu0
      %3590 = vmatprep.mubr.bf16.mxu0 0
      %3591 = vmatmul.mubr.bf16.gmra.mrb[0].mxu0 %v3503
      %v3592 = vpop.f32.mrb[0].mxu0
      %v3593 = vadd.f32 %v3485, %v3592
      %v3594 = vpop.f32.mrb[0].mxu0
      %v3595 = vpop.f32.mrb[0].mxu0
      %v3596 = vadd.f32 %v3485, %v3595
      %v3597 = vpop.f32.mrb[0].mxu0
      %3598 = vmatprep.mubr.bf16.mxu0 0
      %3599 = vmatmul.mubr.bf16.gmra.mrb[0].mxu0 %v3506
      %v3600 = vpop.f32.mrb[0].mxu0
      %v3601 = vadd.f32 %v3485, %v3600
      %v3602 = vpop.f32.mrb[0].mxu0
      %v3603 = vpop.f32.mrb[0].mxu0
      %v3604 = vadd.f32 %v3485, %v3603
      %v3605 = vpop.f32.mrb[0].mxu0
      %3606 = vmatprep.mubr.bf16.mxu0 0
      %3607 = vmatmul.mubr.bf16.gmra.mrb[0].mxu0 %v3509
      %v3608 = vpop.f32.mrb[0].mxu0
      %v3609 = vadd.f32 %v3485, %v3608
      %v3610 = vpop.f32.mrb[0].mxu0
      %v3611 = vpop.f32.mrb[0].mxu0
      %v3612 = vadd.f32 %v3485, %v3611
      %v3613 = vpop.f32.mrb[0].mxu0
      %3614 = vmatprep.mubr.bf16.mxu0 0
      %3615 = vmatmul.mubr.bf16.gmra.mrb[0].mxu0 %v3512
      %v3616 = vpop.f32.mrb[0].mxu0
      %v3617 = vadd.f32 %v3485, %v3616
      %v3618 = vpop.f32.mrb[0].mxu0
      %v3619 = vpop.f32.mrb[0].mxu0
      %v3620 = vadd.f32 %v3485, %v3619
      %v3621 = vpop.f32.mrb[0].mxu0
      %3622 = vmatprep.mubr.bf16.mxu0 0
      %3623 = vmatmul.mubr.bf16.gmra.mrb[0].mxu0 %v3515
      %v3624 = vpop.f32.mrb[0].mxu0
      %v3625 = vadd.f32 %v3485, %v3624
      %v3626 = vpop.f32.mrb[0].mxu0
      %v3627 = vpop.f32.mrb[0].mxu0
      %v3628 = vadd.f32 %v3485, %v3627
      %v3629 = vpop.f32.mrb[0].mxu0
      %3630 = vmatprep.mubr.bf16.mxu0 0
      %3631 = vmatmul.mubr.bf16.gmra.mrb[0].mxu0 %v3518
      %v3632 = vpop.f32.mrb[0].mxu0
      %v3633 = vadd.f32 %v3485, %v3632
      %v3634 = vpop.f32.mrb[0].mxu0
      %v3635 = vpop.f32.mrb[0].mxu0
      %v3636 = vadd.f32 %v3485, %v3635
      %v3637 = vpop.f32.mrb[0].mxu0
      %3638 = vmatprep.mubr.bf16.mxu0 0
      %3639 = vmatmul.mubr.bf16.gmra.mrb[0].mxu0 %v3521
      %v3640 = vpop.f32.mrb[0].mxu0
      %v3641 = vadd.f32 %v3485, %v3640
      %v3642 = vpop.f32.mrb[0].mxu0
      %v3643 = vpop.f32.mrb[0].mxu0
      %v3644 = vadd.f32 %v3485, %v3643
      %v3645 = vpop.f32.mrb[0].mxu0
      %3646 = vmatprep.mubr.bf16.mxu0 0
      %3647 = vmatmul.mubr.bf16.gmra.mrb[0].mxu0 %v3524
      %v3648 = vpop.f32.mrb[0].mxu0
      %v3649 = vadd.f32 %v3485, %v3648
      %v3650 = vpop.f32.mrb[0].mxu0
      %v3651 = vpop.f32.mrb[0].mxu0
      %v3652 = vadd.f32 %v3485, %v3651
      %v3653 = vpop.f32.mrb[0].mxu0
      %3654 = vmatprep.mubr.bf16.mxu0 0
      %3655 = vmatmul.mubr.bf16.gmra.mrb[0].mxu0 %v3527
      %v3656 = vpop.f32.mrb[0].mxu0
      %v3657 = vadd.f32 %v3485, %v3656
      %v3658 = vpop.f32.mrb[0].mxu0
      %v3659 = vpop.f32.mrb[0].mxu0
      %v3660 = vadd.f32 %v3485, %v3659
      %v3661 = vpop.f32.mrb[0].mxu0
      %3662 = vmatprep.mubr.bf16.mxu0 0
      %3663 = vmatmul.mubr.bf16.gmra.mrb[0].mxu0 %v3530
      %v3664 = vpop.f32.mrb[0].mxu0
      %v3665 = vadd.f32 %v3485, %v3664
      %v3666 = vpop.f32.mrb[0].mxu0
      %v3667 = vpop.f32.mrb[0].mxu0
      %v3668 = vadd.f32 %v3485, %v3667
      %v3669 = vpop.f32.mrb[0].mxu0
      %3670 = vmatprep.mubr.bf16.mxu0 0
      %3671 = vmatmul.mubr.bf16.gmra.mrb[0].mxu0 %v3533
      %v3672 = vpop.f32.mrb[0].mxu0
      %v3673 = vadd.f32 %v3485, %v3672
      %v3674 = vpop.f32.mrb[0].mxu0
      %v3675 = vpop.f32.mrb[0].mxu0
      %v3676 = vadd.f32 %v3485, %v3675
      %v3677 = vpop.f32.mrb[0].mxu0
      %3678 = vmatprep.mubr.bf16.mxu0 0
      %3679 = vmatmul.mubr.bf16.gmra.mrb[0].mxu0 %v3536
      %v3680 = vpop.f32.mrb[0].mxu0
      %v3681 = vadd.f32 %v3485, %v3680
      %v3682 = vpop.f32.mrb[0].mxu0
      %v3683 = vpop.f32.mrb[0].mxu0
      %v3684 = vadd.f32 %v3485, %v3683
      %v3685 = vpop.f32.mrb[0].mxu0
      %3686 = vmatprep.mubr.bf16.mxu0 0
      %3687 = vmatmul.mubr.bf16.gmra.mrb[0].mxu0 %v3539
      %v3688 = vpop.f32.mrb[0].mxu0
      %v3689 = vadd.f32 %v3485, %v3688
      %v3690 = vpop.f32.mrb[0].mxu0
      %v3691 = vpop.f32.mrb[0].mxu0
      %v3692 = vadd.f32 %v3485, %v3691
      %v3693 = vpop.f32.mrb[0].mxu0
      %3694 = vmatprep.mubr.bf16.mxu0 0
      %3695 = vmatmul.mubr.bf16.gmra.mrb[0].mxu0 %v3542
      %v3696 = vpop.f32.mrb[0].mxu0
      %v3697 = vadd.f32 %v3485, %v3696
      %v3698 = vpop.f32.mrb[0].mxu0
      %v3699 = vpop.f32.mrb[0].mxu0
      %v3700 = vadd.f32 %v3485, %v3699
      %v3701 = vpop.f32.mrb[0].mxu0
      %3702 = vmatprep.mubr.bf16.mxu0 0
      %3703 = vmatmul.mubr.bf16.gmra.mrb[0].mxu0 %v3545
      %v3704 = vpop.f32.mrb[0].mxu0
      %v3705 = vadd.f32 %v3485, %v3704
      %v3706 = vpop.f32.mrb[0].mxu0
      %v3707 = vpop.f32.mrb[0].mxu0
      %v3708 = vadd.f32 %v3485, %v3707
      %v3709 = vpop.f32.mrb[0].mxu0
      %3710 = vmatprep.mubr.bf16.mxu0 0
      %3711 = vmatmul.mubr.bf16.gmra.mrb[0].mxu0 %v3548
      %v3712 = vpop.f32.mrb[0].mxu0
      %v3713 = vadd.f32 %v3485, %v3712
      %v3714 = vpop.f32.mrb[0].mxu0
      %v3715 = vpop.f32.mrb[0].mxu0
      %v3716 = vadd.f32 %v3485, %v3715
      %v3717 = vpop.f32.mrb[0].mxu0
      %3718 = vdwg.mxu0
      %v3719 = vmax.f32 %v3585, 0.0
      %v3720 = vmax.f32 %v3588, 0.0
      %v3721 = vmax.f32 %v3593, 0.0
      %v3722 = vmax.f32 %v3596, 0.0
      %v3723 = vmax.f32 %v3601, 0.0
      %v3724 = vmax.f32 %v3604, 0.0
      %v3725 = vmax.f32 %v3609, 0.0
      %v3726 = vmax.f32 %v3612, 0.0
      %v3727 = vmax.f32 %v3617, 0.0
      %v3728 = vmax.f32 %v3620, 0.0
      %v3729 = vmax.f32 %v3625, 0.0
      %v3730 = vmax.f32 %v3628, 0.0
      %v3731 = vmax.f32 %v3633, 0.0
      %v3732 = vmax.f32 %v3636, 0.0
      %v3733 = vmax.f32 %v3641, 0.0
      %v3734 = vmax.f32 %v3644, 0.0
      %v3735 = vmax.f32 %v3649, 0.0
      %v3736 = vmax.f32 %v3652, 0.0
      %v3737 = vmax.f32 %v3657, 0.0
      %v3738 = vmax.f32 %v3660, 0.0
      %v3739 = vmax.f32 %v3665, 0.0
      %v3740 = vmax.f32 %v3668, 0.0
      %v3741 = vmax.f32 %v3673, 0.0
      %v3742 = vmax.f32 %v3676, 0.0
      %v3743 = vmax.f32 %v3681, 0.0
      %v3744 = vmax.f32 %v3684, 0.0
      %v3745 = vmax.f32 %v3689, 0.0
      %v3746 = vmax.f32 %v3692, 0.0
      %v3747 = vmax.f32 %v3697, 0.0
      %v3748 = vmax.f32 %v3700, 0.0
      %v3749 = vmax.f32 %v3705, 0.0
      %v3750 = vmax.f32 %v3708, 0.0
      %v3751 = vmax.f32 %v3713, 0.0
      %v3752 = vmax.f32 %v3716, 0.0
      %v3753 = vld [vmem:[%s4] sm:$0xf]
      %v3754 = vld [vmem:[%s4 + $0x4] sm:$0xf]
      %v3755 = vld [vmem:[%s4 + $0x8] sm:$0xf]
      %v3756 = vld [vmem:[%s4 + $0xc] sm:$0xf]
      %v3757 = vld [vmem:[%s4 + $0x10] sm:$0xf]
      %v3758 = vld [vmem:[%s4 + $0x14] sm:$0xf]
      %v3759 = vld [vmem:[%s4 + $0x18] sm:$0xf]
      %v3760 = vld [vmem:[%s4 + $0x1c] sm:$0xf]
      %v3761 = vld [vmem:[%s4 + $0x20] sm:$0xf]
      %v3762 = vld [vmem:[%s4 + $0x24] sm:$0xf]
      %v3763 = vld [vmem:[%s4 + $0x28] sm:$0xf]
      %v3764 = vld [vmem:[%s4 + $0x2c] sm:$0xf]
      %v3765 = vld [vmem:[%s4 + $0x30] sm:$0xf]
      %v3766 = vld [vmem:[%s4 + $0x34] sm:$0xf]
      %v3767 = vld [vmem:[%s4 + $0x38] sm:$0xf]
      %v3768 = vld [vmem:[%s4 + $0x3c] sm:$0xf]
      %v3769 = vld [vmem:[%s4 + $0x40] sm:$0xf]
      %v3770 = vld [vmem:[%s4 + $0x44] sm:$0xf]
      %v3771 = vld [vmem:[%s4 + $0x48] sm:$0xf]
      %v3772 = vld [vmem:[%s4 + $0x4c] sm:$0xf]
      %v3773 = vld [vmem:[%s4 + $0x50] sm:$0xf]
      %v3774 = vld [vmem:[%s4 + $0x54] sm:$0xf]
      %v3775 = vld [vmem:[%s4 + $0x58] sm:$0xf]
      %v3776 = vld [vmem:[%s4 + $0x5c] sm:$0xf]
      %v3777 = vld [vmem:[%s4 + $0x60] sm:$0xf]
      %v3778 = vld [vmem:[%s4 + $0x64] sm:$0xf]
      %v3779 = vld [vmem:[%s4 + $0x68] sm:$0xf]
      %v3780 = vld [vmem:[%s4 + $0x6c] sm:$0xf]
      %v3781 = vld [vmem:[%s4 + $0x70] sm:$0xf]
      %v3782 = vld [vmem:[%s4 + $0x74] sm:$0xf]
      %v3783 = vld [vmem:[%s4 + $0x78] sm:$0xf]
      %v3784 = vld [vmem:[%s4 + $0x7c] sm:$0xf]
      %v3785 = vpack.c.bf16 %v3752, %v3751
      %v3818 = vunpack.c.l.b16 %v3753
      %v3819 = vunpack.c.l.b16 %v3754
      %v3820 = vunpack.c.l.b16 %v3755
      %v3821 = vunpack.c.l.b16 %v3756
      %v3822 = vunpack.c.l.b16 %v3757
      %v3823 = vunpack.c.l.b16 %v3758
      %v3824 = vunpack.c.l.b16 %v3759
      %v3825 = vunpack.c.l.b16 %v3760
      %v3826 = vunpack.c.l.b16 %v3761
      %v3827 = vunpack.c.l.b16 %v3762
      %v3828 = vunpack.c.l.b16 %v3763
      %v3829 = vunpack.c.l.b16 %v3764
      %v3830 = vunpack.c.l.b16 %v3765
      %v3831 = vunpack.c.l.b16 %v3766
      %v3832 = vunpack.c.l.b16 %v3767
      %v3833 = vunpack.c.l.b16 %v3768
      %v3834 = vunpack.c.l.b16 %v3769
      %v3835 = vunpack.c.l.b16 %v3770
      %v3836 = vunpack.c.l.b16 %v3771
      %v3837 = vunpack.c.l.b16 %v3772
      %v3838 = vunpack.c.l.b16 %v3773
      %v3839 = vunpack.c.l.b16 %v3774
      %v3840 = vunpack.c.l.b16 %v3775
      %v3841 = vunpack.c.l.b16 %v3776
      %v3842 = vunpack.c.l.b16 %v3777
      %v3843 = vunpack.c.l.b16 %v3778
      %v3844 = vunpack.c.l.b16 %v3779
      %v3845 = vunpack.c.l.b16 %v3780
      %v3846 = vunpack.c.l.b16 %v3781
      %v3847 = vunpack.c.l.b16 %v3782
      %v3848 = vunpack.c.l.b16 %v3783
      %v3849 = vunpack.c.l.b16 %v3784
      %v3850 = vpack.c.b16 %v3819, %v3818
      %v3851 = vpack.c.b16 %v3821, %v3820
      %v3852 = vpack.c.b16 %v3823, %v3822
      %v3853 = vpack.c.b16 %v3825, %v3824
      %v3854 = vpack.c.b16 %v3827, %v3826
      %v3855 = vpack.c.b16 %v3829, %v3828
      %v3856 = vpack.c.b16 %v3831, %v3830
      %v3857 = vpack.c.b16 %v3833, %v3832
      %v3858 = vpack.c.b16 %v3835, %v3834
      %v3859 = vpack.c.b16 %v3837, %v3836
      %v3860 = vpack.c.b16 %v3839, %v3838
      %v3861 = vpack.c.b16 %v3841, %v3840
      %v3862 = vpack.c.b16 %v3843, %v3842
      %v3863 = vpack.c.b16 %v3845, %v3844
      %v3864 = vpack.c.b16 %v3847, %v3846
      %v3865 = vpack.c.b16 %v3849, %v3848
      %vm3866 = vcmask 130048
      %v3868 = vsel %vm3866, %v3850, 0
      %v3871 = vsel %vm3866, %v3851, 0
      %v3874 = vsel %vm3866, %v3852, 0
      %v3877 = vsel %vm3866, %v3853, 0
      %v3880 = vsel %vm3866, %v3854, 0
      %v3883 = vsel %vm3866, %v3855, 0
      %v3886 = vsel %vm3866, %v3856, 0
      %v3889 = vsel %vm3866, %v3857, 0
      %v3892 = vsel %vm3866, %v3858, 0
      %v3895 = vsel %vm3866, %v3859, 0
      %v3898 = vsel %vm3866, %v3860, 0
      %v3901 = vsel %vm3866, %v3861, 0
      %v3904 = vsel %vm3866, %v3862, 0
      %v3907 = vsel %vm3866, %v3863, 0
      %v3910 = vsel %vm3866, %v3864, 0
      %v3913 = vsel %vm3866, %v3865, 0
      %3915 = vmatprep.subr.bf16.mxu0 0
      %3916 = vmatpush1.bf16.msra.mxu0 %v3785
      %3917 = vmatprep.subr.bf16.mxu0 0
      %3918 = vmatpush1.bf16.msra.mxu0 0
      %3919 = vmatprep.subr.bf16.mxu0 0
      %3920 = vmatpush1.bf16.msra.mxu0 0
      %3921 = vmatprep.subr.bf16.mxu0 0
      %3922 = vmatpush1.bf16.msra.mxu0 0
      %3923 = vmatprep.subr.bf16.mxu0 0
      %3924 = vmatpush1.bf16.msra.mxu0 0
      %3925 = vmatprep.subr.bf16.mxu0 0
      %3926 = vmatpush1.bf16.msra.mxu0 0
      %3927 = vmatprep.subr.bf16.mxu0 0
      %3928 = vmatpush1.bf16.msra.mxu0 0
      %3929 = vmatprep.subr.bf16.mxu0 0
      %3930 = vmatpush1.bf16.msra.mxu0 0
      %3931 = vmatprep.subr.bf16.mxu0 0
      %3932 = vmatpush1.bf16.msra.mxu0 0
      %3933 = vmatprep.subr.bf16.mxu0 0
      %3934 = vmatpush1.bf16.msra.mxu0 0
      %3935 = vmatprep.subr.bf16.mxu0 0
      %3936 = vmatpush1.bf16.msra.mxu0 0
      %3937 = vmatprep.subr.bf16.mxu0 0
      %3938 = vmatpush1.bf16.msra.mxu0 0
      %3939 = vmatprep.subr.bf16.mxu0 0
      %3940 = vmatpush1.bf16.msra.mxu0 0
      %3941 = vmatprep.subr.bf16.mxu0 0
      %3942 = vmatpush1.bf16.msra.mxu0 0
      %3943 = vmatprep.subr.bf16.mxu0 0
      %3944 = vmatpush1.bf16.msra.mxu0 0
      %3945 = vmatprep.subr.bf16.mxu0 0
      %3946 = vmatpush1.bf16.msra.mxu0 0
      %3947 = vmatprep.mubr.bf16.mxu0 0
      %3948 = vmatmul.mubr.bf16.gmra.mrb[0].mxu0 %v3868
      %v3949 = vpop.f32.mrb[0].mxu0
      %v3950 = vadd.f32 0.0, %v3949
      %v3951 = vpop.f32.mrb[0].mxu0
      %v3952 = vpop.f32.mrb[0].mxu0
      %v3953 = vadd.f32 0.0, %v3952
      %v3954 = vpop.f32.mrb[0].mxu0
      %3955 = vmatprep.mubr.bf16.mxu0 0
      %3956 = vmatmul.mubr.bf16.gmra.mrb[0].mxu0 %v3871
      %v3957 = vpop.f32.mrb[0].mxu0
      %v3958 = vadd.f32 0.0, %v3957
      %v3959 = vpop.f32.mrb[0].mxu0
      %v3960 = vpop.f32.mrb[0].mxu0
      %v3961 = vadd.f32 0.0, %v3960
      %v3962 = vpop.f32.mrb[0].mxu0
      %3963 = vmatprep.mubr.bf16.mxu0 0
      %3964 = vmatmul.mubr.bf16.gmra.mrb[0].mxu0 %v3874
      %v3965 = vpop.f32.mrb[0].mxu0
      %v3966 = vadd.f32 0.0, %v3965
      %v3967 = vpop.f32.mrb[0].mxu0
      %v3968 = vpop.f32.mrb[0].mxu0
      %v3969 = vadd.f32 0.0, %v3968
      %v3970 = vpop.f32.mrb[0].mxu0
      %3971 = vmatprep.mubr.bf16.mxu0 0
      %3972 = vmatmul.mubr.bf16.gmra.mrb[0].mxu0 %v3877
      %v3973 = vpop.f32.mrb[0].mxu0
      %v3974 = vadd.f32 0.0, %v3973
      %v3975 = vpop.f32.mrb[0].mxu0
      %v3976 = vpop.f32.mrb[0].mxu0
      %v3977 = vadd.f32 0.0, %v3976
      %v3978 = vpop.f32.mrb[0].mxu0
      %3979 = vmatprep.mubr.bf16.mxu0 0
      %3980 = vmatmul.mubr.bf16.gmra.mrb[0].mxu0 %v3880
      %v3981 = vpop.f32.mrb[0].mxu0
      %v3982 = vadd.f32 0.0, %v3981
      %v3983 = vpop.f32.mrb[0].mxu0
      %v3984 = vpop.f32.mrb[0].mxu0
      %v3985 = vadd.f32 0.0, %v3984
      %v3986 = vpop.f32.mrb[0].mxu0
      %3987 = vmatprep.mubr.bf16.mxu0 0
      %3988 = vmatmul.mubr.bf16.gmra.mrb[0].mxu0 %v3883
      %v3989 = vpop.f32.mrb[0].mxu0
      %v3990 = vadd.f32 0.0, %v3989
      %v3991 = vpop.f32.mrb[0].mxu0
      %v3992 = vpop.f32.mrb[0].mxu0
      %v3993 = vadd.f32 0.0, %v3992
      %v3994 = vpop.f32.mrb[0].mxu0
      %3995 = vmatprep.mubr.bf16.mxu0 0
      %3996 = vmatmul.mubr.bf16.gmra.mrb[0].mxu0 %v3886
      %v3997 = vpop.f32.mrb[0].mxu0
      %v3998 = vadd.f32 0.0, %v3997
      %v3999 = vpop.f32.mrb[0].mxu0
      %v4000 = vpop.f32.mrb[0].mxu0
      %v4001 = vadd.f32 0.0, %v4000
      %v4002 = vpop.f32.mrb[0].mxu0
      %4003 = vmatprep.mubr.bf16.mxu0 0
      %4004 = vmatmul.mubr.bf16.gmra.mrb[0].mxu0 %v3889
      %v4005 = vpop.f32.mrb[0].mxu0
      %v4006 = vadd.f32 0.0, %v4005
      %v4007 = vpop.f32.mrb[0].mxu0
      %v4008 = vpop.f32.mrb[0].mxu0
      %v4009 = vadd.f32 0.0, %v4008
      %v4010 = vpop.f32.mrb[0].mxu0
      %4011 = vmatprep.mubr.bf16.mxu0 0
      %4012 = vmatmul.mubr.bf16.gmra.mrb[0].mxu0 %v3892
      %v4013 = vpop.f32.mrb[0].mxu0
      %v4014 = vadd.f32 0.0, %v4013
      %v4015 = vpop.f32.mrb[0].mxu0
      %v4016 = vpop.f32.mrb[0].mxu0
      %v4017 = vadd.f32 0.0, %v4016
      %v4018 = vpop.f32.mrb[0].mxu0
      %4019 = vmatprep.mubr.bf16.mxu0 0
      %4020 = vmatmul.mubr.bf16.gmra.mrb[0].mxu0 %v3895
      %v4021 = vpop.f32.mrb[0].mxu0
      %v4022 = vadd.f32 0.0, %v4021
      %v4023 = vpop.f32.mrb[0].mxu0
      %v4024 = vpop.f32.mrb[0].mxu0
      %v4025 = vadd.f32 0.0, %v4024
      %v4026 = vpop.f32.mrb[0].mxu0
      %4027 = vmatprep.mubr.bf16.mxu0 0
      %4028 = vmatmul.mubr.bf16.gmra.mrb[0].mxu0 %v3898
      %v4029 = vpop.f32.mrb[0].mxu0
      %v4030 = vadd.f32 0.0, %v4029
      %v4031 = vpop.f32.mrb[0].mxu0
      %v4032 = vpop.f32.mrb[0].mxu0
      %v4033 = vadd.f32 0.0, %v4032
      %v4034 = vpop.f32.mrb[0].mxu0
      %4035 = vmatprep.mubr.bf16.mxu0 0
      %4036 = vmatmul.mubr.bf16.gmra.mrb[0].mxu0 %v3901
      %v4037 = vpop.f32.mrb[0].mxu0
      %v4038 = vadd.f32 0.0, %v4037
      %v4039 = vpop.f32.mrb[0].mxu0
      %v4040 = vpop.f32.mrb[0].mxu0
      %v4041 = vadd.f32 0.0, %v4040
      %v4042 = vpop.f32.mrb[0].mxu0
      %4043 = vmatprep.mubr.bf16.mxu0 0
      %4044 = vmatmul.mubr.bf16.gmra.mrb[0].mxu0 %v3904
      %v4045 = vpop.f32.mrb[0].mxu0
      %v4046 = vadd.f32 0.0, %v4045
      %v4047 = vpop.f32.mrb[0].mxu0
      %v4048 = vpop.f32.mrb[0].mxu0
      %v4049 = vadd.f32 0.0, %v4048
      %v4050 = vpop.f32.mrb[0].mxu0
      %4051 = vmatprep.mubr.bf16.mxu0 0
      %4052 = vmatmul.mubr.bf16.gmra.mrb[0].mxu0 %v3907
      %v4053 = vpop.f32.mrb[0].mxu0
      %v4054 = vadd.f32 0.0, %v4053
      %v4055 = vpop.f32.mrb[0].mxu0
      %v4056 = vpop.f32.mrb[0].mxu0
      %v4057 = vadd.f32 0.0, %v4056
      %v4058 = vpop.f32.mrb[0].mxu0
      %4059 = vmatprep.mubr.bf16.mxu0 0
      %4060 = vmatmul.mubr.bf16.gmra.mrb[0].mxu0 %v3910
      %v4061 = vpop.f32.mrb[0].mxu0
      %v4062 = vadd.f32 0.0, %v4061
      %v4063 = vpop.f32.mrb[0].mxu0
      %v4064 = vpop.f32.mrb[0].mxu0
      %v4065 = vadd.f32 0.0, %v4064
      %v4066 = vpop.f32.mrb[0].mxu0
      %4067 = vmatprep.mubr.bf16.mxu0 0
      %4068 = vmatmul.mubr.bf16.gmra.mrb[0].mxu0 %v3913
      %v4069 = vpop.f32.mrb[0].mxu0
      %v4070 = vadd.f32 0.0, %v4069
      %v4071 = vpop.f32.mrb[0].mxu0
      %v4072 = vpop.f32.mrb[0].mxu0
      %v4073 = vadd.f32 0.0, %v4072
      %v4074 = vpop.f32.mrb[0].mxu0
      %4075 = vdwg.mxu0
      %v4076 = vmul.f32 %v3950, %v3719
      %v4077 = vmul.f32 %v3953, %v3720
      %v4078 = vmul.f32 %v3958, %v3721
      %v4079 = vmul.f32 %v3961, %v3722
      %v4080 = vmul.f32 %v3966, %v3723
      %v4081 = vmul.f32 %v3969, %v3724
      %v4082 = vmul.f32 %v3974, %v3725
      %v4083 = vmul.f32 %v3977, %v3726
      %v4084 = vmul.f32 %v3982, %v3727
      %v4085 = vmul.f32 %v3985, %v3728
      %v4086 = vmul.f32 %v3990, %v3729
      %v4087 = vmul.f32 %v3993, %v3730
      %v4088 = vmul.f32 %v3998, %v3731
      %v4089 = vmul.f32 %v4001, %v3732
      %v4090 = vmul.f32 %v4006, %v3733
      %v4091 = vmul.f32 %v4009, %v3734
      %v4092 = vmul.f32 %v4014, %v3735
      %v4093 = vmul.f32 %v4017, %v3736
      %v4094 = vmul.f32 %v4022, %v3737
      %v4095 = vmul.f32 %v4025, %v3738
      %v4096 = vmul.f32 %v4030, %v3739
      %v4097 = vmul.f32 %v4033, %v3740
      %v4098 = vmul.f32 %v4038, %v3741
      %v4099 = vmul.f32 %v4041, %v3742
      %v4100 = vmul.f32 %v4046, %v3743
      %v4101 = vmul.f32 %v4049, %v3744
      %v4102 = vmul.f32 %v4054, %v3745
      %v4103 = vmul.f32 %v4057, %v3746
      %v4104 = vmul.f32 %v4062, %v3747
      %v4105 = vmul.f32 %v4065, %v3748
      %v4106 = vmul.f32 %v4070, %v3749
      %v4107 = vmul.f32 %v4073, %v3750
      %v4108 = vsel %vm635, %v4076, 0.0
      %4109 = vadd.xlane.f32.xlu0 %v4108
      %v4110 = vpop.xlane.xlu0 %4109
      %v4111 = vsel %vm635, %v4077, 0.0
      %4112 = vadd.xlane.f32.xlu0 %v4111
      %v4113 = vpop.xlane.xlu0 %4112
      %v4114 = vsel %vm635, %v4078, 0.0
      %4115 = vadd.xlane.f32.xlu0 %v4114
      %v4116 = vpop.xlane.xlu0 %4115
      %v4117 = vsel %vm635, %v4079, 0.0
      %4118 = vadd.xlane.f32.xlu0 %v4117
      %v4119 = vpop.xlane.xlu0 %4118
      %v4120 = vsel %vm635, %v4080, 0.0
      %4121 = vadd.xlane.f32.xlu0 %v4120
      %v4122 = vpop.xlane.xlu0 %4121
      %v4123 = vsel %vm635, %v4081, 0.0
      %4124 = vadd.xlane.f32.xlu0 %v4123
      %v4125 = vpop.xlane.xlu0 %4124
      %v4126 = vsel %vm635, %v4082, 0.0
      %4127 = vadd.xlane.f32.xlu0 %v4126
      %v4128 = vpop.xlane.xlu0 %4127
      %v4129 = vsel %vm635, %v4083, 0.0
      %4130 = vadd.xlane.f32.xlu0 %v4129
      %v4131 = vpop.xlane.xlu0 %4130
      %v4132 = vsel %vm635, %v4084, 0.0
      %4133 = vadd.xlane.f32.xlu0 %v4132
      %v4134 = vpop.xlane.xlu0 %4133
      %v4135 = vsel %vm635, %v4085, 0.0
      %4136 = vadd.xlane.f32.xlu0 %v4135
      %v4137 = vpop.xlane.xlu0 %4136
      %v4138 = vsel %vm635, %v4086, 0.0
      %4139 = vadd.xlane.f32.xlu0 %v4138
      %v4140 = vpop.xlane.xlu0 %4139
      %v4141 = vsel %vm635, %v4087, 0.0
      %4142 = vadd.xlane.f32.xlu0 %v4141
      %v4143 = vpop.xlane.xlu0 %4142
      %v4144 = vsel %vm635, %v4088, 0.0
      %4145 = vadd.xlane.f32.xlu0 %v4144
      %v4146 = vpop.xlane.xlu0 %4145
      %v4147 = vsel %vm635, %v4089, 0.0
      %4148 = vadd.xlane.f32.xlu0 %v4147
      %v4149 = vpop.xlane.xlu0 %4148
      %v4150 = vsel %vm635, %v4090, 0.0
      %4151 = vadd.xlane.f32.xlu0 %v4150
      %v4152 = vpop.xlane.xlu0 %4151
      %v4153 = vsel %vm635, %v4091, 0.0
      %4154 = vadd.xlane.f32.xlu0 %v4153
      %v4155 = vpop.xlane.xlu0 %4154
      %v4156 = vsel %vm635, %v4092, 0.0
      %4157 = vadd.xlane.f32.xlu0 %v4156
      %v4158 = vpop.xlane.xlu0 %4157
      %v4159 = vsel %vm635, %v4093, 0.0
      %4160 = vadd.xlane.f32.xlu0 %v4159
      %v4161 = vpop.xlane.xlu0 %4160
      %v4162 = vsel %vm635, %v4094, 0.0
      %4163 = vadd.xlane.f32.xlu0 %v4162
      %v4164 = vpop.xlane.xlu0 %4163
      %v4165 = vsel %vm635, %v4095, 0.0
      %4166 = vadd.xlane.f32.xlu0 %v4165
      %v4167 = vpop.xlane.xlu0 %4166
      %v4168 = vsel %vm635, %v4096, 0.0
      %4169 = vadd.xlane.f32.xlu0 %v4168
      %v4170 = vpop.xlane.xlu0 %4169
      %v4171 = vsel %vm635, %v4097, 0.0
      %4172 = vadd.xlane.f32.xlu0 %v4171
      %v4173 = vpop.xlane.xlu0 %4172
      %v4174 = vsel %vm635, %v4098, 0.0
      %4175 = vadd.xlane.f32.xlu0 %v4174
      %v4176 = vpop.xlane.xlu0 %4175
      %v4177 = vsel %vm635, %v4099, 0.0
      %4178 = vadd.xlane.f32.xlu0 %v4177
      %v4179 = vpop.xlane.xlu0 %4178
      %v4180 = vsel %vm635, %v4100, 0.0
      %4181 = vadd.xlane.f32.xlu0 %v4180
      %v4182 = vpop.xlane.xlu0 %4181
      %v4183 = vsel %vm635, %v4101, 0.0
      %4184 = vadd.xlane.f32.xlu0 %v4183
      %v4185 = vpop.xlane.xlu0 %4184
      %v4186 = vsel %vm635, %v4102, 0.0
      %4187 = vadd.xlane.f32.xlu0 %v4186
      %v4188 = vpop.xlane.xlu0 %4187
      %v4189 = vsel %vm635, %v4103, 0.0
      %4190 = vadd.xlane.f32.xlu0 %v4189
      %v4191 = vpop.xlane.xlu0 %4190
      %v4192 = vsel %vm635, %v4104, 0.0
      %4193 = vadd.xlane.f32.xlu0 %v4192
      %v4194 = vpop.xlane.xlu0 %4193
      %v4195 = vsel %vm635, %v4105, 0.0
      %4196 = vadd.xlane.f32.xlu0 %v4195
      %v4197 = vpop.xlane.xlu0 %4196
      %v4198 = vsel %vm635, %v4106, 0.0
      %4199 = vadd.xlane.f32.xlu0 %v4198
      %v4200 = vpop.xlane.xlu0 %4199
      %v4201 = vsel %vm635, %v4107, 0.0
      %4202 = vadd.xlane.f32.xlu0 %v4201
      %v4203 = vpop.xlane.xlu0 %4202
      %v4204 = vtanh.pop %v4110
      %v4205 = vtanh.pop %v4113
      %v4206 = vtanh.pop %v4116
      %v4207 = vtanh.pop %v4119
      %v4208 = vtanh.pop %v4122
      %v4209 = vtanh.pop %v4125
      %v4210 = vtanh.pop %v4128
      %v4211 = vtanh.pop %v4131
      %v4212 = vtanh.pop %v4134
      %v4213 = vtanh.pop %v4137
      %v4214 = vtanh.pop %v4140
      %v4215 = vtanh.pop %v4143
      %v4216 = vtanh.pop %v4146
      %v4217 = vtanh.pop %v4149
      %v4218 = vtanh.pop %v4152
      %v4219 = vtanh.pop %v4155
      %v4220 = vtanh.pop %v4158
      %v4221 = vtanh.pop %v4161
      %v4222 = vtanh.pop %v4164
      %v4223 = vtanh.pop %v4167
      %v4224 = vtanh.pop %v4170
      %v4225 = vtanh.pop %v4173
      %v4226 = vtanh.pop %v4176
      %v4227 = vtanh.pop %v4179
      %v4228 = vtanh.pop %v4182
      %v4229 = vtanh.pop %v4185
      %v4230 = vtanh.pop %v4188
      %v4231 = vtanh.pop %v4191
      %v4232 = vtanh.pop %v4194
      %v4233 = vtanh.pop %v4197
      %v4234 = vtanh.pop %v4200
      %v4235 = vtanh.pop %v4203
      %v4236 = vld [vmem:[%s5] sm:$0xff]
      %v4237 = vld [vmem:[%s5 + $0x8] sm:$0xff]
      %v4238 = vmul.f32 %v4204, %v3719
      %v4239 = vmul.f32 %v4205, %v3720
      %v4240 = vmul.f32 %v4206, %v3721
      %v4241 = vmul.f32 %v4207, %v3722
      %v4242 = vmul.f32 %v4208, %v3723
      %v4243 = vmul.f32 %v4209, %v3724
      %v4244 = vmul.f32 %v4210, %v3725
      %v4245 = vmul.f32 %v4211, %v3726
      %v4246 = vmul.f32 %v4212, %v3727
      %v4247 = vmul.f32 %v4213, %v3728
      %v4248 = vmul.f32 %v4214, %v3729
      %v4249 = vmul.f32 %v4215, %v3730
      %v4250 = vmul.f32 %v4216, %v3731
      %v4251 = vmul.f32 %v4217, %v3732
      %v4252 = vmul.f32 %v4218, %v3733
      %v4253 = vmul.f32 %v4219, %v3734
      %v4254 = vmul.f32 %v4220, %v3735
      %v4255 = vmul.f32 %v4221, %v3736
      %v4256 = vmul.f32 %v4222, %v3737
      %v4257 = vmul.f32 %v4223, %v3738
      %v4258 = vmul.f32 %v4224, %v3739
      %v4259 = vmul.f32 %v4225, %v3740
      %v4260 = vmul.f32 %v4226, %v3741
      %v4261 = vmul.f32 %v4227, %v3742
      %v4262 = vmul.f32 %v4228, %v3743
      %v4263 = vmul.f32 %v4229, %v3744
      %v4264 = vmul.f32 %v4230, %v3745
      %v4265 = vmul.f32 %v4231, %v3746
      %v4266 = vmul.f32 %v4232, %v3747
      %v4267 = vmul.f32 %v4233, %v3748
      %v4268 = vmul.f32 %v4234, %v3749
      %v4269 = vmul.f32 %v4235, %v3750
      %v4270 = vpack.c.bf16 %v4239, %v4238
      %v4271 = vpack.c.bf16 %v4241, %v4240
      %v4272 = vpack.c.bf16 %v4243, %v4242
      %v4273 = vpack.c.bf16 %v4245, %v4244
      %v4274 = vpack.c.bf16 %v4247, %v4246
      %v4275 = vpack.c.bf16 %v4249, %v4248
      %v4276 = vpack.c.bf16 %v4251, %v4250
      %v4277 = vpack.c.bf16 %v4253, %v4252
      %v4278 = vpack.c.bf16 %v4255, %v4254
      %v4279 = vpack.c.bf16 %v4257, %v4256
      %v4280 = vpack.c.bf16 %v4259, %v4258
      %v4281 = vpack.c.bf16 %v4261, %v4260
      %v4282 = vpack.c.bf16 %v4263, %v4262
      %v4283 = vpack.c.bf16 %v4265, %v4264
      %v4284 = vpack.c.bf16 %v4267, %v4266
      %v4285 = vpack.c.bf16 %v4269, %v4268
      %v4288 = vunpack.c.l.b16 %v4236
      %v4289 = vunpack.c.h.b16 %v4236
      %v4290 = vunpack.c.l.b16 %v4237
      %v4291 = vunpack.c.h.b16 %v4237
      %v4292 = vpack.c.b16 %v4290, %v4288
      %v4293 = vpack.c.b16 %v4291, %v4289
      %4296 = vmatprep.subr.bf16.mxu0 0
      %4297 = vmatpush1.bf16.msra.mxu0 %v4270
      %4298 = vmatprep.subr.bf16.mxu0 0
      %4299 = vmatpush1.bf16.msra.mxu0 %v4271
      %4300 = vmatprep.subr.bf16.mxu0 0
      %4301 = vmatpush1.bf16.msra.mxu0 %v4272
      %4302 = vmatprep.subr.bf16.mxu0 0
      %4303 = vmatpush1.bf16.msra.mxu0 %v4273
      %4304 = vmatprep.subr.bf16.mxu0 0
      %4305 = vmatpush1.bf16.msra.mxu0 %v4274
      %4306 = vmatprep.subr.bf16.mxu0 0
      %4307 = vmatpush1.bf16.msra.mxu0 %v4275
      %4308 = vmatprep.subr.bf16.mxu0 0
      %4309 = vmatpush1.bf16.msra.mxu0 %v4276
      %4310 = vmatprep.subr.bf16.mxu0 0
      %4311 = vmatpush1.bf16.msra.mxu0 %v4277
      %4312 = vmatprep.subr.bf16.mxu0 0
      %4313 = vmatpush1.bf16.msra.mxu0 %v4278
      %4314 = vmatprep.subr.bf16.mxu0 0
      %4315 = vmatpush1.bf16.msra.mxu0 %v4279
      %4316 = vmatprep.subr.bf16.mxu0 0
      %4317 = vmatpush1.bf16.msra.mxu0 %v4280
      %4318 = vmatprep.subr.bf16.mxu0 0
      %4319 = vmatpush1.bf16.msra.mxu0 %v4281
      %4320 = vmatprep.subr.bf16.mxu0 0
      %4321 = vmatpush1.bf16.msra.mxu0 %v4282
      %4322 = vmatprep.subr.bf16.mxu0 0
      %4323 = vmatpush1.bf16.msra.mxu0 %v4283
      %4324 = vmatprep.subr.bf16.mxu0 0
      %4325 = vmatpush1.bf16.msra.mxu0 %v4284
      %4326 = vmatprep.subr.bf16.mxu0 0
      %4327 = vmatpush1.bf16.msra.mxu0 %v4285
      %4328 = vmatprep.mubr.bf16.mxu0 %v4293
      %4329 = vmatmul.mubr.bf16.gmra.mrb[0].mxu0 %v4292
      %v4330 = vpop.f32.mrb[0].mxu0
      %v4331 = vadd.f32 0.0, %v4330
      %v4332 = vpop.f32.mrb[0].mxu0
      %v4333 = vpop.f32.mrb[0].mxu0
      %v4334 = vadd.f32 0.0, %v4333
      %v4335 = vpop.f32.mrb[0].mxu0
      %4336 = vdwg.mxu0
      %4339 = vrot.lane.b32.xlu0 %v4331, 32
      %v4340 = vpop.permute.xlu0 %4339
      %4341 = vrot.lane.b32.xlu0 %v4334, 32
      %v4342 = vpop.permute.xlu0 %4341
      %v4345 = vsel %vm635, %v1290, %v4340
      %v4346 = vsel %vm635, %v1291, %v4342
      %v4347 = vpack.c.bf16 %v4346, %v4345
      %v4348 = vld [vmem:[%s12] sm:$0xf]
      %v4349 = vld [vmem:[%s12 + $0x4] sm:$0xf]
      %v4350 = vld [vmem:[%s12 + $0x8] sm:$0xf]
      %v4351 = vld [vmem:[%s12 + $0xc] sm:$0xf]
      %v4352 = vld [vmem:[%s12 + $0x10] sm:$0xf]
      %v4353 = vld [vmem:[%s12 + $0x14] sm:$0xf]
      %v4354 = vld [vmem:[%s12 + $0x18] sm:$0xf]
      %v4355 = vld [vmem:[%s12 + $0x1c] sm:$0xf]
      %v4356 = vld [vmem:[%s13] sm:$0x1]
      %v4358 = vlaneseq
      %v4359 = vshrl.u32 %v4358, 7
      %v4360 = vsub.s32 0, %v4359
      %v4361 = vrot.slane %v4356, %v4360
      %v4371 = vunpack.c.l.b16 %v4348
      %v4372 = vunpack.c.l.b16 %v4349
      %v4373 = vunpack.c.l.b16 %v4350
      %v4374 = vunpack.c.l.b16 %v4351
      %v4375 = vunpack.c.l.b16 %v4352
      %v4376 = vunpack.c.l.b16 %v4353
      %v4377 = vunpack.c.l.b16 %v4354
      %v4378 = vunpack.c.l.b16 %v4355
      %v4379 = vpack.c.b16 %v4372, %v4371
      %v4380 = vpack.c.b16 %v4374, %v4373
      %v4381 = vpack.c.b16 %v4376, %v4375
      %v4382 = vpack.c.b16 %v4378, %v4377
      %v4388 = vsel %vm2287, %v4347, 0
      %4390 = vmatprep.subr.bf16.mxu0 0
      %4391 = vmatpush1.bf16.msra.mxu0 %v4379
      %4392 = vmatprep.subr.bf16.mxu0 0
      %4393 = vmatpush1.bf16.msra.mxu0 %v4380
      %4394 = vmatprep.subr.bf16.mxu0 0
      %4395 = vmatpush1.bf16.msra.mxu0 %v4381
      %4396 = vmatprep.subr.bf16.mxu0 0
      %4397 = vmatpush1.bf16.msra.mxu0 %v4382
      %4398 = vmatprep.subr.bf16.mxu0 0
      %4399 = vmatpush1.bf16.msra.mxu0 0
      %4400 = vmatprep.subr.bf16.mxu0 0
      %4401 = vmatpush1.bf16.msra.mxu0 0
      %4402 = vmatprep.subr.bf16.mxu0 0
      %4403 = vmatpush1.bf16.msra.mxu0 0
      %4404 = vmatprep.subr.bf16.mxu0 0
      %4405 = vmatpush1.bf16.msra.mxu0 0
      %4406 = vmatprep.subr.bf16.mxu0 0
      %4407 = vmatpush1.bf16.msra.mxu0 0
      %4408 = vmatprep.subr.bf16.mxu0 0
      %4409 = vmatpush1.bf16.msra.mxu0 0
      %4410 = vmatprep.subr.bf16.mxu0 0
      %4411 = vmatpush1.bf16.msra.mxu0 0
      %4412 = vmatprep.subr.bf16.mxu0 0
      %4413 = vmatpush1.bf16.msra.mxu0 0
      %4414 = vmatprep.subr.bf16.mxu0 0
      %4415 = vmatpush1.bf16.msra.mxu0 0
      %4416 = vmatprep.subr.bf16.mxu0 0
      %4417 = vmatpush1.bf16.msra.mxu0 0
      %4418 = vmatprep.subr.bf16.mxu0 0
      %4419 = vmatpush1.bf16.msra.mxu0 0
      %4420 = vmatprep.subr.bf16.mxu0 0
      %4421 = vmatpush1.bf16.msra.mxu0 0
      %4422 = vmatprep.mubr.bf16.mxu0 0
      %4423 = vmatmul.mubr.bf16.gmra.mrb[0].mxu0 %v4388
      %v4424 = vpop.f32.mrb[0].mxu0
      %v4425 = vadd.f32 %v4361, %v4424
      %v4426 = vpop.f32.mrb[0].mxu0
      %v4427 = vpop.f32.mrb[0].mxu0
      %v4428 = vadd.f32 %v4361, %v4427
      %v4429 = vpop.f32.mrb[0].mxu0
      %4430 = vdwg.mxu0
      %v4431 = vmax.f32 %v4425, 0.0
      %v4432 = vmax.f32 %v4428, 0.0
      %v4433 = vpack.c.bf16 %v4432, %v4431
      %s4434 = scalar_lea.vmem %s12, 32
      %v4435 = vld [vmem:[%s4434] sm:$0xf]
      %v4436 = vld [vmem:[%s4434 + $0x4] sm:$0xf]
      %v4437 = vld [vmem:[%s4434 + $0x8] sm:$0xf]
      %v4438 = vld [vmem:[%s4434 + $0xc] sm:$0xf]
      %v4439 = vld [vmem:[%s4434 + $0x10] sm:$0xf]
      %v4440 = vld [vmem:[%s4434 + $0x14] sm:$0xf]
      %v4441 = vld [vmem:[%s4434 + $0x18] sm:$0xf]
      %v4442 = vld [vmem:[%s4434 + $0x1c] sm:$0xf]
      %s4443 = scalar_lea.vmem %s13, 1
      %v4444 = vld [vmem:[%s4443] sm:$0x1]
      %v4446 = vlaneseq
      %v4447 = vshrl.u32 %v4446, 7
      %v4448 = vsub.s32 0, %v4447
      %v4449 = vrot.slane %v4444, %v4448
      %v4459 = vunpack.c.l.b16 %v4435
      %v4460 = vunpack.c.l.b16 %v4436
      %v4461 = vunpack.c.l.b16 %v4437
      %v4462 = vunpack.c.l.b16 %v4438
      %v4463 = vunpack.c.l.b16 %v4439
      %v4464 = vunpack.c.l.b16 %v4440
      %v4465 = vunpack.c.l.b16 %v4441
      %v4466 = vunpack.c.l.b16 %v4442
      %v4467 = vpack.c.b16 %v4460, %v4459
      %v4468 = vpack.c.b16 %v4462, %v4461
      %v4469 = vpack.c.b16 %v4464, %v4463
      %v4470 = vpack.c.b16 %v4466, %v4465
      %v4476 = vsel %vm2287, %v4433, 0
      %4478 = vmatprep.subr.bf16.mxu0 0
      %4479 = vmatpush1.bf16.msra.mxu0 %v4467
      %4480 = vmatprep.subr.bf16.mxu0 0
      %4481 = vmatpush1.bf16.msra.mxu0 %v4468
      %4482 = vmatprep.subr.bf16.mxu0 0
      %4483 = vmatpush1.bf16.msra.mxu0 %v4469
      %4484 = vmatprep.subr.bf16.mxu0 0
      %4485 = vmatpush1.bf16.msra.mxu0 %v4470
      %4486 = vmatprep.subr.bf16.mxu0 0
      %4487 = vmatpush1.bf16.msra.mxu0 0
      %4488 = vmatprep.subr.bf16.mxu0 0
      %4489 = vmatpush1.bf16.msra.mxu0 0
      %4490 = vmatprep.subr.bf16.mxu0 0
      %4491 = vmatpush1.bf16.msra.mxu0 0
      %4492 = vmatprep.subr.bf16.mxu0 0
      %4493 = vmatpush1.bf16.msra.mxu0 0
      %4494 = vmatprep.subr.bf16.mxu0 0
      %4495 = vmatpush1.bf16.msra.mxu0 0
      %4496 = vmatprep.subr.bf16.mxu0 0
      %4497 = vmatpush1.bf16.msra.mxu0 0
      %4498 = vmatprep.subr.bf16.mxu0 0
      %4499 = vmatpush1.bf16.msra.mxu0 0
      %4500 = vmatprep.subr.bf16.mxu0 0
      %4501 = vmatpush1.bf16.msra.mxu0 0
      %4502 = vmatprep.subr.bf16.mxu0 0
      %4503 = vmatpush1.bf16.msra.mxu0 0
      %4504 = vmatprep.subr.bf16.mxu0 0
      %4505 = vmatpush1.bf16.msra.mxu0 0
      %4506 = vmatprep.subr.bf16.mxu0 0
      %4507 = vmatpush1.bf16.msra.mxu0 0
      %4508 = vmatprep.subr.bf16.mxu0 0
      %4509 = vmatpush1.bf16.msra.mxu0 0
      %4510 = vmatprep.mubr.bf16.mxu0 0
      %4511 = vmatmul.mubr.bf16.gmra.mrb[0].mxu0 %v4476
      %v4512 = vpop.f32.mrb[0].mxu0
      %v4513 = vadd.f32 %v4449, %v4512
      %v4514 = vpop.f32.mrb[0].mxu0
      %v4515 = vpop.f32.mrb[0].mxu0
      %v4516 = vadd.f32 %v4449, %v4515
      %v4517 = vpop.f32.mrb[0].mxu0
      %4518 = vdwg.mxu0
      %v4519 = vmax.f32 %v4513, 0.0
      %v4520 = vmax.f32 %v4516, 0.0
      %v4521 = vpack.c.bf16 %v4520, %v4519
      %v4522 = vld [vmem:[%s14] sm:$0xf]
      %v4523 = vld [vmem:[%s14 + $0x4] sm:$0xf]
      %v4524 = vld [vmem:[%s14 + $0x8] sm:$0xf]
      %v4525 = vld [vmem:[%s14 + $0xc] sm:$0xf]
      %v4526 = vld [vmem:[%s14 + $0x10] sm:$0xf]
      %v4527 = vld [vmem:[%s14 + $0x14] sm:$0xf]
      %v4528 = vld [vmem:[%s14 + $0x18] sm:$0xf]
      %v4529 = vld [vmem:[%s14 + $0x1c] sm:$0xf]
      %v4530 = vld [vmem:[#allocation2] sm:$0x1]
      %v4532 = vlaneseq
      %v4533 = vshrl.u32 %v4532, 7
      %v4534 = vsub.s32 0, %v4533
      %v4535 = vrot.slane %v4530, %v4534
      %4536 = vset.pattern.permute.xlu0 0
      %4537 = vperm.xlu0 %4536, %v4535
      %v4538 = vpop.permute.xlu0 %4537
      %v4548 = vunpack.c.l.b16 %v4522
      %v4549 = vunpack.c.l.b16 %v4523
      %v4550 = vunpack.c.l.b16 %v4524
      %v4551 = vunpack.c.l.b16 %v4525
      %v4552 = vunpack.c.l.b16 %v4526
      %v4553 = vunpack.c.l.b16 %v4527
      %v4554 = vunpack.c.l.b16 %v4528
      %v4555 = vunpack.c.l.b16 %v4529
      %v4556 = vpack.c.b16 %v4549, %v4548
      %v4557 = vpack.c.b16 %v4551, %v4550
      %v4558 = vpack.c.b16 %v4553, %v4552
      %v4559 = vpack.c.b16 %v4555, %v4554
      %v4565 = vsel %vm2287, %v4521, 0
      %4567 = vmatprep.subr.bf16.mxu0 0
      %4568 = vmatpush1.bf16.msra.mxu0 %v4556
      %4569 = vmatprep.subr.bf16.mxu0 0
      %4570 = vmatpush1.bf16.msra.mxu0 %v4557
      %4571 = vmatprep.subr.bf16.mxu0 0
      %4572 = vmatpush1.bf16.msra.mxu0 %v4558
      %4573 = vmatprep.subr.bf16.mxu0 0
      %4574 = vmatpush1.bf16.msra.mxu0 %v4559
      %4575 = vmatprep.subr.bf16.mxu0 0
      %4576 = vmatpush1.bf16.msra.mxu0 0
      %4577 = vmatprep.subr.bf16.mxu0 0
      %4578 = vmatpush1.bf16.msra.mxu0 0
      %4579 = vmatprep.subr.bf16.mxu0 0
      %4580 = vmatpush1.bf16.msra.mxu0 0
      %4581 = vmatprep.subr.bf16.mxu0 0
      %4582 = vmatpush1.bf16.msra.mxu0 0
      %4583 = vmatprep.subr.bf16.mxu0 0
      %4584 = vmatpush1.bf16.msra.mxu0 0
      %4585 = vmatprep.subr.bf16.mxu0 0
      %4586 = vmatpush1.bf16.msra.mxu0 0
      %4587 = vmatprep.subr.bf16.mxu0 0
      %4588 = vmatpush1.bf16.msra.mxu0 0
      %4589 = vmatprep.subr.bf16.mxu0 0
      %4590 = vmatpush1.bf16.msra.mxu0 0
      %4591 = vmatprep.subr.bf16.mxu0 0
      %4592 = vmatpush1.bf16.msra.mxu0 0
      %4593 = vmatprep.subr.bf16.mxu0 0
      %4594 = vmatpush1.bf16.msra.mxu0 0
      %4595 = vmatprep.subr.bf16.mxu0 0
      %4596 = vmatpush1.bf16.msra.mxu0 0
      %4597 = vmatprep.subr.bf16.mxu0 0
      %4598 = vmatpush1.bf16.msra.mxu0 0
      %4599 = vmatprep.mubr.bf16.mxu0 0
      %4600 = vmatmul.mubr.bf16.gmra.mrb[0].mxu0 %v4565
      %v4601 = vpop.f32.mrb[0].mxu0
      %v4602 = vadd.f32 %v4538, %v4601
      %v4603 = vpop.f32.mrb[0].mxu0
      %v4604 = vpop.f32.mrb[0].mxu0
      %v4605 = vadd.f32 %v4538, %v4604
      %v4606 = vpop.f32.mrb[0].mxu0
      %4607 = vdwg.mxu0
      %4608 = vst [vmem:[%s569] sm:$0xff] %v4602
      %4609 = vst [vmem:[%s569 + $0x8] sm:$0xff] %v4605
      %s4610 = smul.u32 2, %s29
      %p4611 = scmp.lt.s32.totalorder %s4610, 3
      %s4612 = scalar_select %p4611, %s4610, 3
      %s4613 = smul.addr %s4612, 8
      %s4614 = scalar_lea.vmem %s16, %s4613
      // Predicated region
      $region85: #{forward.1} parent=83 // pred_check
        %p4615 = pneg %p398
      $region86: #{forward.1} parent=83 // pred_check_branch
        %4617 = sbr.rel (%p4615) target = $region88
      $region87: #{forward.1} parent=83 // pred_region
        %s4618 = smul.u32 2, %s29
      $region88: #{forward.1} parent=83 // pred_fallthru
        _
    $region84: #{forward.1} parent=5 // pred_fallthru
      _
    %p4619 = scmp.le.s32.totalorder 2, %s24
    // Predicated region
    $region89: #{forward.1} parent=5 // pred_check
      %p4620 = pneg %p4619
    $region90: #{forward.1} parent=5 // pred_check_branch
      %4622 = sbr.rel (%p4620) target = $region92
    $region91: #{forward.1} parent=5 // pred_region
      %s4623 = ssub.s32 %s24, 2
      // Predicated region
      $region93: #{forward.1} parent=91 // pred_check
        %p4624 = pneg %p404
      $region94: #{forward.1} parent=91 // pred_check_branch
        %4626 = sbr.rel (%p4624) target = $region96
      $region95: #{forward.1} parent=91 // pred_region
        %s4627 = smul.u32 2, %s30
        %p4628 = scmp.lt.s32.totalorder %s4627, 3
        %s4629 = scalar_select %p4628, %s4627, 3
        %s4630 = smul.addr %s4629, 8
        %s4631 = scalar_lea.vmem %s16, %s4630
      $region96: #{forward.1} parent=91 // pred_fallthru
        _
    $region92: #{forward.1} parent=5 // pred_fallthru
      _
  $region6: #{forward.1} parent=0 // loop_footer
    %s28 = sadd.s32 1, %s24
  $region7: #{forward.1} parent=0 // loop_footer_branch
    %23 = sbr.rel target = $region3
  $region8: #{forward.1} parent=0 // loop_exit
    _

</llo_original>
